<compile_context>
chip_gen: v7x
topology: tpu7x:2x2x1
jax: 0.10.0
libtpu: 0.0.40
codegen_flags: <defaults>
</compile_context>

<pallas_src>
import functools

import jax
import jax.numpy as jnp
from jax.experimental import pallas as pl
from jax.experimental.pallas import tpu as pltpu

LN_EPS = 1e-5  # nn.LayerNorm default


# ----------------------------------------------------------------------------- kernels


def _layer_norm_f32(y, gamma, beta, eps):
    # y is f32; gamma/beta broadcast as (1, D) rows.
    mean = jnp.mean(y, axis=-1, keepdims=True)
    var = jnp.mean((y - mean) ** 2, axis=-1, keepdims=True)
    return (y - mean) * jax.lax.rsqrt(var + eps) * gamma + beta


def mha_residual_ln_kernel(
    x_ref, kv_ref,
    wq_ref, bq_ref, wkv_ref, bkv_ref, wo_ref, bo_ref,
    gamma_ref, beta_ref,
    o_ref, *, num_heads, causal, eps,
):
    """Fused MHA + residual + LayerNorm for one (batch, q-tile) grid point."""
    x = x_ref[0]     # (tS, D)   query-side tile (also the residual), native dtype
    kv = kv_ref[0]   # (Skv, D)  key/value-side full sequence, native dtype
    tS, D = x.shape
    Skv = kv.shape[0]
    dh = D // num_heads
    scale = jnp.float32(1.0 / (dh ** 0.5))

    # Projections: Q for the tile, fused K|V for the full kv sequence (one MXU pass).
    q = jnp.dot(x, wq_ref[...], preferred_element_type=jnp.float32) + bq_ref[...]
    kvp = jnp.dot(kv, wkv_ref[...], preferred_element_type=jnp.float32) + bkv_ref[...]
    k = kvp[:, :D]   # at production sizes D is a multiple of 128 -> aligned slice
    v = kvp[:, D:]

    # Fold softmax scale into the (small) Q tensor rather than the (H,tS,Skv) scores.
    q = q * scale

    # All heads at once (no per-head loop / concat).
    qh = q.reshape(tS, num_heads, dh)
    kh = k.reshape(Skv, num_heads, dh)
    vh = v.reshape(Skv, num_heads, dh)
    s = jnp.einsum("qhd,khd->hqk", qh, kh,
                   preferred_element_type=jnp.float32)           # (H, tS, Skv)

    if causal:
        q_off = pl.program_id(1) * tS
        row = jax.lax.broadcasted_iota(jnp.int32, (tS, Skv), 0) + q_off
        col = jax.lax.broadcasted_iota(jnp.int32, (tS, Skv), 1)
        s = jnp.where((row >= col)[None], s, jnp.float32(-1e9))

    # Softmax in f32; EUP reciprocal instead of a VALU divide.
    s_max = jnp.max(s, axis=-1, keepdims=True)
    p = jnp.exp(s - s_max)
    p = p * pl.reciprocal(jnp.sum(p, axis=-1, keepdims=True), approx=True)

    attn = jnp.einsum("hqk,khd->qhd", p, vh,
                      preferred_element_type=jnp.float32)        # (tS, H, dh)
    attn = attn.reshape(tS, D)

    out = jnp.dot(attn.astype(wo_ref.dtype), wo_ref[...],
                  preferred_element_type=jnp.float32) + bo_ref[...]

    y = out + x.astype(jnp.float32)  # dropout == identity in eval mode
    o_ref[0] = _layer_norm_f32(
        y, gamma_ref[...].astype(jnp.float32), beta_ref[...].astype(jnp.float32), eps
    ).astype(o_ref.dtype)


def ffn_residual_ln_kernel(
    x_ref, w1_ref, b1_ref, w2_ref, b2_ref, gamma_ref, beta_ref, o_ref, *, eps,
):
    """Fused position-wise FFN (Linear->ReLU->Linear) + residual + LayerNorm."""
    x = x_ref[0]  # (tS, D), native dtype
    h = jnp.dot(x, w1_ref[...], preferred_element_type=jnp.float32) + b1_ref[...]
    h = jnp.maximum(h, 0.0)
    y = jnp.dot(h.astype(w2_ref.dtype), w2_ref[...],
                preferred_element_type=jnp.float32) + b2_ref[...]
    y = y + x.astype(jnp.float32)  # dropout == identity in eval mode
    o_ref[0] = _layer_norm_f32(
        y, gamma_ref[...].astype(jnp.float32), beta_ref[...].astype(jnp.float32), eps
    ).astype(o_ref.dtype)


# ----------------------------------------------------------------------------- wrappers


def _rep_spec(shape):
    """Whole-array block, replicated across the (batch, q-tile) grid."""
    nd = len(shape)
    return pl.BlockSpec(shape, lambda *_: (0,) * nd)


def mha_block(x, kv, wq, bq, wkv, bkv, wo, bo, gamma, beta,
              *, num_heads, causal, q_tile):
    B, S, D = x.shape
    Skv = kv.shape[1]
    n_q = S // q_tile
    kernel = functools.partial(
        mha_residual_ln_kernel, num_heads=num_heads, causal=causal, eps=LN_EPS)
    return pl.pallas_call(
        kernel,
        out_shape=jax.ShapeDtypeStruct((B, S, D), x.dtype),
        grid=(B, n_q),
        in_specs=[
            pl.BlockSpec((1, q_tile, D), lambda b, q: (b, q, 0)),  # Q-side tile
            pl.BlockSpec((1, Skv, D), lambda b, q: (b, 0, 0)),     # full K/V side
            _rep_spec((D, D)), _rep_spec((1, D)),          # Wq, bq
            _rep_spec((D, 2 * D)), _rep_spec((1, 2 * D)),  # fused [Wk|Wv], [bk|bv]
            _rep_spec((D, D)), _rep_spec((1, D)),          # Wo, bo
            _rep_spec((1, D)), _rep_spec((1, D)),          # LN gamma, beta
        ],
        out_specs=pl.BlockSpec((1, q_tile, D), lambda b, q: (b, q, 0)),
        compiler_params=pltpu.CompilerParams(
            dimension_semantics=("parallel", "parallel"),
            vmem_limit_bytes=64 * 1024 * 1024),
    )(x, kv, wq, bq, wkv, bkv, wo, bo, gamma, beta)


def ffn_block(x, ffn_p, gamma, beta, *, q_tile):
    B, S, D = x.shape
    Dff = ffn_p["w1"].shape[1]
    n_q = S // q_tile
    kernel = functools.partial(ffn_residual_ln_kernel, eps=LN_EPS)
    return pl.pallas_call(
        kernel,
        out_shape=jax.ShapeDtypeStruct((B, S, D), x.dtype),
        grid=(B, n_q),
        in_specs=[
            pl.BlockSpec((1, q_tile, D), lambda b, q: (b, q, 0)),
            _rep_spec((D, Dff)), _rep_spec((1, Dff)),  # W1, b1
            _rep_spec((Dff, D)), _rep_spec((1, D)),    # W2, b2
            _rep_spec((1, D)), _rep_spec((1, D)),      # LN gamma, beta
        ],
        out_specs=pl.BlockSpec((1, q_tile, D), lambda b, q: (b, q, 0)),
        compiler_params=pltpu.CompilerParams(
            dimension_semantics=("parallel", "parallel"),
            vmem_limit_bytes=64 * 1024 * 1024),
    )(x, ffn_p["w1"], ffn_p["b1"], ffn_p["w2"], ffn_p["b2"], gamma, beta)


def decoder_layer(x, enc_output, params, *, num_heads, q_tile=None):
    """DecoderLayer.forward (eval mode). Default masks: causal tgt, no src mask."""
    B, S, D = x.shape
    if q_tile is None:
        q_tile = S if S <= 128 else 128
    assert S % q_tile == 0, "sequence length must be divisible by q_tile"

    sa, ca = params["self_attn"], params["enc_dec_attn"]
    # Fuse K/V projection weights into a single (D, 2D) matmul per attention block.
    sa_wkv = jnp.concatenate([sa["wk"], sa["wv"]], axis=1)
    sa_bkv = jnp.concatenate([sa["bk"], sa["bv"]], axis=1)
    ca_wkv = jnp.concatenate([ca["wk"], ca["wv"]], axis=1)
    ca_bkv = jnp.concatenate([ca["bk"], ca["bv"]], axis=1)

    x = mha_block(x, x, sa["wq"], sa["bq"], sa_wkv, sa_bkv, sa["wo"], sa["bo"],
                  params["ln1_g"], params["ln1_b"],
                  num_heads=num_heads, causal=True, q_tile=q_tile)
    x = mha_block(x, enc_output, ca["wq"], ca["bq"], ca_wkv, ca_bkv, ca["wo"], ca["bo"],
                  params["ln2_g"], params["ln2_b"],
                  num_heads=num_heads, causal=False, q_tile=q_tile)
    x = ffn_block(x, params["ffn"], params["ln3_g"], params["ln3_b"], q_tile=q_tile)
    return x


# ----------------------------------------------------------------------------- reference (plain JAX) for verification


def _ref_mha(x, kv, mask, p, num_heads):
    S, D = x.shape[1], x.shape[2]
    dh = D // num_heads
    q = x @ p["wq"] + p["bq"]
    k = kv @ p["wk"] + p["bk"]
    v = kv @ p["wv"] + p["bv"]

    def split(t):
        return t.reshape(t.shape[0], t.shape[1], num_heads, dh).transpose(0, 2, 1, 3)

    qh, kh, vh = split(q), split(k), split(v)
    s = jnp.einsum("bhqd,bhkd->bhqk", qh, kh) / (dh ** 0.5)
    if mask is not None:
        s = jnp.where(mask[None, None] > 0, s, -1e9)
    p_attn = jax.nn.softmax(s, axis=-1)
    o = jnp.einsum("bhqk,bhkd->bhqd", p_attn, vh)
    o = o.transpose(0, 2, 1, 3).reshape(x.shape[0], S, D)
    return o @ p["wo"] + p["bo"]


def _ref_ln(y, g, b):
    m = y.mean(-1, keepdims=True)
    v = ((y - m) ** 2).mean(-1, keepdims=True)
    return (y - m) / jnp.sqrt(v + LN_EPS) * g + b


def decoder_layer_ref(x, enc, params, *, num_heads):
    S = x.shape[1]
    tgt_mask = jnp.tril(jnp.ones((S, S), jnp.float32))
    x = _ref_ln(_ref_mha(x, x, tgt_mask, params["self_attn"], num_heads) + x,
                params["ln1_g"], params["ln1_b"])
    x = _ref_ln(_ref_mha(x, enc, None, params["enc_dec_attn"], num_heads) + x,
                params["ln2_g"], params["ln2_b"])
    p = params["ffn"]
    ff = jnp.maximum(x @ p["w1"] + p["b1"], 0.0) @ p["w2"] + p["b2"]
    x = _ref_ln(ff + x, params["ln3_g"], params["ln3_b"])
    return x


# ----------------------------------------------------------------------------- params


def init_params(key, d_model, d_ff):
    keys = iter(jax.random.split(key, 24))  # 20 needed; a few spare

    def w(shape):
        return jax.random.normal(next(keys), shape, jnp.float32) * 0.05

    def attn_params():
        return dict(
            wq=w((d_model, d_model)), bq=w((1, d_model)),
            wk=w((d_model, d_model)), bk=w((1, d_model)),
            wv=w((d_model, d_model)), bv=w((1, d_model)),
            wo=w((d_model, d_model)), bo=w((1, d_model)),
        )

    return dict(
        self_attn=attn_params(),
        enc_dec_attn=attn_params(),
        ffn=dict(w1=w((d_model, d_ff)), b1=w((1, d_ff)),
                 w2=w((d_ff, d_model)), b2=w((1, d_model))),
        ln1_g=jnp.ones((1, d_model), jnp.float32), ln1_b=jnp.zeros((1, d_model), jnp.float32),
        ln2_g=jnp.ones((1, d_model), jnp.float32), ln2_b=jnp.zeros((1, d_model), jnp.float32),
        ln3_g=jnp.ones((1, d_model), jnp.float32), ln3_b=jnp.zeros((1, d_model), jnp.float32),
    )


# ----------------------------------------------------------------------------- main


if __name__ == "__main__":
    B, S, S_ENC, D, H, D_FF = 2, 16, 16, 64, 4, 128
    Q_TILE = 8  # exercises the sequence-tile grid axis (second-to-last block dim % 8 == 0)

    key = jax.random.PRNGKey(0)
    k_x, k_enc, k_p = jax.random.split(key, 3)
    x = jax.random.normal(k_x, (B, S, D), jnp.float32)
    enc_output = jax.random.normal(k_enc, (B, S_ENC, D), jnp.float32)
    params = init_params(k_p, D, D_FF)

    fwd = jax.jit(functools.partial(decoder_layer, num_heads=H, q_tile=Q_TILE))
    out = jax.block_until_ready(fwd(x, enc_output, params))

    ref = decoder_layer_ref(x, enc_output, params, num_heads=H)
    assert out.shape == (B, S, D)
    max_err = float(jnp.max(jnp.abs(out - ref)))
    # Tolerance covers approx-reciprocal softmax normalization (EUP vrcp).
    assert jnp.allclose(out, ref, atol=2e-3, rtol=2e-3), f"mismatch vs reference (max err {max_err})"

    print("KERNEL_OK")
</pallas_src>

<mosaic_0001>
module attributes {stable_mosaic.version = 11 : i64} {
  func.func @mha_residual_ln_kernel(%arg0: i32, %arg1: i32, %arg2: memref<1x8x64xf32, #tpu.memory_space<vmem>>, %arg3: memref<1x16x64xf32, #tpu.memory_space<vmem>>, %arg4: memref<64x64xf32, #tpu.memory_space<vmem>>, %arg5: memref<1x64xf32, #tpu.memory_space<vmem>>, %arg6: memref<64x128xf32, #tpu.memory_space<vmem>>, %arg7: memref<1x128xf32, #tpu.memory_space<vmem>>, %arg8: memref<64x64xf32, #tpu.memory_space<vmem>>, %arg9: memref<1x64xf32, #tpu.memory_space<vmem>>, %arg10: memref<1x64xf32, #tpu.memory_space<vmem>>, %arg11: memref<1x64xf32, #tpu.memory_space<vmem>>, %arg12: memref<1x8x64xf32, #tpu.memory_space<vmem>>) attributes {dimension_semantics = [#tpu.dimension_semantics<parallel>, #tpu.dimension_semantics<parallel>], iteration_bounds = array<i64: 2, 2>, scalar_prefetch = 0 : i64, scratch_operands = 0 : i64, tpu.core_type = #tpu.core_type<tc>, window_params = [{transform_indices = @transform_0, window_bounds = array<i64: 1, 8, 64>}, {transform_indices = @transform_1, window_bounds = array<i64: 1, 16, 64>}, {pipeline_mode = #tpu.pipeline_mode<synchronous>, transform_indices = @transform_2, window_bounds = array<i64: 64, 64>}, {pipeline_mode = #tpu.pipeline_mode<synchronous>, transform_indices = @transform_3, window_bounds = array<i64: 1, 64>}, {pipeline_mode = #tpu.pipeline_mode<synchronous>, transform_indices = @transform_4, window_bounds = array<i64: 64, 128>}, {pipeline_mode = #tpu.pipeline_mode<synchronous>, transform_indices = @transform_5, window_bounds = array<i64: 1, 128>}, {pipeline_mode = #tpu.pipeline_mode<synchronous>, transform_indices = @transform_6, window_bounds = array<i64: 64, 64>}, {pipeline_mode = #tpu.pipeline_mode<synchronous>, transform_indices = @transform_7, window_bounds = array<i64: 1, 64>}, {pipeline_mode = #tpu.pipeline_mode<synchronous>, transform_indices = @transform_8, window_bounds = array<i64: 1, 64>}, {pipeline_mode = #tpu.pipeline_mode<synchronous>, transform_indices = @transform_9, window_bounds = array<i64: 1, 64>}, {transform_indices = @transform_10, window_bounds = array<i64: 1, 8, 64>}]} {
    %c0 = arith.constant 0 : index
    %c0_0 = arith.constant 0 : index
    %c0_1 = arith.constant 0 : index
    %0 = vector.load %arg2[%c0, %c0_0, %c0_1] : memref<1x8x64xf32, #tpu.memory_space<vmem>>, vector<1x8x64xf32>
    %1 = vector.shape_cast %0 : vector<1x8x64xf32> to vector<8x64xf32>
    %c0_2 = arith.constant 0 : index
    %c0_3 = arith.constant 0 : index
    %c0_4 = arith.constant 0 : index
    %2 = vector.load %arg3[%c0_2, %c0_3, %c0_4] : memref<1x16x64xf32, #tpu.memory_space<vmem>>, vector<1x16x64xf32>
    %3 = vector.shape_cast %2 : vector<1x16x64xf32> to vector<16x64xf32>
    %c0_5 = arith.constant 0 : index
    %c0_6 = arith.constant 0 : index
    %4 = vector.load %arg4[%c0_5, %c0_6] : memref<64x64xf32, #tpu.memory_space<vmem>>, vector<64x64xf32>
    %cst = arith.constant dense<0.000000e+00> : vector<8x64xf32>
    %5 = tpu.matmul %1, %4, %cst {dimension_numbers = #tpu.dot_dimension_numbers<[1], [0], [0], [1], [0, 0, 1, 1], [], []>} : vector<8x64xf32>, vector<64x64xf32>, vector<8x64xf32> -> vector<8x64xf32>
    %c0_7 = arith.constant 0 : index
    %c0_8 = arith.constant 0 : index
    %6 = vector.load %arg5[%c0_7, %c0_8] : memref<1x64xf32, #tpu.memory_space<vmem>>, vector<1x64xf32>
    %7 = vector.broadcast %6 : vector<1x64xf32> to vector<8x64xf32>
    %8 = arith.addf %5, %7 : vector<8x64xf32>
    %c0_9 = arith.constant 0 : index
    %c0_10 = arith.constant 0 : index
    %9 = vector.load %arg6[%c0_9, %c0_10] : memref<64x128xf32, #tpu.memory_space<vmem>>, vector<64x128xf32>
    %cst_11 = arith.constant dense<0.000000e+00> : vector<16x128xf32>
    %10 = tpu.matmul %3, %9, %cst_11 {dimension_numbers = #tpu.dot_dimension_numbers<[1], [0], [0], [1], [0, 0, 1, 1], [], []>} : vector<16x64xf32>, vector<64x128xf32>, vector<16x128xf32> -> vector<16x128xf32>
    %c0_12 = arith.constant 0 : index
    %c0_13 = arith.constant 0 : index
    %11 = vector.load %arg7[%c0_12, %c0_13] : memref<1x128xf32, #tpu.memory_space<vmem>>, vector<1x128xf32>
    %12 = vector.broadcast %11 : vector<1x128xf32> to vector<16x128xf32>
    %13 = arith.addf %10, %12 : vector<16x128xf32>
    %14 = vector.extract_strided_slice %13 {offsets = [0, 0], sizes = [16, 64], strides = [1, 1]} : vector<16x128xf32> to vector<16x64xf32>
    %15 = vector.extract_strided_slice %13 {offsets = [0, 64], sizes = [16, 64], strides = [1, 1]} : vector<16x128xf32> to vector<16x64xf32>
    %cst_14 = arith.constant 2.500000e-01 : f32
    %16 = vector.broadcast %cst_14 : f32 to vector<8x64xf32>
    %17 = arith.mulf %8, %16 : vector<8x64xf32>
    %18 = vector.shape_cast %17 : vector<8x64xf32> to vector<8x4x16xf32>
    %19 = vector.shape_cast %14 : vector<16x64xf32> to vector<16x4x16xf32>
    %20 = vector.shape_cast %15 : vector<16x64xf32> to vector<16x4x16xf32>
    "tpu.trace_start"() <{level = 10 : i32, message = "qhd,khd->hqk"}> : () -> ()
    %cst_15 = arith.constant dense<0.000000e+00> : vector<4x8x16xf32>
    %21 = tpu.matmul %18, %19, %cst_15 {dimension_numbers = #tpu.dot_dimension_numbers<[2], [2], [0], [0], [0, 1, 0, 0, 1, 0], [1], [1]>} : vector<8x4x16xf32>, vector<16x4x16xf32>, vector<4x8x16xf32> -> vector<4x8x16xf32>
    "tpu.trace_stop"() : () -> ()
    %c8_i32 = arith.constant 8 : i32
    %22 = arith.muli %arg1, %c8_i32 : i32
    %23 = tpu.iota {dimensions = array<i32: 0>} : vector<8x16xi32>
    %24 = vector.broadcast %22 : i32 to vector<8x16xi32>
    %25 = arith.addi %23, %24 : vector<8x16xi32>
    %26 = tpu.iota {dimensions = array<i32: 1>} : vector<8x16xi32>
    %27 = arith.cmpi sge, %25, %26 : vector<8x16xi32>
    %28 = vector.shape_cast %27 : vector<8x16xi1> to vector<1x8x16xi1>
    %cst_16 = arith.constant -1.000000e+09 : f32
    %29 = vector.shape_cast %28 : vector<1x8x16xi1> to vector<1x8x16xi1>
    %30 = vector.broadcast %29 : vector<1x8x16xi1> to vector<4x8x16xi1>
    %31 = vector.broadcast %cst_16 : f32 to vector<4x8x16xf32>
    %32 = arith.select %30, %21, %31 : vector<4x8x16xi1>, vector<4x8x16xf32>
    %cst_17 = arith.constant dense<0xFF800000> : vector<4x8xf32>
    %33 = vector.multi_reduction <maximumf>, %32, %cst_17 [2] : vector<4x8x16xf32> to vector<4x8xf32>
    %34 = vector.shape_cast %33 : vector<4x8xf32> to vector<4x8x1xf32>
    %35 = vector.broadcast %34 : vector<4x8x1xf32> to vector<4x8x16xf32>
    %36 = arith.subf %32, %35 : vector<4x8x16xf32>
    %37 = math.exp %36 : vector<4x8x16xf32>
    %cst_18 = arith.constant dense<0.000000e+00> : vector<4x8xf32>
    %38 = vector.multi_reduction <add>, %37, %cst_18 [2] : vector<4x8x16xf32> to vector<4x8xf32>
    %39 = vector.shape_cast %38 : vector<4x8xf32> to vector<4x8x1xf32>
    %40 = tpu.reciprocal %39 {approx = true} : vector<4x8x1xf32> -> vector<4x8x1xf32>
    %41 = vector.broadcast %40 : vector<4x8x1xf32> to vector<4x8x16xf32>
    %42 = arith.mulf %37, %41 : vector<4x8x16xf32>
    "tpu.trace_start"() <{level = 10 : i32, message = "hqk,khd->qhd"}> : () -> ()
    %cst_19 = arith.constant dense<0.000000e+00> : vector<4x16x8xf32>
    %43 = tpu.matmul %20, %42, %cst_19 {dimension_numbers = #tpu.dot_dimension_numbers<[0], [2], [2], [1], [0, 1, 0, 2, 1, 1], [1], [0]>} : vector<16x4x16xf32>, vector<4x8x16xf32>, vector<4x16x8xf32> -> vector<4x16x8xf32>
    %44 = tpu.transpose %43, [2, 0, 1] : vector<4x16x8xf32> -> vector<8x4x16xf32>
    "tpu.trace_stop"() : () -> ()
    %45 = vector.shape_cast %44 : vector<8x4x16xf32> to vector<8x64xf32>
    %c0_20 = arith.constant 0 : index
    %c0_21 = arith.constant 0 : index
    %46 = vector.load %arg8[%c0_20, %c0_21] : memref<64x64xf32, #tpu.memory_space<vmem>>, vector<64x64xf32>
    %cst_22 = arith.constant dense<0.000000e+00> : vector<8x64xf32>
    %47 = tpu.matmul %45, %46, %cst_22 {dimension_numbers = #tpu.dot_dimension_numbers<[1], [0], [0], [1], [0, 0, 1, 1], [], []>} : vector<8x64xf32>, vector<64x64xf32>, vector<8x64xf32> -> vector<8x64xf32>
    %c0_23 = arith.constant 0 : index
    %c0_24 = arith.constant 0 : index
    %48 = vector.load %arg9[%c0_23, %c0_24] : memref<1x64xf32, #tpu.memory_space<vmem>>, vector<1x64xf32>
    %49 = vector.broadcast %48 : vector<1x64xf32> to vector<8x64xf32>
    %50 = arith.addf %47, %49 : vector<8x64xf32>
    %51 = arith.addf %50, %1 : vector<8x64xf32>
    %c0_25 = arith.constant 0 : index
    %c0_26 = arith.constant 0 : index
    %52 = vector.load %arg10[%c0_25, %c0_26] : memref<1x64xf32, #tpu.memory_space<vmem>>, vector<1x64xf32>
    %c0_27 = arith.constant 0 : index
    %c0_28 = arith.constant 0 : index
    %53 = vector.load %arg11[%c0_27, %c0_28] : memref<1x64xf32, #tpu.memory_space<vmem>>, vector<1x64xf32>
    %cst_29 = arith.constant dense<0.000000e+00> : vector<8xf32>
    %54 = vector.multi_reduction <add>, %51, %cst_29 [1] : vector<8x64xf32> to vector<8xf32>
    %55 = vector.shape_cast %54 : vector<8xf32> to vector<8x1xf32>
    %cst_30 = arith.constant 6.400000e+01 : f32
    %56 = vector.broadcast %cst_30 : f32 to vector<8x1xf32>
    %57 = arith.divf %55, %56 : vector<8x1xf32>
    %58 = vector.broadcast %57 : vector<8x1xf32> to vector<8x64xf32>
    %59 = arith.subf %51, %58 : vector<8x64xf32>
    %60 = arith.mulf %59, %59 : vector<8x64xf32>
    %cst_31 = arith.constant dense<0.000000e+00> : vector<8xf32>
    %61 = vector.multi_reduction <add>, %60, %cst_31 [1] : vector<8x64xf32> to vector<8xf32>
    %62 = vector.shape_cast %61 : vector<8xf32> to vector<8x1xf32>
    %cst_32 = arith.constant 6.400000e+01 : f32
    %63 = vector.broadcast %cst_32 : f32 to vector<8x1xf32>
    %64 = arith.divf %62, %63 : vector<8x1xf32>
    %65 = vector.broadcast %57 : vector<8x1xf32> to vector<8x64xf32>
    %66 = arith.subf %51, %65 : vector<8x64xf32>
    %cst_33 = arith.constant 9.99999974E-6 : f32
    %67 = vector.broadcast %cst_33 : f32 to vector<8x1xf32>
    %68 = arith.addf %64, %67 : vector<8x1xf32>
    %69 = math.rsqrt %68 : vector<8x1xf32>
    %70 = vector.broadcast %69 : vector<8x1xf32> to vector<8x64xf32>
    %71 = arith.mulf %66, %70 : vector<8x64xf32>
    %72 = vector.broadcast %52 : vector<1x64xf32> to vector<8x64xf32>
    %73 = arith.mulf %71, %72 : vector<8x64xf32>
    %74 = vector.broadcast %53 : vector<1x64xf32> to vector<8x64xf32>
    %75 = arith.addf %73, %74 : vector<8x64xf32>
    %c0_34 = arith.constant 0 : index
    %c0_35 = arith.constant 0 : index
    %c0_36 = arith.constant 0 : index
    %76 = vector.load %arg12[%c0_34, %c0_35, %c0_36] : memref<1x8x64xf32, #tpu.memory_space<vmem>>, vector<1x8x64xf32>
    %77 = vector.shape_cast %76 : vector<1x8x64xf32> to vector<8x64xf32>
    %78 = vector.shape_cast %75 : vector<8x64xf32> to vector<1x8x64xf32>
    tpu.vector_store %arg12[%c0_34, %c0_35, %c0_36], %78 {strides = array<i32>} : memref<1x8x64xf32, #tpu.memory_space<vmem>>, vector<1x8x64xf32>,
    return
  }
  func.func @transform_0(%arg0: i32, %arg1: i32) -> (i32, i32, i32) {
    %c0_i32 = arith.constant 0 : i32
    %c0_i32_0 = arith.constant 0 : i32
    return %arg0, %arg1, %c0_i32 : i32, i32, i32
  }
  func.func @transform_1(%arg0: i32, %arg1: i32) -> (i32, i32, i32) {
    %c0_i32 = arith.constant 0 : i32
    %c0_i32_0 = arith.constant 0 : i32
    %c0_i32_1 = arith.constant 0 : i32
    return %arg0, %c0_i32, %c0_i32_0 : i32, i32, i32
  }
  func.func @transform_2(%arg0: i32, %arg1: i32) -> (i32, i32) {
    %c0_i32 = arith.constant 0 : i32
    %c0_i32_0 = arith.constant 0 : i32
    %c0_i32_1 = arith.constant 0 : i32
    return %c0_i32, %c0_i32_0 : i32, i32
  }
  func.func @transform_3(%arg0: i32, %arg1: i32) -> (i32, i32) {
    %c0_i32 = arith.constant 0 : i32
    %c0_i32_0 = arith.constant 0 : i32
    %c0_i32_1 = arith.constant 0 : i32
    return %c0_i32, %c0_i32_0 : i32, i32
  }
  func.func @transform_4(%arg0: i32, %arg1: i32) -> (i32, i32) {
    %c0_i32 = arith.constant 0 : i32
    %c0_i32_0 = arith.constant 0 : i32
    %c0_i32_1 = arith.constant 0 : i32
    return %c0_i32, %c0_i32_0 : i32, i32
  }
  func.func @transform_5(%arg0: i32, %arg1: i32) -> (i32, i32) {
    %c0_i32 = arith.constant 0 : i32
    %c0_i32_0 = arith.constant 0 : i32
    %c0_i32_1 = arith.constant 0 : i32
    return %c0_i32, %c0_i32_0 : i32, i32
  }
  func.func @transform_6(%arg0: i32, %arg1: i32) -> (i32, i32) {
    %c0_i32 = arith.constant 0 : i32
    %c0_i32_0 = arith.constant 0 : i32
    %c0_i32_1 = arith.constant 0 : i32
    return %c0_i32, %c0_i32_0 : i32, i32
  }
  func.func @transform_7(%arg0: i32, %arg1: i32) -> (i32, i32) {
    %c0_i32 = arith.constant 0 : i32
    %c0_i32_0 = arith.constant 0 : i32
    %c0_i32_1 = arith.constant 0 : i32
    return %c0_i32, %c0_i32_0 : i32, i32
  }
  func.func @transform_8(%arg0: i32, %arg1: i32) -> (i32, i32) {
    %c0_i32 = arith.constant 0 : i32
    %c0_i32_0 = arith.constant 0 : i32
    %c0_i32_1 = arith.constant 0 : i32
    return %c0_i32, %c0_i32_0 : i32, i32
  }
  func.func @transform_9(%arg0: i32, %arg1: i32) -> (i32, i32) {
    %c0_i32 = arith.constant 0 : i32
    %c0_i32_0 = arith.constant 0 : i32
    %c0_i32_1 = arith.constant 0 : i32
    return %c0_i32, %c0_i32_0 : i32, i32
  }
  func.func @transform_10(%arg0: i32, %arg1: i32) -> (i32, i32, i32) {
    %c0_i32 = arith.constant 0 : i32
    %c0_i32_0 = arith.constant 0 : i32
    return %arg0, %arg1, %c0_i32 : i32, i32, i32
  }
}

module attributes {stable_mosaic.version = 11 : i64} {
  func.func @ffn_residual_ln_kernel(%arg0: i32, %arg1: i32, %arg2: memref<1x8x64xf32, #tpu.memory_space<vmem>>, %arg3: memref<64x128xf32, #tpu.memory_space<vmem>>, %arg4: memref<1x128xf32, #tpu.memory_space<vmem>>, %arg5: memref<128x64xf32, #tpu.memory_space<vmem>>, %arg6: memref<1x64xf32, #tpu.memory_space<vmem>>, %arg7: memref<1x64xf32, #tpu.memory_space<vmem>>, %arg8: memref<1x64xf32, #tpu.memory_space<vmem>>, %arg9: memref<1x8x64xf32, #tpu.memory_space<vmem>>) attributes {dimension_semantics = [#tpu.dimension_semantics<parallel>, #tpu.dimension_semantics<parallel>], iteration_bounds = array<i64: 2, 2>, scalar_prefetch = 0 : i64, scratch_operands = 0 : i64, tpu.core_type = #tpu.core_type<tc>, window_params = [{transform_indices = @transform_0, window_bounds = array<i64: 1, 8, 64>}, {pipeline_mode = #tpu.pipeline_mode<synchronous>, transform_indices = @transform_1, window_bounds = array<i64: 64, 128>}, {pipeline_mode = #tpu.pipeline_mode<synchronous>, transform_indices = @transform_2, window_bounds = array<i64: 1, 128>}, {pipeline_mode = #tpu.pipeline_mode<synchronous>, transform_indices = @transform_3, window_bounds = array<i64: 128, 64>}, {pipeline_mode = #tpu.pipeline_mode<synchronous>, transform_indices = @transform_4, window_bounds = array<i64: 1, 64>}, {pipeline_mode = #tpu.pipeline_mode<synchronous>, transform_indices = @transform_5, window_bounds = array<i64: 1, 64>}, {pipeline_mode = #tpu.pipeline_mode<synchronous>, transform_indices = @transform_6, window_bounds = array<i64: 1, 64>}, {transform_indices = @transform_7, window_bounds = array<i64: 1, 8, 64>}]} {
    %c0 = arith.constant 0 : index
    %c0_0 = arith.constant 0 : index
    %c0_1 = arith.constant 0 : index
    %0 = vector.load %arg2[%c0, %c0_0, %c0_1] : memref<1x8x64xf32, #tpu.memory_space<vmem>>, vector<1x8x64xf32>
    %1 = vector.shape_cast %0 : vector<1x8x64xf32> to vector<8x64xf32>
    %c0_2 = arith.constant 0 : index
    %c0_3 = arith.constant 0 : index
    %2 = vector.load %arg3[%c0_2, %c0_3] : memref<64x128xf32, #tpu.memory_space<vmem>>, vector<64x128xf32>
    %cst = arith.constant dense<0.000000e+00> : vector<8x128xf32>
    %3 = tpu.matmul %1, %2, %cst {dimension_numbers = #tpu.dot_dimension_numbers<[1], [0], [0], [1], [0, 0, 1, 1], [], []>} : vector<8x64xf32>, vector<64x128xf32>, vector<8x128xf32> -> vector<8x128xf32>
    %c0_4 = arith.constant 0 : index
    %c0_5 = arith.constant 0 : index
    %4 = vector.load %arg4[%c0_4, %c0_5] : memref<1x128xf32, #tpu.memory_space<vmem>>, vector<1x128xf32>
    %5 = vector.broadcast %4 : vector<1x128xf32> to vector<8x128xf32>
    %6 = arith.addf %3, %5 : vector<8x128xf32>
    %cst_6 = arith.constant 0.000000e+00 : f32
    %7 = vector.broadcast %cst_6 : f32 to vector<8x128xf32>
    %8 = arith.maximumf %6, %7 : vector<8x128xf32>
    %c0_7 = arith.constant 0 : index
    %c0_8 = arith.constant 0 : index
    %9 = vector.load %arg5[%c0_7, %c0_8] : memref<128x64xf32, #tpu.memory_space<vmem>>, vector<128x64xf32>
    %cst_9 = arith.constant dense<0.000000e+00> : vector<8x64xf32>
    %10 = tpu.matmul %8, %9, %cst_9 {dimension_numbers = #tpu.dot_dimension_numbers<[1], [0], [0], [1], [0, 0, 1, 1], [], []>} : vector<8x128xf32>, vector<128x64xf32>, vector<8x64xf32> -> vector<8x64xf32>
    %c0_10 = arith.constant 0 : index
    %c0_11 = arith.constant 0 : index
    %11 = vector.load %arg6[%c0_10, %c0_11] : memref<1x64xf32, #tpu.memory_space<vmem>>, vector<1x64xf32>
    %12 = vector.broadcast %11 : vector<1x64xf32> to vector<8x64xf32>
    %13 = arith.addf %10, %12 : vector<8x64xf32>
    %14 = arith.addf %13, %1 : vector<8x64xf32>
    %c0_12 = arith.constant 0 : index
    %c0_13 = arith.constant 0 : index
    %15 = vector.load %arg7[%c0_12, %c0_13] : memref<1x64xf32, #tpu.memory_space<vmem>>, vector<1x64xf32>
    %c0_14 = arith.constant 0 : index
    %c0_15 = arith.constant 0 : index
    %16 = vector.load %arg8[%c0_14, %c0_15] : memref<1x64xf32, #tpu.memory_space<vmem>>, vector<1x64xf32>
    %cst_16 = arith.constant dense<0.000000e+00> : vector<8xf32>
    %17 = vector.multi_reduction <add>, %14, %cst_16 [1] : vector<8x64xf32> to vector<8xf32>
    %18 = vector.shape_cast %17 : vector<8xf32> to vector<8x1xf32>
    %cst_17 = arith.constant 6.400000e+01 : f32
    %19 = vector.broadcast %cst_17 : f32 to vector<8x1xf32>
    %20 = arith.divf %18, %19 : vector<8x1xf32>
    %21 = vector.broadcast %20 : vector<8x1xf32> to vector<8x64xf32>
    %22 = arith.subf %14, %21 : vector<8x64xf32>
    %23 = arith.mulf %22, %22 : vector<8x64xf32>
    %cst_18 = arith.constant dense<0.000000e+00> : vector<8xf32>
    %24 = vector.multi_reduction <add>, %23, %cst_18 [1] : vector<8x64xf32> to vector<8xf32>
    %25 = vector.shape_cast %24 : vector<8xf32> to vector<8x1xf32>
    %cst_19 = arith.constant 6.400000e+01 : f32
    %26 = vector.broadcast %cst_19 : f32 to vector<8x1xf32>
    %27 = arith.divf %25, %26 : vector<8x1xf32>
    %28 = vector.broadcast %20 : vector<8x1xf32> to vector<8x64xf32>
    %29 = arith.subf %14, %28 : vector<8x64xf32>
    %cst_20 = arith.constant 9.99999974E-6 : f32
    %30 = vector.broadcast %cst_20 : f32 to vector<8x1xf32>
    %31 = arith.addf %27, %30 : vector<8x1xf32>
    %32 = math.rsqrt %31 : vector<8x1xf32>
    %33 = vector.broadcast %32 : vector<8x1xf32> to vector<8x64xf32>
    %34 = arith.mulf %29, %33 : vector<8x64xf32>
    %35 = vector.broadcast %15 : vector<1x64xf32> to vector<8x64xf32>
    %36 = arith.mulf %34, %35 : vector<8x64xf32>
    %37 = vector.broadcast %16 : vector<1x64xf32> to vector<8x64xf32>
    %38 = arith.addf %36, %37 : vector<8x64xf32>
    %c0_21 = arith.constant 0 : index
    %c0_22 = arith.constant 0 : index
    %c0_23 = arith.constant 0 : index
    %39 = vector.load %arg9[%c0_21, %c0_22, %c0_23] : memref<1x8x64xf32, #tpu.memory_space<vmem>>, vector<1x8x64xf32>
    %40 = vector.shape_cast %39 : vector<1x8x64xf32> to vector<8x64xf32>
    %41 = vector.shape_cast %38 : vector<8x64xf32> to vector<1x8x64xf32>
    tpu.vector_store %arg9[%c0_21, %c0_22, %c0_23], %41 {strides = array<i32>} : memref<1x8x64xf32, #tpu.memory_space<vmem>>, vector<1x8x64xf32>,
    return
  }
  func.func @transform_0(%arg0: i32, %arg1: i32) -> (i32, i32, i32) {
    %c0_i32 = arith.constant 0 : i32
    %c0_i32_0 = arith.constant 0 : i32
    return %arg0, %arg1, %c0_i32 : i32, i32, i32
  }
  func.func @transform_1(%arg0: i32, %arg1: i32) -> (i32, i32) {
    %c0_i32 = arith.constant 0 : i32
    %c0_i32_0 = arith.constant 0 : i32
    %c0_i32_1 = arith.constant 0 : i32
    return %c0_i32, %c0_i32_0 : i32, i32
  }
  func.func @transform_2(%arg0: i32, %arg1: i32) -> (i32, i32) {
    %c0_i32 = arith.constant 0 : i32
    %c0_i32_0 = arith.constant 0 : i32
    %c0_i32_1 = arith.constant 0 : i32
    return %c0_i32, %c0_i32_0 : i32, i32
  }
  func.func @transform_3(%arg0: i32, %arg1: i32) -> (i32, i32) {
    %c0_i32 = arith.constant 0 : i32
    %c0_i32_0 = arith.constant 0 : i32
    %c0_i32_1 = arith.constant 0 : i32
    return %c0_i32, %c0_i32_0 : i32, i32
  }
  func.func @transform_4(%arg0: i32, %arg1: i32) -> (i32, i32) {
    %c0_i32 = arith.constant 0 : i32
    %c0_i32_0 = arith.constant 0 : i32
    %c0_i32_1 = arith.constant 0 : i32
    return %c0_i32, %c0_i32_0 : i32, i32
  }
  func.func @transform_5(%arg0: i32, %arg1: i32) -> (i32, i32) {
    %c0_i32 = arith.constant 0 : i32
    %c0_i32_0 = arith.constant 0 : i32
    %c0_i32_1 = arith.constant 0 : i32
    return %c0_i32, %c0_i32_0 : i32, i32
  }
  func.func @transform_6(%arg0: i32, %arg1: i32) -> (i32, i32) {
    %c0_i32 = arith.constant 0 : i32
    %c0_i32_0 = arith.constant 0 : i32
    %c0_i32_1 = arith.constant 0 : i32
    return %c0_i32, %c0_i32_0 : i32, i32
  }
  func.func @transform_7(%arg0: i32, %arg1: i32) -> (i32, i32, i32) {
    %c0_i32 = arith.constant 0 : i32
    %c0_i32_0 = arith.constant 0 : i32
    return %arg0, %arg1, %c0_i32 : i32, i32, i32
  }
}

module attributes {stable_mosaic.version = 11 : i64} {
  func.func @mha_residual_ln_kernel(%arg0: i32, %arg1: i32, %arg2: memref<1x8x64xf32, #tpu.memory_space<vmem>>, %arg3: memref<1x16x64xf32, #tpu.memory_space<vmem>>, %arg4: memref<64x64xf32, #tpu.memory_space<vmem>>, %arg5: memref<1x64xf32, #tpu.memory_space<vmem>>, %arg6: memref<64x128xf32, #tpu.memory_space<vmem>>, %arg7: memref<1x128xf32, #tpu.memory_space<vmem>>, %arg8: memref<64x64xf32, #tpu.memory_space<vmem>>, %arg9: memref<1x64xf32, #tpu.memory_space<vmem>>, %arg10: memref<1x64xf32, #tpu.memory_space<vmem>>, %arg11: memref<1x64xf32, #tpu.memory_space<vmem>>, %arg12: memref<1x8x64xf32, #tpu.memory_space<vmem>>) attributes {dimension_semantics = [#tpu.dimension_semantics<parallel>, #tpu.dimension_semantics<parallel>], iteration_bounds = array<i64: 2, 2>, scalar_prefetch = 0 : i64, scratch_operands = 0 : i64, tpu.core_type = #tpu.core_type<tc>, window_params = [{transform_indices = @transform_0, window_bounds = array<i64: 1, 8, 64>}, {transform_indices = @transform_1, window_bounds = array<i64: 1, 16, 64>}, {pipeline_mode = #tpu.pipeline_mode<synchronous>, transform_indices = @transform_2, window_bounds = array<i64: 64, 64>}, {pipeline_mode = #tpu.pipeline_mode<synchronous>, transform_indices = @transform_3, window_bounds = array<i64: 1, 64>}, {pipeline_mode = #tpu.pipeline_mode<synchronous>, transform_indices = @transform_4, window_bounds = array<i64: 64, 128>}, {pipeline_mode = #tpu.pipeline_mode<synchronous>, transform_indices = @transform_5, window_bounds = array<i64: 1, 128>}, {pipeline_mode = #tpu.pipeline_mode<synchronous>, transform_indices = @transform_6, window_bounds = array<i64: 64, 64>}, {pipeline_mode = #tpu.pipeline_mode<synchronous>, transform_indices = @transform_7, window_bounds = array<i64: 1, 64>}, {pipeline_mode = #tpu.pipeline_mode<synchronous>, transform_indices = @transform_8, window_bounds = array<i64: 1, 64>}, {pipeline_mode = #tpu.pipeline_mode<synchronous>, transform_indices = @transform_9, window_bounds = array<i64: 1, 64>}, {transform_indices = @transform_10, window_bounds = array<i64: 1, 8, 64>}]} {
    %c0 = arith.constant 0 : index
    %c0_0 = arith.constant 0 : index
    %c0_1 = arith.constant 0 : index
    %0 = vector.load %arg2[%c0, %c0_0, %c0_1] : memref<1x8x64xf32, #tpu.memory_space<vmem>>, vector<1x8x64xf32>
    %1 = vector.shape_cast %0 : vector<1x8x64xf32> to vector<8x64xf32>
    %c0_2 = arith.constant 0 : index
    %c0_3 = arith.constant 0 : index
    %c0_4 = arith.constant 0 : index
    %2 = vector.load %arg3[%c0_2, %c0_3, %c0_4] : memref<1x16x64xf32, #tpu.memory_space<vmem>>, vector<1x16x64xf32>
    %3 = vector.shape_cast %2 : vector<1x16x64xf32> to vector<16x64xf32>
    %c0_5 = arith.constant 0 : index
    %c0_6 = arith.constant 0 : index
    %4 = vector.load %arg4[%c0_5, %c0_6] : memref<64x64xf32, #tpu.memory_space<vmem>>, vector<64x64xf32>
    %cst = arith.constant dense<0.000000e+00> : vector<8x64xf32>
    %5 = tpu.matmul %1, %4, %cst {dimension_numbers = #tpu.dot_dimension_numbers<[1], [0], [0], [1], [0, 0, 1, 1], [], []>} : vector<8x64xf32>, vector<64x64xf32>, vector<8x64xf32> -> vector<8x64xf32>
    %c0_7 = arith.constant 0 : index
    %c0_8 = arith.constant 0 : index
    %6 = vector.load %arg5[%c0_7, %c0_8] : memref<1x64xf32, #tpu.memory_space<vmem>>, vector<1x64xf32>
    %7 = vector.broadcast %6 : vector<1x64xf32> to vector<8x64xf32>
    %8 = arith.addf %5, %7 : vector<8x64xf32>
    %c0_9 = arith.constant 0 : index
    %c0_10 = arith.constant 0 : index
    %9 = vector.load %arg6[%c0_9, %c0_10] : memref<64x128xf32, #tpu.memory_space<vmem>>, vector<64x128xf32>
    %cst_11 = arith.constant dense<0.000000e+00> : vector<16x128xf32>
    %10 = tpu.matmul %3, %9, %cst_11 {dimension_numbers = #tpu.dot_dimension_numbers<[1], [0], [0], [1], [0, 0, 1, 1], [], []>} : vector<16x64xf32>, vector<64x128xf32>, vector<16x128xf32> -> vector<16x128xf32>
    %c0_12 = arith.constant 0 : index
    %c0_13 = arith.constant 0 : index
    %11 = vector.load %arg7[%c0_12, %c0_13] : memref<1x128xf32, #tpu.memory_space<vmem>>, vector<1x128xf32>
    %12 = vector.broadcast %11 : vector<1x128xf32> to vector<16x128xf32>
    %13 = arith.addf %10, %12 : vector<16x128xf32>
    %14 = vector.extract_strided_slice %13 {offsets = [0, 0], sizes = [16, 64], strides = [1, 1]} : vector<16x128xf32> to vector<16x64xf32>
    %15 = vector.extract_strided_slice %13 {offsets = [0, 64], sizes = [16, 64], strides = [1, 1]} : vector<16x128xf32> to vector<16x64xf32>
    %cst_14 = arith.constant 2.500000e-01 : f32
    %16 = vector.broadcast %cst_14 : f32 to vector<8x64xf32>
    %17 = arith.mulf %8, %16 : vector<8x64xf32>
    %18 = vector.shape_cast %17 : vector<8x64xf32> to vector<8x4x16xf32>
    %19 = vector.shape_cast %14 : vector<16x64xf32> to vector<16x4x16xf32>
    %20 = vector.shape_cast %15 : vector<16x64xf32> to vector<16x4x16xf32>
    "tpu.trace_start"() <{level = 10 : i32, message = "qhd,khd->hqk"}> : () -> ()
    %cst_15 = arith.constant dense<0.000000e+00> : vector<4x8x16xf32>
    %21 = tpu.matmul %18, %19, %cst_15 {dimension_numbers = #tpu.dot_dimension_numbers<[2], [2], [0], [0], [0, 1, 0, 0, 1, 0], [1], [1]>} : vector<8x4x16xf32>, vector<16x4x16xf32>, vector<4x8x16xf32> -> vector<4x8x16xf32>
    "tpu.trace_stop"() : () -> ()
    %cst_16 = arith.constant dense<0xFF800000> : vector<4x8xf32>
    %22 = vector.multi_reduction <maximumf>, %21, %cst_16 [2] : vector<4x8x16xf32> to vector<4x8xf32>
    %23 = vector.shape_cast %22 : vector<4x8xf32> to vector<4x8x1xf32>
    %24 = vector.broadcast %23 : vector<4x8x1xf32> to vector<4x8x16xf32>
    %25 = arith.subf %21, %24 : vector<4x8x16xf32>
    %26 = math.exp %25 : vector<4x8x16xf32>
    %cst_17 = arith.constant dense<0.000000e+00> : vector<4x8xf32>
    %27 = vector.multi_reduction <add>, %26, %cst_17 [2] : vector<4x8x16xf32> to vector<4x8xf32>
    %28 = vector.shape_cast %27 : vector<4x8xf32> to vector<4x8x1xf32>
    %29 = tpu.reciprocal %28 {approx = true} : vector<4x8x1xf32> -> vector<4x8x1xf32>
    %30 = vector.broadcast %29 : vector<4x8x1xf32> to vector<4x8x16xf32>
    %31 = arith.mulf %26, %30 : vector<4x8x16xf32>
    "tpu.trace_start"() <{level = 10 : i32, message = "hqk,khd->qhd"}> : () -> ()
    %cst_18 = arith.constant dense<0.000000e+00> : vector<4x16x8xf32>
    %32 = tpu.matmul %20, %31, %cst_18 {dimension_numbers = #tpu.dot_dimension_numbers<[0], [2], [2], [1], [0, 1, 0, 2, 1, 1], [1], [0]>} : vector<16x4x16xf32>, vector<4x8x16xf32>, vector<4x16x8xf32> -> vector<4x16x8xf32>
    %33 = tpu.transpose %32, [2, 0, 1] : vector<4x16x8xf32> -> vector<8x4x16xf32>
    "tpu.trace_stop"() : () -> ()
    %34 = vector.shape_cast %33 : vector<8x4x16xf32> to vector<8x64xf32>
    %c0_19 = arith.constant 0 : index
    %c0_20 = arith.constant 0 : index
    %35 = vector.load %arg8[%c0_19, %c0_20] : memref<64x64xf32, #tpu.memory_space<vmem>>, vector<64x64xf32>
    %cst_21 = arith.constant dense<0.000000e+00> : vector<8x64xf32>
    %36 = tpu.matmul %34, %35, %cst_21 {dimension_numbers = #tpu.dot_dimension_numbers<[1], [0], [0], [1], [0, 0, 1, 1], [], []>} : vector<8x64xf32>, vector<64x64xf32>, vector<8x64xf32> -> vector<8x64xf32>
    %c0_22 = arith.constant 0 : index
    %c0_23 = arith.constant 0 : index
    %37 = vector.load %arg9[%c0_22, %c0_23] : memref<1x64xf32, #tpu.memory_space<vmem>>, vector<1x64xf32>
    %38 = vector.broadcast %37 : vector<1x64xf32> to vector<8x64xf32>
    %39 = arith.addf %36, %38 : vector<8x64xf32>
    %40 = arith.addf %39, %1 : vector<8x64xf32>
    %c0_24 = arith.constant 0 : index
    %c0_25 = arith.constant 0 : index
    %41 = vector.load %arg10[%c0_24, %c0_25] : memref<1x64xf32, #tpu.memory_space<vmem>>, vector<1x64xf32>
    %c0_26 = arith.constant 0 : index
    %c0_27 = arith.constant 0 : index
    %42 = vector.load %arg11[%c0_26, %c0_27] : memref<1x64xf32, #tpu.memory_space<vmem>>, vector<1x64xf32>
    %cst_28 = arith.constant dense<0.000000e+00> : vector<8xf32>
    %43 = vector.multi_reduction <add>, %40, %cst_28 [1] : vector<8x64xf32> to vector<8xf32>
    %44 = vector.shape_cast %43 : vector<8xf32> to vector<8x1xf32>
    %cst_29 = arith.constant 6.400000e+01 : f32
    %45 = vector.broadcast %cst_29 : f32 to vector<8x1xf32>
    %46 = arith.divf %44, %45 : vector<8x1xf32>
    %47 = vector.broadcast %46 : vector<8x1xf32> to vector<8x64xf32>
    %48 = arith.subf %40, %47 : vector<8x64xf32>
    %49 = arith.mulf %48, %48 : vector<8x64xf32>
    %cst_30 = arith.constant dense<0.000000e+00> : vector<8xf32>
    %50 = vector.multi_reduction <add>, %49, %cst_30 [1] : vector<8x64xf32> to vector<8xf32>
    %51 = vector.shape_cast %50 : vector<8xf32> to vector<8x1xf32>
    %cst_31 = arith.constant 6.400000e+01 : f32
    %52 = vector.broadcast %cst_31 : f32 to vector<8x1xf32>
    %53 = arith.divf %51, %52 : vector<8x1xf32>
    %54 = vector.broadcast %46 : vector<8x1xf32> to vector<8x64xf32>
    %55 = arith.subf %40, %54 : vector<8x64xf32>
    %cst_32 = arith.constant 9.99999974E-6 : f32
    %56 = vector.broadcast %cst_32 : f32 to vector<8x1xf32>
    %57 = arith.addf %53, %56 : vector<8x1xf32>
    %58 = math.rsqrt %57 : vector<8x1xf32>
    %59 = vector.broadcast %58 : vector<8x1xf32> to vector<8x64xf32>
    %60 = arith.mulf %55, %59 : vector<8x64xf32>
    %61 = vector.broadcast %41 : vector<1x64xf32> to vector<8x64xf32>
    %62 = arith.mulf %60, %61 : vector<8x64xf32>
    %63 = vector.broadcast %42 : vector<1x64xf32> to vector<8x64xf32>
    %64 = arith.addf %62, %63 : vector<8x64xf32>
    %c0_33 = arith.constant 0 : index
    %c0_34 = arith.constant 0 : index
    %c0_35 = arith.constant 0 : index
    %65 = vector.load %arg12[%c0_33, %c0_34, %c0_35] : memref<1x8x64xf32, #tpu.memory_space<vmem>>, vector<1x8x64xf32>
    %66 = vector.shape_cast %65 : vector<1x8x64xf32> to vector<8x64xf32>
    %67 = vector.shape_cast %64 : vector<8x64xf32> to vector<1x8x64xf32>
    tpu.vector_store %arg12[%c0_33, %c0_34, %c0_35], %67 {strides = array<i32>} : memref<1x8x64xf32, #tpu.memory_space<vmem>>, vector<1x8x64xf32>,
    return
  }
  func.func @transform_0(%arg0: i32, %arg1: i32) -> (i32, i32, i32) {
    %c0_i32 = arith.constant 0 : i32
    %c0_i32_0 = arith.constant 0 : i32
    return %arg0, %arg1, %c0_i32 : i32, i32, i32
  }
  func.func @transform_1(%arg0: i32, %arg1: i32) -> (i32, i32, i32) {
    %c0_i32 = arith.constant 0 : i32
    %c0_i32_0 = arith.constant 0 : i32
    %c0_i32_1 = arith.constant 0 : i32
    return %arg0, %c0_i32, %c0_i32_0 : i32, i32, i32
  }
  func.func @transform_2(%arg0: i32, %arg1: i32) -> (i32, i32) {
    %c0_i32 = arith.constant 0 : i32
    %c0_i32_0 = arith.constant 0 : i32
    %c0_i32_1 = arith.constant 0 : i32
    return %c0_i32, %c0_i32_0 : i32, i32
  }
  func.func @transform_3(%arg0: i32, %arg1: i32) -> (i32, i32) {
    %c0_i32 = arith.constant 0 : i32
    %c0_i32_0 = arith.constant 0 : i32
    %c0_i32_1 = arith.constant 0 : i32
    return %c0_i32, %c0_i32_0 : i32, i32
  }
  func.func @transform_4(%arg0: i32, %arg1: i32) -> (i32, i32) {
    %c0_i32 = arith.constant 0 : i32
    %c0_i32_0 = arith.constant 0 : i32
    %c0_i32_1 = arith.constant 0 : i32
    return %c0_i32, %c0_i32_0 : i32, i32
  }
  func.func @transform_5(%arg0: i32, %arg1: i32) -> (i32, i32) {
    %c0_i32 = arith.constant 0 : i32
    %c0_i32_0 = arith.constant 0 : i32
    %c0_i32_1 = arith.constant 0 : i32
    return %c0_i32, %c0_i32_0 : i32, i32
  }
  func.func @transform_6(%arg0: i32, %arg1: i32) -> (i32, i32) {
    %c0_i32 = arith.constant 0 : i32
    %c0_i32_0 = arith.constant 0 : i32
    %c0_i32_1 = arith.constant 0 : i32
    return %c0_i32, %c0_i32_0 : i32, i32
  }
  func.func @transform_7(%arg0: i32, %arg1: i32) -> (i32, i32) {
    %c0_i32 = arith.constant 0 : i32
    %c0_i32_0 = arith.constant 0 : i32
    %c0_i32_1 = arith.constant 0 : i32
    return %c0_i32, %c0_i32_0 : i32, i32
  }
  func.func @transform_8(%arg0: i32, %arg1: i32) -> (i32, i32) {
    %c0_i32 = arith.constant 0 : i32
    %c0_i32_0 = arith.constant 0 : i32
    %c0_i32_1 = arith.constant 0 : i32
    return %c0_i32, %c0_i32_0 : i32, i32
  }
  func.func @transform_9(%arg0: i32, %arg1: i32) -> (i32, i32) {
    %c0_i32 = arith.constant 0 : i32
    %c0_i32_0 = arith.constant 0 : i32
    %c0_i32_1 = arith.constant 0 : i32
    return %c0_i32, %c0_i32_0 : i32, i32
  }
  func.func @transform_10(%arg0: i32, %arg1: i32) -> (i32, i32, i32) {
    %c0_i32 = arith.constant 0 : i32
    %c0_i32_0 = arith.constant 0 : i32
    return %arg0, %arg1, %c0_i32 : i32, i32, i32
  }
}

</mosaic_0001>

<llo_original>
// kernel: decoder_layer.5
$region0: #{decoder_layer.5}
  #allocation0 [shape = 'u32[]', space=smem, size = 0x4, offset = 0x4, fixed_abs, tag = 'smem constant byte address 0x4 - core index']
  #allocation1 [shape = 'u32[144,128]{1,0:T(1,128)}', space=vmem, size = 0x12000, scoped, tag = 'internal scratch']
  %s0 = inlined_call_operand.hbm [shape: f32[2,16,64], index: 0, kind: input, shape index: {}]
  %s1 = inlined_call_operand.hbm [shape: f32[64,128], index: 1, kind: input, shape index: {}]
  %s2 = inlined_call_operand.hbm [shape: f32[1,128], index: 2, kind: input, shape index: {}]
  %s3 = inlined_call_operand.hbm [shape: f32[128,64], index: 3, kind: input, shape index: {}]
  %s4 = inlined_call_operand.hbm [shape: f32[1,64], index: 4, kind: input, shape index: {}]
  %s5 = inlined_call_operand.hbm [shape: f32[1,64], index: 5, kind: input, shape index: {}]
  %s6 = inlined_call_operand.hbm [shape: f32[1,64], index: 6, kind: input, shape index: {}]
  %s7 = inlined_call_operand.hbm [shape: f32[2,16,64], index: 7, kind: output, shape index: {}]
  %s8 = sld [smem:[#allocation0]]
  $region89: #{decoder_layer.5} parent=0
    _
  %s10 = ssub.s32 1, %s8
  %s11 = scalar_select 0, %s10, %s8
  $region1: #{decoder_layer.5} parent=0
    #allocation2 [shape = 'u8[8192]{0}', space=vmem, size = 0x2000, scoped, tag = 'input window, operand 0']
    #allocation3 [shape = 's32[2]{0}', space=sflag, size = 0x8, scoped, tag = 'scoped memory for decoder_layer.5']
    #allocation4 [shape = 's32[2]{0}', space=sflag, size = 0x8, scoped, tag = 'scoped memory for decoder_layer.5']
    #allocation5 [shape = 'u8[32768]{0}', space=vmem, size = 0x8000, scoped, tag = 'input window, operand 1, single buffered']
    #allocation6 [shape = 's32[1]{0}', space=sflag, size = 0x4, scoped, tag = 'scoped memory for decoder_layer.5']
    #allocation7 [shape = 'u8[512]{0}', space=vmem, size = 0x400, scoped, tag = 'input window, operand 2, single buffered']
    #allocation8 [shape = 'u8[65536]{0}', space=vmem, size = 0x10000, scoped, tag = 'input window, operand 3, single buffered']
    #allocation9 [shape = 's32[1]{0}', space=sflag, size = 0x4, scoped, tag = 'scoped memory for decoder_layer.5']
    #allocation10 [shape = 'u8[512]{0}', space=vmem, size = 0x400, scoped, tag = 'input window, operand 4, single buffered']
    #allocation11 [shape = 'u8[512]{0}', space=vmem, size = 0x400, scoped, tag = 'input window, operand 5, single buffered']
    #allocation12 [shape = 's32[1]{0}', space=sflag, size = 0x4, scoped, tag = 'scoped memory for decoder_layer.5']
    #allocation13 [shape = 'u8[512]{0}', space=vmem, size = 0x400, scoped, tag = 'input window, operand 6, single buffered']
    #allocation14 [shape = 'u8[8192]{0}', space=vmem, size = 0x2000, scoped, tag = 'output window, operand 0']
    %12 = vsyncpa [#allocation3], 0
    %s13 = scalar_lea.sflag [#allocation3], 1
    %14 = vsyncpa %s13, 0
    %15 = vsyncpa [#allocation6], 0
    %16 = vsyncpa [#allocation9], 0
    %17 = vsyncpa [#allocation12], 0
    %18 = vsyncpa [#allocation4], 0
    %s19 = scalar_lea.sflag [#allocation4], 1
    %20 = vsyncpa %s19, 0
    loop: start=0, step=1, limit=6
    $region2: #{decoder_layer.5} parent=1 // loop_pre_header
      _
    $region3: #{decoder_layer.5} parent=1 // loop_header
      %s22 = sphi 0, %s26
      %p23 = scmp.ge.s32.totalorder %s22, 6
      %s29 = sphi 0, %s41
      %s30 = sphi 0, %s37
      %s31 = sphi 0, %s29
      %s32 = sphi 0, %s30
      %s33 = sphi 0, %s31
      %s34 = sphi 0, %s32
      %s46 = sphi 0, %s48
      %s49 = sphi 0, %s46
      %s50 = sphi 0, %s49
      %s66 = sphi 0, %s50
      %s70 = sphi 0, %s70
      %s72 = sphi 0, %s70
      %s73 = sphi 0, %s72
      %s87 = sphi 0, %s73
      %s91 = sphi 0, %s91
      %s93 = sphi 0, %s91
      %s94 = sphi 0, %s93
      %s108 = sphi 0, %s94
      %s112 = sphi 0, %s112
      %s114 = sphi 0, %s112
      %s115 = sphi 0, %s114
      %s129 = sphi 0, %s115
      %s133 = sphi 0, %s133
      %s135 = sphi 0, %s133
      %s136 = sphi 0, %s135
      %s150 = sphi 0, %s136
      %s154 = sphi 0, %s154
      %s156 = sphi 0, %s154
      %s157 = sphi 0, %s156
      %s171 = sphi 0, %s157
      %s175 = sphi 0, %s175
      %s177 = sphi 0, %s175
      %s178 = sphi 0, %s177
      %s192 = sphi 0, %s178
      %s200 = sphi 0, %s202
      %s203 = sphi 0, %s200
      %s204 = sphi 0, %s203
      %s220 = sphi 0, %s204
    $region4: #{decoder_layer.5} parent=1 // loop_header_branch
      %25 = sbr.rel (%p23) target = $region8
    $region5: #{decoder_layer.5} parent=1 // loop_body
      %s27 = ssub.s32 %s22, 1
      %s28 = ssub.s32 %s22, 2
      %s35 = sadd.s32 1, %s30
      %p36 = scmp.ge.s32.totalorder %s35, 2
      %s37 = scalar_select %p36, 0, %s35
      %s38 = sadd.s32 1, %s29
      %s39 = scalar_select %p36, %s38, %s29
      %p40 = scmp.ge.s32.totalorder %s39, 2
      %s41 = scalar_select %p40, 0, %s39
      %s42 = ssub.s32 %s29, %s41
      %s43 = ssub.s32 %s30, %s37
      %s44 = sor.u32 %s42, %s43
      %p45 = scmp.eq.s32.totalorder %s44, 0
      %s47 = sadd.s32 %s46, 1
      %s48 = scalar_select %p45, %s46, %s47
      %p51 = pneg %p45
      %p52 = scmp.eq.s32.totalorder %s22, 3
      %p53 = por %p51, %p52
      %p54 = scmp.ne.s32.totalorder %s46, %s49
      %p55 = scmp.eq.s32.totalorder %s22, 0
      %p56 = por %p54, %p55
      %p57 = scmp.ne.s32.totalorder %s46, %s49
      %p58 = scmp.eq.s32.totalorder %s27, 3
      %p59 = por %p57, %p58
      %p60 = scmp.ne.s32.totalorder %s49, %s50
      %p61 = scmp.eq.s32.totalorder %s27, 0
      %p62 = por %p60, %p61
      %p63 = scmp.ne.s32.totalorder %s49, %s50
      %p64 = scmp.eq.s32.totalorder %s28, 3
      %p65 = por %p63, %p64
      %p67 = scmp.ne.s32.totalorder %s50, %s66
      %p68 = scmp.eq.s32.totalorder %s28, 0
      %p69 = por %p67, %p68
      %s71 = sadd.s32 %s70, 1
      %p74 = scmp.eq.s32.totalorder %s22, 3
      %p75 = scmp.ne.s32.totalorder %s70, %s72
      %p76 = scmp.eq.s32.totalorder %s22, 0
      %p77 = por %p75, %p76
      %p78 = scmp.ne.s32.totalorder %s70, %s72
      %p79 = scmp.eq.s32.totalorder %s27, 3
      %p80 = por %p78, %p79
      %p81 = scmp.ne.s32.totalorder %s72, %s73
      %p82 = scmp.eq.s32.totalorder %s27, 0
      %p83 = por %p81, %p82
      %p84 = scmp.ne.s32.totalorder %s72, %s73
      %p85 = scmp.eq.s32.totalorder %s28, 3
      %p86 = por %p84, %p85
      %p88 = scmp.ne.s32.totalorder %s73, %s87
      %p89 = scmp.eq.s32.totalorder %s28, 0
      %p90 = por %p88, %p89
      %s92 = sadd.s32 %s91, 1
      %p95 = scmp.eq.s32.totalorder %s22, 3
      %p96 = scmp.ne.s32.totalorder %s91, %s93
      %p97 = scmp.eq.s32.totalorder %s22, 0
      %p98 = por %p96, %p97
      %p99 = scmp.ne.s32.totalorder %s91, %s93
      %p100 = scmp.eq.s32.totalorder %s27, 3
      %p101 = por %p99, %p100
      %p102 = scmp.ne.s32.totalorder %s93, %s94
      %p103 = scmp.eq.s32.totalorder %s27, 0
      %p104 = por %p102, %p103
      %p105 = scmp.ne.s32.totalorder %s93, %s94
      %p106 = scmp.eq.s32.totalorder %s28, 3
      %p107 = por %p105, %p106
      %p109 = scmp.ne.s32.totalorder %s94, %s108
      %p110 = scmp.eq.s32.totalorder %s28, 0
      %p111 = por %p109, %p110
      %s113 = sadd.s32 %s112, 1
      %p116 = scmp.eq.s32.totalorder %s22, 3
      %p117 = scmp.ne.s32.totalorder %s112, %s114
      %p118 = scmp.eq.s32.totalorder %s22, 0
      %p119 = por %p117, %p118
      %p120 = scmp.ne.s32.totalorder %s112, %s114
      %p121 = scmp.eq.s32.totalorder %s27, 3
      %p122 = por %p120, %p121
      %p123 = scmp.ne.s32.totalorder %s114, %s115
      %p124 = scmp.eq.s32.totalorder %s27, 0
      %p125 = por %p123, %p124
      %p126 = scmp.ne.s32.totalorder %s114, %s115
      %p127 = scmp.eq.s32.totalorder %s28, 3
      %p128 = por %p126, %p127
      %p130 = scmp.ne.s32.totalorder %s115, %s129
      %p131 = scmp.eq.s32.totalorder %s28, 0
      %p132 = por %p130, %p131
      %s134 = sadd.s32 %s133, 1
      %p137 = scmp.eq.s32.totalorder %s22, 3
      %p138 = scmp.ne.s32.totalorder %s133, %s135
      %p139 = scmp.eq.s32.totalorder %s22, 0
      %p140 = por %p138, %p139
      %p141 = scmp.ne.s32.totalorder %s133, %s135
      %p142 = scmp.eq.s32.totalorder %s27, 3
      %p143 = por %p141, %p142
      %p144 = scmp.ne.s32.totalorder %s135, %s136
      %p145 = scmp.eq.s32.totalorder %s27, 0
      %p146 = por %p144, %p145
      %p147 = scmp.ne.s32.totalorder %s135, %s136
      %p148 = scmp.eq.s32.totalorder %s28, 3
      %p149 = por %p147, %p148
      %p151 = scmp.ne.s32.totalorder %s136, %s150
      %p152 = scmp.eq.s32.totalorder %s28, 0
      %p153 = por %p151, %p152
      %s155 = sadd.s32 %s154, 1
      %p158 = scmp.eq.s32.totalorder %s22, 3
      %p159 = scmp.ne.s32.totalorder %s154, %s156
      %p160 = scmp.eq.s32.totalorder %s22, 0
      %p161 = por %p159, %p160
      %p162 = scmp.ne.s32.totalorder %s154, %s156
      %p163 = scmp.eq.s32.totalorder %s27, 3
      %p164 = por %p162, %p163
      %p165 = scmp.ne.s32.totalorder %s156, %s157
      %p166 = scmp.eq.s32.totalorder %s27, 0
      %p167 = por %p165, %p166
      %p168 = scmp.ne.s32.totalorder %s156, %s157
      %p169 = scmp.eq.s32.totalorder %s28, 3
      %p170 = por %p168, %p169
      %p172 = scmp.ne.s32.totalorder %s157, %s171
      %p173 = scmp.eq.s32.totalorder %s28, 0
      %p174 = por %p172, %p173
      %s176 = sadd.s32 %s175, 1
      %p179 = scmp.eq.s32.totalorder %s22, 3
      %p180 = scmp.ne.s32.totalorder %s175, %s177
      %p181 = scmp.eq.s32.totalorder %s22, 0
      %p182 = por %p180, %p181
      %p183 = scmp.ne.s32.totalorder %s175, %s177
      %p184 = scmp.eq.s32.totalorder %s27, 3
      %p185 = por %p183, %p184
      %p186 = scmp.ne.s32.totalorder %s177, %s178
      %p187 = scmp.eq.s32.totalorder %s27, 0
      %p188 = por %p186, %p187
      %p189 = scmp.ne.s32.totalorder %s177, %s178
      %p190 = scmp.eq.s32.totalorder %s28, 3
      %p191 = por %p189, %p190
      %p193 = scmp.ne.s32.totalorder %s178, %s192
      %p194 = scmp.eq.s32.totalorder %s28, 0
      %p195 = por %p193, %p194
      %s196 = ssub.s32 %s29, %s41
      %s197 = ssub.s32 %s30, %s37
      %s198 = sor.u32 %s196, %s197
      %p199 = scmp.eq.s32.totalorder %s198, 0
      %s201 = sadd.s32 %s200, 1
      %s202 = scalar_select %p199, %s200, %s201
      %p205 = pneg %p199
      %p206 = scmp.eq.s32.totalorder %s22, 3
      %p207 = por %p205, %p206
      %p208 = scmp.ne.s32.totalorder %s200, %s203
      %p209 = scmp.eq.s32.totalorder %s22, 0
      %p210 = por %p208, %p209
      %p211 = scmp.ne.s32.totalorder %s200, %s203
      %p212 = scmp.eq.s32.totalorder %s27, 3
      %p213 = por %p211, %p212
      %p214 = scmp.ne.s32.totalorder %s203, %s204
      %p215 = scmp.eq.s32.totalorder %s27, 0
      %p216 = por %p214, %p215
      %p217 = scmp.ne.s32.totalorder %s203, %s204
      %p218 = scmp.eq.s32.totalorder %s28, 3
      %p219 = por %p217, %p218
      %p221 = scmp.ne.s32.totalorder %s204, %s220
      %p222 = scmp.eq.s32.totalorder %s28, 0
      %p223 = por %p221, %p222
      %p224 = scmp.le.s32.totalorder 1, %s22
      %p225 = scmp.lt.s32.totalorder %s22, 5
      %p226 = pnand %p224, %p225
      %p227 = pneg %p226
      // Predicated region
      $region9: #{decoder_layer.5} parent=5 // pred_check
        _
      $region10: #{decoder_layer.5} parent=5 // pred_check_branch
        %229 = sbr.rel (%p226) target = $region12
      $region11: #{decoder_layer.5} parent=5 // pred_region
        %s230 = ssub.s32 %s22, 1
        // Predicated region
        $region13: #{decoder_layer.5} parent=11 // pred_check
          %p231 = pneg %p83
        $region14: #{decoder_layer.5} parent=11 // pred_check_branch
          %233 = sbr.rel (%p231) target = $region16
        $region15: #{decoder_layer.5} parent=11 // pred_region
          %s235 = ssub.s32 1024, 1024
          %236 = vsyncadd [#allocation6], %s235
          %s237 = sshll.u32 [#allocation5], 4
          %s238 = int_to_ptr.vmem [resolvable:$true] %s237
          %243 = dma.hbm_to_vmem [thread:$0]  %s1, 1024, %s238, [#allocation6], 128, 128, 8
        $region16: #{decoder_layer.5} parent=11 // pred_fallthru
          _
        // Predicated region
        $region17: #{decoder_layer.5} parent=11 // pred_check
          %p244 = pneg %p104
        $region18: #{decoder_layer.5} parent=11 // pred_check_branch
          %246 = sbr.rel (%p244) target = $region20
        $region19: #{decoder_layer.5} parent=11 // pred_region
          %s248 = ssub.s32 16, 16
          %249 = vsyncadd [#allocation6], %s248
          %s251 = sshll.u32 [#allocation7], 4
          %s252 = int_to_ptr.vmem [resolvable:$true] %s251
          %254 = dma.hbm_to_vmem [thread:$0]  %s2, 16, %s252, [#allocation6]
        $region20: #{decoder_layer.5} parent=11 // pred_fallthru
          _
        // Predicated region
        $region21: #{decoder_layer.5} parent=11 // pred_check
          %p255 = pneg %p125
        $region22: #{decoder_layer.5} parent=11 // pred_check_branch
          %257 = sbr.rel (%p255) target = $region24
        $region23: #{decoder_layer.5} parent=11 // pred_region
          %s259 = ssub.s32 2048, 2048
          %260 = vsyncadd [#allocation9], %s259
          %s261 = sshll.u32 [#allocation8], 4
          %s262 = int_to_ptr.vmem [resolvable:$true] %s261
          %267 = dma.hbm_to_vmem [thread:$0]  %s3, 2048, %s262, [#allocation9], 128, 128, 8
        $region24: #{decoder_layer.5} parent=11 // pred_fallthru
          _
        // Predicated region
        $region25: #{decoder_layer.5} parent=11 // pred_check
          %p268 = pneg %p146
        $region26: #{decoder_layer.5} parent=11 // pred_check_branch
          %270 = sbr.rel (%p268) target = $region28
        $region27: #{decoder_layer.5} parent=11 // pred_region
          %s272 = ssub.s32 16, 16
          %273 = vsyncadd [#allocation9], %s272
          %s275 = sshll.u32 [#allocation10], 4
          %s276 = int_to_ptr.vmem [resolvable:$true] %s275
          %278 = dma.hbm_to_vmem [thread:$0]  %s4, 16, %s276, [#allocation9]
        $region28: #{decoder_layer.5} parent=11 // pred_fallthru
          _
        // Predicated region
        $region29: #{decoder_layer.5} parent=11 // pred_check
          %p279 = pneg %p167
        $region30: #{decoder_layer.5} parent=11 // pred_check_branch
          %281 = sbr.rel (%p279) target = $region32
        $region31: #{decoder_layer.5} parent=11 // pred_region
          %s283 = ssub.s32 16, 16
          %284 = vsyncadd [#allocation12], %s283
          %s286 = sshll.u32 [#allocation11], 4
          %s287 = int_to_ptr.vmem [resolvable:$true] %s286
          %289 = dma.hbm_to_vmem [thread:$0]  %s5, 16, %s287, [#allocation12]
        $region32: #{decoder_layer.5} parent=11 // pred_fallthru
          _
        // Predicated region
        $region33: #{decoder_layer.5} parent=11 // pred_check
          %p290 = pneg %p188
        $region34: #{decoder_layer.5} parent=11 // pred_check_branch
          %292 = sbr.rel (%p290) target = $region36
        $region35: #{decoder_layer.5} parent=11 // pred_region
          %s294 = ssub.s32 16, 16
          %295 = vsyncadd [#allocation12], %s294
          %s297 = sshll.u32 [#allocation13], 4
          %s298 = int_to_ptr.vmem [resolvable:$true] %s297
          %300 = dma.hbm_to_vmem [thread:$0]  %s6, 16, %s298, [#allocation12]
        $region36: #{decoder_layer.5} parent=11 // pred_fallthru
          _
      $region12: #{decoder_layer.5} parent=5 // pred_fallthru
        _
      %p301 = scmp.lt.s32.totalorder %s22, 4
      // Predicated region
      $region37: #{decoder_layer.5} parent=5 // pred_check
        %p302 = pneg %p301
      $region38: #{decoder_layer.5} parent=5 // pred_check_branch
        %304 = sbr.rel (%p302) target = $region40
      $region39: #{decoder_layer.5} parent=5 // pred_region
        // Predicated region
        $region41: #{decoder_layer.5} parent=39 // pred_check
          %p305 = pneg %p56
        $region42: #{decoder_layer.5} parent=39 // pred_check_branch
          %307 = sbr.rel (%p305) target = $region44
        $region43: #{decoder_layer.5} parent=39 // pred_region
          %s308 = sand.u32 %s46, 1
          %s309 = scalar_lea.sflag [#allocation3], %s308
          %s310 = sand.u32 %s46, 1
          %s311 = smul.addr %s310, 8
          %s312 = scalar_lea.vmem [#allocation2], %s311
          %s314 = ssub.s32 128, 128
          %315 = vsyncadd %s309, %s314
          %s316 = smul.addr %s29, 2
          %s317 = sadd.s32 %s30, %s316
          %s318 = smul.addr %s317, 128
          %s319 = scalar_lea.hbm %s0, %s318
          %s321 = sshll.u32 %s312, 4
          %s322 = int_to_ptr.vmem [resolvable:$true] %s321
          %324 = dma.hbm_to_vmem [thread:$0]  %s319, 128, %s322, %s309
        $region44: #{decoder_layer.5} parent=39 // pred_fallthru
          _
      $region40: #{decoder_layer.5} parent=5 // pred_fallthru
        _
      %p325 = scmp.le.s32.totalorder 1, %s22
      %p326 = scmp.lt.s32.totalorder %s22, 5
      %p327 = pnand %p325, %p326
      %p328 = pneg %p327
      // Predicated region
      $region45: #{decoder_layer.5} parent=5 // pred_check
        _
      $region46: #{decoder_layer.5} parent=5 // pred_check_branch
        %330 = sbr.rel (%p327) target = $region48
      $region47: #{decoder_layer.5} parent=5 // pred_region
        %s331 = ssub.s32 %s22, 1
        %s332 = sand.u32 %s49, 1
        %s333 = scalar_lea.sflag [#allocation3], %s332
        %s334 = sand.u32 %s49, 1
        %s335 = smul.addr %s334, 8
        %s336 = scalar_lea.vmem [#allocation2], %s335
        // Predicated region
        $region49: #{decoder_layer.5} parent=47 // pred_check
          %p337 = pneg %p62
        $region50: #{decoder_layer.5} parent=47 // pred_check_branch
          %339 = sbr.rel (%p337) target = $region52
        $region51: #{decoder_layer.5} parent=47 // pred_region
          %340 = dma.done %s333, 128
        $region52: #{decoder_layer.5} parent=47 // pred_fallthru
          _
        // Predicated region
        $region53: #{decoder_layer.5} parent=47 // pred_check
          %p341 = pneg %p83
        $region54: #{decoder_layer.5} parent=47 // pred_check_branch
          %343 = sbr.rel (%p341) target = $region56
        $region55: #{decoder_layer.5} parent=47 // pred_region
          %344 = dma.done [#allocation6], 1024
        $region56: #{decoder_layer.5} parent=47 // pred_fallthru
          _
        // Predicated region
        $region57: #{decoder_layer.5} parent=47 // pred_check
          %p345 = pneg %p104
        $region58: #{decoder_layer.5} parent=47 // pred_check_branch
          %347 = sbr.rel (%p345) target = $region60
        $region59: #{decoder_layer.5} parent=47 // pred_region
          %348 = dma.done [#allocation6], 16
        $region60: #{decoder_layer.5} parent=47 // pred_fallthru
          _
        // Predicated region
        $region61: #{decoder_layer.5} parent=47 // pred_check
          %p349 = pneg %p125
        $region62: #{decoder_layer.5} parent=47 // pred_check_branch
          %351 = sbr.rel (%p349) target = $region64
        $region63: #{decoder_layer.5} parent=47 // pred_region
          %352 = dma.done [#allocation9], 2048
        $region64: #{decoder_layer.5} parent=47 // pred_fallthru
          _
        // Predicated region
        $region65: #{decoder_layer.5} parent=47 // pred_check
          %p353 = pneg %p146
        $region66: #{decoder_layer.5} parent=47 // pred_check_branch
          %355 = sbr.rel (%p353) target = $region68
        $region67: #{decoder_layer.5} parent=47 // pred_region
          %356 = dma.done [#allocation9], 16
        $region68: #{decoder_layer.5} parent=47 // pred_fallthru
          _
        // Predicated region
        $region69: #{decoder_layer.5} parent=47 // pred_check
          %p357 = pneg %p167
        $region70: #{decoder_layer.5} parent=47 // pred_check_branch
          %359 = sbr.rel (%p357) target = $region72
        $region71: #{decoder_layer.5} parent=47 // pred_region
          %360 = dma.done [#allocation12], 16
        $region72: #{decoder_layer.5} parent=47 // pred_fallthru
          _
        // Predicated region
        $region73: #{decoder_layer.5} parent=47 // pred_check
          %p361 = pneg %p188
        $region74: #{decoder_layer.5} parent=47 // pred_check_branch
          %363 = sbr.rel (%p361) target = $region76
        $region75: #{decoder_layer.5} parent=47 // pred_region
          %364 = dma.done [#allocation12], 16
        $region76: #{decoder_layer.5} parent=47 // pred_fallthru
          _
        %s365 = sand.u32 %s49, 1
        %s366 = scalar_lea.sflag [#allocation3], %s365
        %s367 = sand.u32 %s49, 1
        %s368 = smul.addr %s367, 8
        %s369 = scalar_lea.vmem [#allocation2], %s368
        %p370 = pneg %p62
        %p371 = pneg %p59
        %p372 = pneg %p83
        %p373 = pneg %p80
        %p374 = pneg %p104
        %p375 = pneg %p101
        %p376 = pneg %p125
        %p377 = pneg %p122
        %p378 = pneg %p146
        %p379 = pneg %p143
        %p380 = pneg %p167
        %p381 = pneg %p164
        %p382 = pneg %p188
        %p383 = pneg %p185
        %p384 = pneg %p216
        %p385 = pneg %p213
        %s386 = sand.u32 %s203, 1
        %s387 = scalar_lea.sflag [#allocation4], %s386
        %s388 = sand.u32 %s203, 1
        %s389 = smul.addr %s388, 8
        %s390 = scalar_lea.vmem [#allocation14], %s389
        %v391 = vld [vmem:[%s336] sm:$0xff]
        %v392 = vld [vmem:[#allocation5] sm:$0xff]
        %v393 = vld [vmem:[#allocation5 + $0x8] sm:$0xff]
        %v394 = vld [vmem:[#allocation5 + $0x10] sm:$0xff]
        %v395 = vld [vmem:[#allocation5 + $0x18] sm:$0xff]
        %v396 = vld [vmem:[#allocation5 + $0x20] sm:$0xff]
        %v397 = vld [vmem:[#allocation5 + $0x28] sm:$0xff]
        %v398 = vld [vmem:[#allocation5 + $0x30] sm:$0xff]
        %v399 = vld [vmem:[#allocation5 + $0x38] sm:$0xff]
        %v400 = vld [vmem:[#allocation7] sm:$0x1]
        %v402 = vlaneseq
        %v403 = vshrl.u32 %v402, 7
        %v404 = vsub.s32 0, %v403
        %v405 = vrot.slane %v400, %v404
        %vm407 = vcmask 523264
        %v409 = vsel %vm407, %v391, 0
        %411 = vmatprep.subr.mxu0 0.0
        %412 = vmatpush1.msra.mxu0 %v392
        %413 = vmatprep.subr.mxu0 0.0
        %414 = vmatpush1.msra.mxu0 %v393
        %415 = vmatprep.subr.mxu0 0.0
        %416 = vmatpush1.msra.mxu0 %v394
        %417 = vmatprep.subr.mxu0 0.0
        %418 = vmatpush1.msra.mxu0 %v395
        %419 = vmatprep.subr.mxu0 0.0
        %420 = vmatpush1.msra.mxu0 %v396
        %421 = vmatprep.subr.mxu0 0.0
        %422 = vmatpush1.msra.mxu0 %v397
        %423 = vmatprep.subr.mxu0 0.0
        %424 = vmatpush1.msra.mxu0 %v398
        %425 = vmatprep.subr.mxu0 0.0
        %426 = vmatpush1.msra.mxu0 %v399
        %427 = vmatprep.subr.mxu0 0.0
        %428 = vmatpush1.msra.mxu0 0.0
        %429 = vmatprep.subr.mxu0 0.0
        %430 = vmatpush1.msra.mxu0 0.0
        %431 = vmatprep.subr.mxu0 0.0
        %432 = vmatpush1.msra.mxu0 0.0
        %433 = vmatprep.subr.mxu0 0.0
        %434 = vmatpush1.msra.mxu0 0.0
        %435 = vmatprep.subr.mxu0 0.0
        %436 = vmatpush1.msra.mxu0 0.0
        %437 = vmatprep.subr.mxu0 0.0
        %438 = vmatpush1.msra.mxu0 0.0
        %439 = vmatprep.subr.mxu0 0.0
        %440 = vmatpush1.msra.mxu0 0.0
        %441 = vmatprep.subr.mxu0 0.0
        %442 = vmatpush1.msra.mxu0 0.0
        %443 = vmatprep.subr.mxu0 0.0
        %444 = vmatpush1.msra.mxu0 0.0
        %445 = vmatprep.subr.mxu0 0.0
        %446 = vmatpush1.msra.mxu0 0.0
        %447 = vmatprep.subr.mxu0 0.0
        %448 = vmatpush1.msra.mxu0 0.0
        %449 = vmatprep.subr.mxu0 0.0
        %450 = vmatpush1.msra.mxu0 0.0
        %451 = vmatprep.subr.mxu0 0.0
        %452 = vmatpush1.msra.mxu0 0.0
        %453 = vmatprep.subr.mxu0 0.0
        %454 = vmatpush1.msra.mxu0 0.0
        %455 = vmatprep.subr.mxu0 0.0
        %456 = vmatpush1.msra.mxu0 0.0
        %457 = vmatprep.subr.mxu0 0.0
        %458 = vmatpush1.msra.mxu0 0.0
        %459 = vmatprep.subr.mxu0 0.0
        %460 = vmatpush1.msra.mxu0 0.0
        %461 = vmatprep.subr.mxu0 0.0
        %462 = vmatpush1.msra.mxu0 0.0
        %463 = vmatprep.subr.mxu0 0.0
        %464 = vmatpush1.msra.mxu0 0.0
        %465 = vmatprep.subr.mxu0 0.0
        %466 = vmatpush1.msra.mxu0 0.0
        %467 = vmatprep.subr.mxu0 0.0
        %468 = vmatpush1.msra.mxu0 0.0
        %469 = vmatprep.subr.mxu0 0.0
        %470 = vmatpush1.msra.mxu0 0.0
        %471 = vmatprep.subr.mxu0 0.0
        %472 = vmatpush1.msra.mxu0 0.0
        %473 = vmatprep.subr.mxu0 0.0
        %474 = vmatpush1.msra.mxu0 0.0
        %475 = vmatprep.mubr.f32.mxu0 0.0
        %476 = vmatmul.mubr.f32.gmra.mrb[0].mxu0 %v409
        %v477 = vpop.f32.mrb[0].mxu0
        %v478 = vadd.f32 %v405, %v477
        %v479 = vpop.f32.mrb[0].mxu0
        %480 = vdwg.mxu0
        %v481 = vmax.f32 %v478, 0.0
        %v482 = vld [vmem:[#allocation8] sm:$0xff]
        %v483 = vld [vmem:[#allocation8 + $0x8] sm:$0xff]
        %v484 = vld [vmem:[#allocation8 + $0x10] sm:$0xff]
        %v485 = vld [vmem:[#allocation8 + $0x18] sm:$0xff]
        %v486 = vld [vmem:[#allocation8 + $0x20] sm:$0xff]
        %v487 = vld [vmem:[#allocation8 + $0x28] sm:$0xff]
        %v488 = vld [vmem:[#allocation8 + $0x30] sm:$0xff]
        %v489 = vld [vmem:[#allocation8 + $0x38] sm:$0xff]
        %v490 = vld [vmem:[#allocation8 + $0x40] sm:$0xff]
        %v491 = vld [vmem:[#allocation8 + $0x48] sm:$0xff]
        %v492 = vld [vmem:[#allocation8 + $0x50] sm:$0xff]
        %v493 = vld [vmem:[#allocation8 + $0x58] sm:$0xff]
        %v494 = vld [vmem:[#allocation8 + $0x60] sm:$0xff]
        %v495 = vld [vmem:[#allocation8 + $0x68] sm:$0xff]
        %v496 = vld [vmem:[#allocation8 + $0x70] sm:$0xff]
        %v497 = vld [vmem:[#allocation8 + $0x78] sm:$0xff]
        %v498 = vld [vmem:[#allocation10] sm:$0x1]
        %v500 = vlaneseq
        %v501 = vshrl.u32 %v500, 7
        %v502 = vsub.s32 0, %v501
        %v503 = vrot.slane %v498, %v502
        %505 = vmatprep.subr.mxu0 0.0
        %506 = vmatpush1.msra.mxu0 %v482
        %507 = vmatprep.subr.mxu0 0.0
        %508 = vmatpush1.msra.mxu0 %v483
        %509 = vmatprep.subr.mxu0 0.0
        %510 = vmatpush1.msra.mxu0 %v484
        %511 = vmatprep.subr.mxu0 0.0
        %512 = vmatpush1.msra.mxu0 %v485
        %513 = vmatprep.subr.mxu0 0.0
        %514 = vmatpush1.msra.mxu0 %v486
        %515 = vmatprep.subr.mxu0 0.0
        %516 = vmatpush1.msra.mxu0 %v487
        %517 = vmatprep.subr.mxu0 0.0
        %518 = vmatpush1.msra.mxu0 %v488
        %519 = vmatprep.subr.mxu0 0.0
        %520 = vmatpush1.msra.mxu0 %v489
        %521 = vmatprep.subr.mxu0 0.0
        %522 = vmatpush1.msra.mxu0 %v490
        %523 = vmatprep.subr.mxu0 0.0
        %524 = vmatpush1.msra.mxu0 %v491
        %525 = vmatprep.subr.mxu0 0.0
        %526 = vmatpush1.msra.mxu0 %v492
        %527 = vmatprep.subr.mxu0 0.0
        %528 = vmatpush1.msra.mxu0 %v493
        %529 = vmatprep.subr.mxu0 0.0
        %530 = vmatpush1.msra.mxu0 %v494
        %531 = vmatprep.subr.mxu0 0.0
        %532 = vmatpush1.msra.mxu0 %v495
        %533 = vmatprep.subr.mxu0 0.0
        %534 = vmatpush1.msra.mxu0 %v496
        %535 = vmatprep.subr.mxu0 0.0
        %536 = vmatpush1.msra.mxu0 %v497
        %537 = vmatprep.subr.mxu0 0.0
        %538 = vmatpush1.msra.mxu0 0.0
        %539 = vmatprep.subr.mxu0 0.0
        %540 = vmatpush1.msra.mxu0 0.0
        %541 = vmatprep.subr.mxu0 0.0
        %542 = vmatpush1.msra.mxu0 0.0
        %543 = vmatprep.subr.mxu0 0.0
        %544 = vmatpush1.msra.mxu0 0.0
        %545 = vmatprep.subr.mxu0 0.0
        %546 = vmatpush1.msra.mxu0 0.0
        %547 = vmatprep.subr.mxu0 0.0
        %548 = vmatpush1.msra.mxu0 0.0
        %549 = vmatprep.subr.mxu0 0.0
        %550 = vmatpush1.msra.mxu0 0.0
        %551 = vmatprep.subr.mxu0 0.0
        %552 = vmatpush1.msra.mxu0 0.0
        %553 = vmatprep.subr.mxu0 0.0
        %554 = vmatpush1.msra.mxu0 0.0
        %555 = vmatprep.subr.mxu0 0.0
        %556 = vmatpush1.msra.mxu0 0.0
        %557 = vmatprep.subr.mxu0 0.0
        %558 = vmatpush1.msra.mxu0 0.0
        %559 = vmatprep.subr.mxu0 0.0
        %560 = vmatpush1.msra.mxu0 0.0
        %561 = vmatprep.subr.mxu0 0.0
        %562 = vmatpush1.msra.mxu0 0.0
        %563 = vmatprep.subr.mxu0 0.0
        %564 = vmatpush1.msra.mxu0 0.0
        %565 = vmatprep.subr.mxu0 0.0
        %566 = vmatpush1.msra.mxu0 0.0
        %567 = vmatprep.subr.mxu0 0.0
        %568 = vmatpush1.msra.mxu0 0.0
        %569 = vmatprep.mubr.f32.mxu0 0.0
        %570 = vmatmul.mubr.f32.gmra.mrb[0].mxu0 %v481
        %v571 = vpop.f32.mrb[0].mxu0
        %v572 = vadd.f32 %v503, %v571
        %v573 = vpop.f32.mrb[0].mxu0
        %574 = vdwg.mxu0
        %v575 = vadd.f32 %v572, %v391
        %v576 = vld [vmem:[#allocation11] sm:$0x1]
        %v577 = vld [vmem:[#allocation13] sm:$0x1]
        %v578 = vsel %vm407, %v575, 0.0
        %579 = vadd.xlane.f32.xlu0 %v578
        %v580 = vpop.xlane.xlu0 %579
        %v581 = vrcp.pop 64.0
        %v582 = vmul.f32 %v580, %v581
        %v583 = vsub.f32 %v575, %v582
        %v584 = vmul.f32 %v583, %v583
        %v585 = vsel %vm407, %v584, 0.0
        %586 = vadd.xlane.f32.xlu0 %v585
        %v587 = vpop.xlane.xlu0 %586
        %v588 = vmul.f32 %v587, %v581
        %v589 = vadd.f32 %v588, 1e-05
        %v590 = vrsqrt.pop %v589
        %v591 = vmul.f32 %v583, %v590
        %v593 = vlaneseq
        %v594 = vshrl.u32 %v593, 7
        %v595 = vsub.s32 0, %v594
        %v596 = vrot.slane %v576, %v595
        %v598 = vmul.f32 %v591, %v596
        %v600 = vlaneseq
        %v601 = vshrl.u32 %v600, 7
        %v602 = vsub.s32 0, %v601
        %v603 = vrot.slane %v577, %v602
        %v605 = vadd.f32 %v598, %v603
        %606 = vst.msk [vmem:[%s390] sm:$0xff] %vm407, %v605
        %s607 = sand.u32 %s203, 1
        %s608 = scalar_lea.sflag [#allocation4], %s607
        %s609 = sand.u32 %s203, 1
        %s610 = smul.addr %s609, 8
        %s611 = scalar_lea.vmem [#allocation14], %s610
        // Predicated region
        $region77: #{decoder_layer.5} parent=47 // pred_check
          %p612 = pneg %p213
        $region78: #{decoder_layer.5} parent=47 // pred_check_branch
          %614 = sbr.rel (%p612) target = $region80
        $region79: #{decoder_layer.5} parent=47 // pred_region
          %s616 = ssub.s32 128, 128
          %617 = vsyncadd %s608, %s616
          %s618 = smul.addr %s31, 2
          %s619 = sadd.s32 %s32, %s618
          %s620 = smul.addr %s619, 128
          %s621 = scalar_lea.hbm %s7, %s620
          %s623 = sshll.u32 %s611, 4
          %s624 = int_to_ptr.vmem [resolvable:$true] %s623
          %626 = dma.vmem_to_hbm [thread:$0]  %s624, 128, %s621, %s608
        $region80: #{decoder_layer.5} parent=47 // pred_fallthru
          _
      $region48: #{decoder_layer.5} parent=5 // pred_fallthru
        _
      %p627 = scmp.le.s32.totalorder 2, %s22
      // Predicated region
      $region81: #{decoder_layer.5} parent=5 // pred_check
        %p628 = pneg %p627
      $region82: #{decoder_layer.5} parent=5 // pred_check_branch
        %630 = sbr.rel (%p628) target = $region84
      $region83: #{decoder_layer.5} parent=5 // pred_region
        %s631 = ssub.s32 %s22, 2
        // Predicated region
        $region85: #{decoder_layer.5} parent=83 // pred_check
          %p632 = pneg %p219
        $region86: #{decoder_layer.5} parent=83 // pred_check_branch
          %634 = sbr.rel (%p632) target = $region88
        $region87: #{decoder_layer.5} parent=83 // pred_region
          %s635 = sand.u32 %s204, 1
          %s636 = scalar_lea.sflag [#allocation4], %s635
          %s637 = sand.u32 %s204, 1
          %s638 = smul.addr %s637, 8
          %s639 = scalar_lea.vmem [#allocation14], %s638
          %640 = dma.done %s636, 128
        $region88: #{decoder_layer.5} parent=83 // pred_fallthru
          _
      $region84: #{decoder_layer.5} parent=5 // pred_fallthru
        _
    $region6: #{decoder_layer.5} parent=1 // loop_footer
      %s26 = sadd.s32 1, %s22
    $region7: #{decoder_layer.5} parent=1 // loop_footer_branch
      %21 = sbr.rel target = $region3
    $region8: #{decoder_layer.5} parent=1 // loop_exit
      _
    %641 = vsyncpa [#allocation3], 1
    %s642 = scalar_lea.sflag [#allocation3], 1
    %643 = vsyncpa %s642, 1
    %644 = vsyncpa [#allocation6], 1
    %645 = vsyncpa [#allocation9], 1
    %646 = vsyncpa [#allocation12], 1
    %647 = vsyncpa [#allocation4], 1
    %s648 = scalar_lea.sflag [#allocation4], 1
    %649 = vsyncpa %s648, 1

// kernel: decoder_layer.3
$region0: #{decoder_layer.3}
  #allocation0 [shape = 'u32[]', space=smem, size = 0x4, offset = 0x4, fixed_abs, tag = 'smem constant byte address 0x4 - core index']
  #allocation1 [shape = 'u32[144,128]{1,0:T(1,128)}', space=vmem, size = 0x12000, scoped, tag = 'internal scratch']
  %s0 = inlined_call_operand.hbm [shape: f32[2,16,64], index: 0, kind: input, shape index: {}, may-alias: {0,1}]
  %s1 = inlined_call_operand.hbm [shape: f32[2,16,64], index: 1, kind: input, shape index: {}, may-alias: {0,1}]
  %s2 = inlined_call_operand.hbm [shape: f32[64,64], index: 2, kind: input, shape index: {}]
  %s3 = inlined_call_operand.hbm [shape: f32[1,64], index: 3, kind: input, shape index: {}]
  %s4 = inlined_call_operand.hbm [shape: f32[64,128], index: 4, kind: input, shape index: {}]
  %s5 = inlined_call_operand.hbm [shape: f32[1,128], index: 5, kind: input, shape index: {}]
  %s6 = inlined_call_operand.hbm [shape: f32[64,64], index: 6, kind: input, shape index: {}]
  %s7 = inlined_call_operand.hbm [shape: f32[1,64], index: 7, kind: input, shape index: {}]
  %s8 = inlined_call_operand.hbm [shape: f32[1,64], index: 8, kind: input, shape index: {}]
  %s9 = inlined_call_operand.hbm [shape: f32[1,64], index: 9, kind: input, shape index: {}]
  %s10 = inlined_call_operand.hbm [shape: f32[2,16,64], index: 10, kind: output, shape index: {}]
  %s11 = sld [smem:[#allocation0]]
  $region113: #{decoder_layer.3} parent=0
    _
  %s13 = ssub.s32 1, %s11
  %s14 = scalar_select 0, %s13, %s11
  $region1: #{decoder_layer.3} parent=0
    #allocation2 [shape = 'u8[8192]{0}', space=vmem, size = 0x2000, scoped, tag = 'input window, operand 0']
    #allocation3 [shape = 's32[2]{0}', space=sflag, size = 0x8, scoped, tag = 'scoped memory for decoder_layer.3']
    #allocation4 [shape = 's32[2]{0}', space=sflag, size = 0x8, scoped, tag = 'scoped memory for decoder_layer.3']
    #allocation5 [shape = 'u8[16384]{0}', space=vmem, size = 0x4000, scoped, tag = 'input window, operand 1']
    #allocation6 [shape = 's32[2]{0}', space=sflag, size = 0x8, scoped, tag = 'scoped memory for decoder_layer.3']
    #allocation7 [shape = 'u8[32768]{0}', space=vmem, size = 0x8000, scoped, tag = 'input window, operand 2, single buffered']
    #allocation8 [shape = 'u8[512]{0}', space=vmem, size = 0x400, scoped, tag = 'input window, operand 3, single buffered']
    #allocation9 [shape = 's32[1]{0}', space=sflag, size = 0x4, scoped, tag = 'scoped memory for decoder_layer.3']
    #allocation10 [shape = 'u8[32768]{0}', space=vmem, size = 0x8000, scoped, tag = 'input window, operand 4, single buffered']
    #allocation11 [shape = 'u8[512]{0}', space=vmem, size = 0x400, scoped, tag = 'input window, operand 5, single buffered']
    #allocation12 [shape = 's32[1]{0}', space=sflag, size = 0x4, scoped, tag = 'scoped memory for decoder_layer.3']
    #allocation13 [shape = 'u8[32768]{0}', space=vmem, size = 0x8000, scoped, tag = 'input window, operand 6, single buffered']
    #allocation14 [shape = 'u8[512]{0}', space=vmem, size = 0x400, scoped, tag = 'input window, operand 7, single buffered']
    #allocation15 [shape = 's32[1]{0}', space=sflag, size = 0x4, scoped, tag = 'scoped memory for decoder_layer.3']
    #allocation16 [shape = 'u8[512]{0}', space=vmem, size = 0x400, scoped, tag = 'input window, operand 8, single buffered']
    #allocation17 [shape = 'u8[512]{0}', space=vmem, size = 0x400, scoped, tag = 'input window, operand 9, single buffered']
    #allocation18 [shape = 's32[1]{0}', space=sflag, size = 0x4, scoped, tag = 'scoped memory for decoder_layer.3']
    #allocation19 [shape = 'u8[8192]{0}', space=vmem, size = 0x2000, scoped, tag = 'output window, operand 0']
    %15 = vsyncpa [#allocation3], 0
    %s16 = scalar_lea.sflag [#allocation3], 1
    %17 = vsyncpa %s16, 0
    %18 = vsyncpa [#allocation6], 0
    %s19 = scalar_lea.sflag [#allocation6], 1
    %20 = vsyncpa %s19, 0
    %21 = vsyncpa [#allocation9], 0
    %22 = vsyncpa [#allocation12], 0
    %23 = vsyncpa [#allocation15], 0
    %24 = vsyncpa [#allocation18], 0
    %25 = vsyncpa [#allocation4], 0
    %s26 = scalar_lea.sflag [#allocation4], 1
    %27 = vsyncpa %s26, 0
    loop: start=0, step=1, limit=6
    $region2: #{decoder_layer.3} parent=1 // loop_pre_header
      _
    $region3: #{decoder_layer.3} parent=1 // loop_header
      %s29 = sphi 0, %s33
      %p30 = scmp.ge.s32.totalorder %s29, 6
      %s36 = sphi 0, %s48
      %s37 = sphi 0, %s44
      %s38 = sphi 0, %s36
      %s39 = sphi 0, %s37
      %s40 = sphi 0, %s38
      %s41 = sphi 0, %s39
      %s53 = sphi 0, %s55
      %s56 = sphi 0, %s53
      %s57 = sphi 0, %s56
      %s73 = sphi 0, %s57
      %s79 = sphi 0, %s81
      %s82 = sphi 0, %s79
      %s83 = sphi 0, %s82
      %s99 = sphi 0, %s83
      %s103 = sphi 0, %s103
      %s105 = sphi 0, %s103
      %s106 = sphi 0, %s105
      %s120 = sphi 0, %s106
      %s124 = sphi 0, %s124
      %s126 = sphi 0, %s124
      %s127 = sphi 0, %s126
      %s141 = sphi 0, %s127
      %s145 = sphi 0, %s145
      %s147 = sphi 0, %s145
      %s148 = sphi 0, %s147
      %s162 = sphi 0, %s148
      %s166 = sphi 0, %s166
      %s168 = sphi 0, %s166
      %s169 = sphi 0, %s168
      %s183 = sphi 0, %s169
      %s187 = sphi 0, %s187
      %s189 = sphi 0, %s187
      %s190 = sphi 0, %s189
      %s204 = sphi 0, %s190
      %s208 = sphi 0, %s208
      %s210 = sphi 0, %s208
      %s211 = sphi 0, %s210
      %s225 = sphi 0, %s211
      %s229 = sphi 0, %s229
      %s231 = sphi 0, %s229
      %s232 = sphi 0, %s231
      %s246 = sphi 0, %s232
      %s250 = sphi 0, %s250
      %s252 = sphi 0, %s250
      %s253 = sphi 0, %s252
      %s267 = sphi 0, %s253
      %s275 = sphi 0, %s277
      %s278 = sphi 0, %s275
      %s279 = sphi 0, %s278
      %s295 = sphi 0, %s279
    $region4: #{decoder_layer.3} parent=1 // loop_header_branch
      %32 = sbr.rel (%p30) target = $region8
    $region5: #{decoder_layer.3} parent=1 // loop_body
      %s34 = ssub.s32 %s29, 1
      %s35 = ssub.s32 %s29, 2
      %s42 = sadd.s32 1, %s37
      %p43 = scmp.ge.s32.totalorder %s42, 2
      %s44 = scalar_select %p43, 0, %s42
      %s45 = sadd.s32 1, %s36
      %s46 = scalar_select %p43, %s45, %s36
      %p47 = scmp.ge.s32.totalorder %s46, 2
      %s48 = scalar_select %p47, 0, %s46
      %s49 = ssub.s32 %s36, %s48
      %s50 = ssub.s32 %s37, %s44
      %s51 = sor.u32 %s49, %s50
      %p52 = scmp.eq.s32.totalorder %s51, 0
      %s54 = sadd.s32 %s53, 1
      %s55 = scalar_select %p52, %s53, %s54
      %p58 = pneg %p52
      %p59 = scmp.eq.s32.totalorder %s29, 3
      %p60 = por %p58, %p59
      %p61 = scmp.ne.s32.totalorder %s53, %s56
      %p62 = scmp.eq.s32.totalorder %s29, 0
      %p63 = por %p61, %p62
      %p64 = scmp.ne.s32.totalorder %s53, %s56
      %p65 = scmp.eq.s32.totalorder %s34, 3
      %p66 = por %p64, %p65
      %p67 = scmp.ne.s32.totalorder %s56, %s57
      %p68 = scmp.eq.s32.totalorder %s34, 0
      %p69 = por %p67, %p68
      %p70 = scmp.ne.s32.totalorder %s56, %s57
      %p71 = scmp.eq.s32.totalorder %s35, 3
      %p72 = por %p70, %p71
      %p74 = scmp.ne.s32.totalorder %s57, %s73
      %p75 = scmp.eq.s32.totalorder %s35, 0
      %p76 = por %p74, %p75
      %s77 = ssub.s32 %s36, %s48
      %p78 = scmp.eq.s32.totalorder %s77, 0
      %s80 = sadd.s32 %s79, 1
      %s81 = scalar_select %p78, %s79, %s80
      %p84 = pneg %p78
      %p85 = scmp.eq.s32.totalorder %s29, 3
      %p86 = por %p84, %p85
      %p87 = scmp.ne.s32.totalorder %s79, %s82
      %p88 = scmp.eq.s32.totalorder %s29, 0
      %p89 = por %p87, %p88
      %p90 = scmp.ne.s32.totalorder %s79, %s82
      %p91 = scmp.eq.s32.totalorder %s34, 3
      %p92 = por %p90, %p91
      %p93 = scmp.ne.s32.totalorder %s82, %s83
      %p94 = scmp.eq.s32.totalorder %s34, 0
      %p95 = por %p93, %p94
      %p96 = scmp.ne.s32.totalorder %s82, %s83
      %p97 = scmp.eq.s32.totalorder %s35, 3
      %p98 = por %p96, %p97
      %p100 = scmp.ne.s32.totalorder %s83, %s99
      %p101 = scmp.eq.s32.totalorder %s35, 0
      %p102 = por %p100, %p101
      %s104 = sadd.s32 %s103, 1
      %p107 = scmp.eq.s32.totalorder %s29, 3
      %p108 = scmp.ne.s32.totalorder %s103, %s105
      %p109 = scmp.eq.s32.totalorder %s29, 0
      %p110 = por %p108, %p109
      %p111 = scmp.ne.s32.totalorder %s103, %s105
      %p112 = scmp.eq.s32.totalorder %s34, 3
      %p113 = por %p111, %p112
      %p114 = scmp.ne.s32.totalorder %s105, %s106
      %p115 = scmp.eq.s32.totalorder %s34, 0
      %p116 = por %p114, %p115
      %p117 = scmp.ne.s32.totalorder %s105, %s106
      %p118 = scmp.eq.s32.totalorder %s35, 3
      %p119 = por %p117, %p118
      %p121 = scmp.ne.s32.totalorder %s106, %s120
      %p122 = scmp.eq.s32.totalorder %s35, 0
      %p123 = por %p121, %p122
      %s125 = sadd.s32 %s124, 1
      %p128 = scmp.eq.s32.totalorder %s29, 3
      %p129 = scmp.ne.s32.totalorder %s124, %s126
      %p130 = scmp.eq.s32.totalorder %s29, 0
      %p131 = por %p129, %p130
      %p132 = scmp.ne.s32.totalorder %s124, %s126
      %p133 = scmp.eq.s32.totalorder %s34, 3
      %p134 = por %p132, %p133
      %p135 = scmp.ne.s32.totalorder %s126, %s127
      %p136 = scmp.eq.s32.totalorder %s34, 0
      %p137 = por %p135, %p136
      %p138 = scmp.ne.s32.totalorder %s126, %s127
      %p139 = scmp.eq.s32.totalorder %s35, 3
      %p140 = por %p138, %p139
      %p142 = scmp.ne.s32.totalorder %s127, %s141
      %p143 = scmp.eq.s32.totalorder %s35, 0
      %p144 = por %p142, %p143
      %s146 = sadd.s32 %s145, 1
      %p149 = scmp.eq.s32.totalorder %s29, 3
      %p150 = scmp.ne.s32.totalorder %s145, %s147
      %p151 = scmp.eq.s32.totalorder %s29, 0
      %p152 = por %p150, %p151
      %p153 = scmp.ne.s32.totalorder %s145, %s147
      %p154 = scmp.eq.s32.totalorder %s34, 3
      %p155 = por %p153, %p154
      %p156 = scmp.ne.s32.totalorder %s147, %s148
      %p157 = scmp.eq.s32.totalorder %s34, 0
      %p158 = por %p156, %p157
      %p159 = scmp.ne.s32.totalorder %s147, %s148
      %p160 = scmp.eq.s32.totalorder %s35, 3
      %p161 = por %p159, %p160
      %p163 = scmp.ne.s32.totalorder %s148, %s162
      %p164 = scmp.eq.s32.totalorder %s35, 0
      %p165 = por %p163, %p164
      %s167 = sadd.s32 %s166, 1
      %p170 = scmp.eq.s32.totalorder %s29, 3
      %p171 = scmp.ne.s32.totalorder %s166, %s168
      %p172 = scmp.eq.s32.totalorder %s29, 0
      %p173 = por %p171, %p172
      %p174 = scmp.ne.s32.totalorder %s166, %s168
      %p175 = scmp.eq.s32.totalorder %s34, 3
      %p176 = por %p174, %p175
      %p177 = scmp.ne.s32.totalorder %s168, %s169
      %p178 = scmp.eq.s32.totalorder %s34, 0
      %p179 = por %p177, %p178
      %p180 = scmp.ne.s32.totalorder %s168, %s169
      %p181 = scmp.eq.s32.totalorder %s35, 3
      %p182 = por %p180, %p181
      %p184 = scmp.ne.s32.totalorder %s169, %s183
      %p185 = scmp.eq.s32.totalorder %s35, 0
      %p186 = por %p184, %p185
      %s188 = sadd.s32 %s187, 1
      %p191 = scmp.eq.s32.totalorder %s29, 3
      %p192 = scmp.ne.s32.totalorder %s187, %s189
      %p193 = scmp.eq.s32.totalorder %s29, 0
      %p194 = por %p192, %p193
      %p195 = scmp.ne.s32.totalorder %s187, %s189
      %p196 = scmp.eq.s32.totalorder %s34, 3
      %p197 = por %p195, %p196
      %p198 = scmp.ne.s32.totalorder %s189, %s190
      %p199 = scmp.eq.s32.totalorder %s34, 0
      %p200 = por %p198, %p199
      %p201 = scmp.ne.s32.totalorder %s189, %s190
      %p202 = scmp.eq.s32.totalorder %s35, 3
      %p203 = por %p201, %p202
      %p205 = scmp.ne.s32.totalorder %s190, %s204
      %p206 = scmp.eq.s32.totalorder %s35, 0
      %p207 = por %p205, %p206
      %s209 = sadd.s32 %s208, 1
      %p212 = scmp.eq.s32.totalorder %s29, 3
      %p213 = scmp.ne.s32.totalorder %s208, %s210
      %p214 = scmp.eq.s32.totalorder %s29, 0
      %p215 = por %p213, %p214
      %p216 = scmp.ne.s32.totalorder %s208, %s210
      %p217 = scmp.eq.s32.totalorder %s34, 3
      %p218 = por %p216, %p217
      %p219 = scmp.ne.s32.totalorder %s210, %s211
      %p220 = scmp.eq.s32.totalorder %s34, 0
      %p221 = por %p219, %p220
      %p222 = scmp.ne.s32.totalorder %s210, %s211
      %p223 = scmp.eq.s32.totalorder %s35, 3
      %p224 = por %p222, %p223
      %p226 = scmp.ne.s32.totalorder %s211, %s225
      %p227 = scmp.eq.s32.totalorder %s35, 0
      %p228 = por %p226, %p227
      %s230 = sadd.s32 %s229, 1
      %p233 = scmp.eq.s32.totalorder %s29, 3
      %p234 = scmp.ne.s32.totalorder %s229, %s231
      %p235 = scmp.eq.s32.totalorder %s29, 0
      %p236 = por %p234, %p235
      %p237 = scmp.ne.s32.totalorder %s229, %s231
      %p238 = scmp.eq.s32.totalorder %s34, 3
      %p239 = por %p237, %p238
      %p240 = scmp.ne.s32.totalorder %s231, %s232
      %p241 = scmp.eq.s32.totalorder %s34, 0
      %p242 = por %p240, %p241
      %p243 = scmp.ne.s32.totalorder %s231, %s232
      %p244 = scmp.eq.s32.totalorder %s35, 3
      %p245 = por %p243, %p244
      %p247 = scmp.ne.s32.totalorder %s232, %s246
      %p248 = scmp.eq.s32.totalorder %s35, 0
      %p249 = por %p247, %p248
      %s251 = sadd.s32 %s250, 1
      %p254 = scmp.eq.s32.totalorder %s29, 3
      %p255 = scmp.ne.s32.totalorder %s250, %s252
      %p256 = scmp.eq.s32.totalorder %s29, 0
      %p257 = por %p255, %p256
      %p258 = scmp.ne.s32.totalorder %s250, %s252
      %p259 = scmp.eq.s32.totalorder %s34, 3
      %p260 = por %p258, %p259
      %p261 = scmp.ne.s32.totalorder %s252, %s253
      %p262 = scmp.eq.s32.totalorder %s34, 0
      %p263 = por %p261, %p262
      %p264 = scmp.ne.s32.totalorder %s252, %s253
      %p265 = scmp.eq.s32.totalorder %s35, 3
      %p266 = por %p264, %p265
      %p268 = scmp.ne.s32.totalorder %s253, %s267
      %p269 = scmp.eq.s32.totalorder %s35, 0
      %p270 = por %p268, %p269
      %s271 = ssub.s32 %s36, %s48
      %s272 = ssub.s32 %s37, %s44
      %s273 = sor.u32 %s271, %s272
      %p274 = scmp.eq.s32.totalorder %s273, 0
      %s276 = sadd.s32 %s275, 1
      %s277 = scalar_select %p274, %s275, %s276
      %p280 = pneg %p274
      %p281 = scmp.eq.s32.totalorder %s29, 3
      %p282 = por %p280, %p281
      %p283 = scmp.ne.s32.totalorder %s275, %s278
      %p284 = scmp.eq.s32.totalorder %s29, 0
      %p285 = por %p283, %p284
      %p286 = scmp.ne.s32.totalorder %s275, %s278
      %p287 = scmp.eq.s32.totalorder %s34, 3
      %p288 = por %p286, %p287
      %p289 = scmp.ne.s32.totalorder %s278, %s279
      %p290 = scmp.eq.s32.totalorder %s34, 0
      %p291 = por %p289, %p290
      %p292 = scmp.ne.s32.totalorder %s278, %s279
      %p293 = scmp.eq.s32.totalorder %s35, 3
      %p294 = por %p292, %p293
      %p296 = scmp.ne.s32.totalorder %s279, %s295
      %p297 = scmp.eq.s32.totalorder %s35, 0
      %p298 = por %p296, %p297
      %p299 = scmp.le.s32.totalorder 1, %s29
      %p300 = scmp.lt.s32.totalorder %s29, 5
      %p301 = pnand %p299, %p300
      %p302 = pneg %p301
      // Predicated region
      $region9: #{decoder_layer.3} parent=5 // pred_check
        _
      $region10: #{decoder_layer.3} parent=5 // pred_check_branch
        %304 = sbr.rel (%p301) target = $region12
      $region11: #{decoder_layer.3} parent=5 // pred_region
        %s305 = ssub.s32 %s29, 1
        // Predicated region
        $region13: #{decoder_layer.3} parent=11 // pred_check
          %p306 = pneg %p116
        $region14: #{decoder_layer.3} parent=11 // pred_check_branch
          %308 = sbr.rel (%p306) target = $region16
        $region15: #{decoder_layer.3} parent=11 // pred_region
          %s310 = ssub.s32 1024, 1024
          %311 = vsyncadd [#allocation6], %s310
          %s312 = sshll.u32 [#allocation7], 4
          %s313 = int_to_ptr.vmem [resolvable:$true] %s312
          %318 = dma.hbm_to_vmem [thread:$0]  %s2, 1024, %s313, [#allocation6], 128, 128, 8
        $region16: #{decoder_layer.3} parent=11 // pred_fallthru
          _
        // Predicated region
        $region17: #{decoder_layer.3} parent=11 // pred_check
          %p319 = pneg %p137
        $region18: #{decoder_layer.3} parent=11 // pred_check_branch
          %321 = sbr.rel (%p319) target = $region20
        $region19: #{decoder_layer.3} parent=11 // pred_region
          %s323 = ssub.s32 16, 16
          %324 = vsyncadd [#allocation9], %s323
          %s326 = sshll.u32 [#allocation8], 4
          %s327 = int_to_ptr.vmem [resolvable:$true] %s326
          %329 = dma.hbm_to_vmem [thread:$0]  %s3, 16, %s327, [#allocation9]
        $region20: #{decoder_layer.3} parent=11 // pred_fallthru
          _
        // Predicated region
        $region21: #{decoder_layer.3} parent=11 // pred_check
          %p330 = pneg %p158
        $region22: #{decoder_layer.3} parent=11 // pred_check_branch
          %332 = sbr.rel (%p330) target = $region24
        $region23: #{decoder_layer.3} parent=11 // pred_region
          %s334 = ssub.s32 1024, 1024
          %335 = vsyncadd [#allocation9], %s334
          %s336 = sshll.u32 [#allocation10], 4
          %s337 = int_to_ptr.vmem [resolvable:$true] %s336
          %342 = dma.hbm_to_vmem [thread:$0]  %s4, 1024, %s337, [#allocation9], 128, 128, 8
        $region24: #{decoder_layer.3} parent=11 // pred_fallthru
          _
        // Predicated region
        $region25: #{decoder_layer.3} parent=11 // pred_check
          %p343 = pneg %p179
        $region26: #{decoder_layer.3} parent=11 // pred_check_branch
          %345 = sbr.rel (%p343) target = $region28
        $region27: #{decoder_layer.3} parent=11 // pred_region
          %s347 = ssub.s32 16, 16
          %348 = vsyncadd [#allocation12], %s347
          %s350 = sshll.u32 [#allocation11], 4
          %s351 = int_to_ptr.vmem [resolvable:$true] %s350
          %353 = dma.hbm_to_vmem [thread:$0]  %s5, 16, %s351, [#allocation12]
        $region28: #{decoder_layer.3} parent=11 // pred_fallthru
          _
        // Predicated region
        $region29: #{decoder_layer.3} parent=11 // pred_check
          %p354 = pneg %p200
        $region30: #{decoder_layer.3} parent=11 // pred_check_branch
          %356 = sbr.rel (%p354) target = $region32
        $region31: #{decoder_layer.3} parent=11 // pred_region
          %s358 = ssub.s32 1024, 1024
          %359 = vsyncadd [#allocation12], %s358
          %s360 = sshll.u32 [#allocation13], 4
          %s361 = int_to_ptr.vmem [resolvable:$true] %s360
          %366 = dma.hbm_to_vmem [thread:$0]  %s6, 1024, %s361, [#allocation12], 128, 128, 8
        $region32: #{decoder_layer.3} parent=11 // pred_fallthru
          _
        // Predicated region
        $region33: #{decoder_layer.3} parent=11 // pred_check
          %p367 = pneg %p221
        $region34: #{decoder_layer.3} parent=11 // pred_check_branch
          %369 = sbr.rel (%p367) target = $region36
        $region35: #{decoder_layer.3} parent=11 // pred_region
          %s371 = ssub.s32 16, 16
          %372 = vsyncadd [#allocation15], %s371
          %s374 = sshll.u32 [#allocation14], 4
          %s375 = int_to_ptr.vmem [resolvable:$true] %s374
          %377 = dma.hbm_to_vmem [thread:$0]  %s7, 16, %s375, [#allocation15]
        $region36: #{decoder_layer.3} parent=11 // pred_fallthru
          _
        // Predicated region
        $region37: #{decoder_layer.3} parent=11 // pred_check
          %p378 = pneg %p242
        $region38: #{decoder_layer.3} parent=11 // pred_check_branch
          %380 = sbr.rel (%p378) target = $region40
        $region39: #{decoder_layer.3} parent=11 // pred_region
          %s382 = ssub.s32 16, 16
          %383 = vsyncadd [#allocation15], %s382
          %s385 = sshll.u32 [#allocation16], 4
          %s386 = int_to_ptr.vmem [resolvable:$true] %s385
          %388 = dma.hbm_to_vmem [thread:$0]  %s8, 16, %s386, [#allocation15]
        $region40: #{decoder_layer.3} parent=11 // pred_fallthru
          _
        // Predicated region
        $region41: #{decoder_layer.3} parent=11 // pred_check
          %p389 = pneg %p263
        $region42: #{decoder_layer.3} parent=11 // pred_check_branch
          %391 = sbr.rel (%p389) target = $region44
        $region43: #{decoder_layer.3} parent=11 // pred_region
          %s393 = ssub.s32 16, 16
          %394 = vsyncadd [#allocation18], %s393
          %s396 = sshll.u32 [#allocation17], 4
          %s397 = int_to_ptr.vmem [resolvable:$true] %s396
          %399 = dma.hbm_to_vmem [thread:$0]  %s9, 16, %s397, [#allocation18]
        $region44: #{decoder_layer.3} parent=11 // pred_fallthru
          _
      $region12: #{decoder_layer.3} parent=5 // pred_fallthru
        _
      %p400 = scmp.lt.s32.totalorder %s29, 4
      // Predicated region
      $region45: #{decoder_layer.3} parent=5 // pred_check
        %p401 = pneg %p400
      $region46: #{decoder_layer.3} parent=5 // pred_check_branch
        %403 = sbr.rel (%p401) target = $region48
      $region47: #{decoder_layer.3} parent=5 // pred_region
        // Predicated region
        $region49: #{decoder_layer.3} parent=47 // pred_check
          %p404 = pneg %p63
        $region50: #{decoder_layer.3} parent=47 // pred_check_branch
          %406 = sbr.rel (%p404) target = $region52
        $region51: #{decoder_layer.3} parent=47 // pred_region
          %s407 = sand.u32 %s53, 1
          %s408 = scalar_lea.sflag [#allocation3], %s407
          %s409 = sand.u32 %s53, 1
          %s410 = smul.addr %s409, 8
          %s411 = scalar_lea.vmem [#allocation2], %s410
          %s413 = ssub.s32 128, 128
          %414 = vsyncadd %s408, %s413
          %s415 = smul.addr %s36, 2
          %s416 = sadd.s32 %s37, %s415
          %s417 = smul.addr %s416, 128
          %s418 = scalar_lea.hbm %s0, %s417
          %s420 = sshll.u32 %s411, 4
          %s421 = int_to_ptr.vmem [resolvable:$true] %s420
          %423 = dma.hbm_to_vmem [thread:$0]  %s418, 128, %s421, %s408
        $region52: #{decoder_layer.3} parent=47 // pred_fallthru
          _
        // Predicated region
        $region53: #{decoder_layer.3} parent=47 // pred_check
          %p424 = pneg %p89
        $region54: #{decoder_layer.3} parent=47 // pred_check_branch
          %426 = sbr.rel (%p424) target = $region56
        $region55: #{decoder_layer.3} parent=47 // pred_region
          %s427 = sand.u32 %s29, 1
          %s428 = scalar_lea.sflag [#allocation6], %s427
          %s429 = sand.u32 %s79, 1
          %s430 = smul.addr %s429, 16
          %s431 = scalar_lea.vmem [#allocation5], %s430
          %s433 = ssub.s32 256, 256
          %434 = vsyncadd %s428, %s433
          %s435 = smul.addr %s36, 2
          %s436 = smul.addr %s435, 128
          %s437 = scalar_lea.hbm %s1, %s436
          %s438 = sshll.u32 %s431, 4
          %s439 = int_to_ptr.vmem [resolvable:$true] %s438
          %444 = dma.hbm_to_vmem [thread:$0]  %s437, 256, %s439, %s428, 128, 128, 8
        $region56: #{decoder_layer.3} parent=47 // pred_fallthru
          _
      $region48: #{decoder_layer.3} parent=5 // pred_fallthru
        _
      %p445 = scmp.le.s32.totalorder 1, %s29
      %p446 = scmp.lt.s32.totalorder %s29, 5
      %p447 = pnand %p445, %p446
      %p448 = pneg %p447
      // Predicated region
      $region57: #{decoder_layer.3} parent=5 // pred_check
        _
      $region58: #{decoder_layer.3} parent=5 // pred_check_branch
        %450 = sbr.rel (%p447) target = $region60
      $region59: #{decoder_layer.3} parent=5 // pred_region
        %s451 = ssub.s32 %s29, 1
        %s452 = sand.u32 %s56, 1
        %s453 = scalar_lea.sflag [#allocation3], %s452
        %s454 = sand.u32 %s56, 1
        %s455 = smul.addr %s454, 8
        %s456 = scalar_lea.vmem [#allocation2], %s455
        // Predicated region
        $region61: #{decoder_layer.3} parent=59 // pred_check
          %p457 = pneg %p69
        $region62: #{decoder_layer.3} parent=59 // pred_check_branch
          %459 = sbr.rel (%p457) target = $region64
        $region63: #{decoder_layer.3} parent=59 // pred_region
          %460 = dma.done %s453, 128
        $region64: #{decoder_layer.3} parent=59 // pred_fallthru
          _
        %s461 = sand.u32 %s34, 1
        %s462 = scalar_lea.sflag [#allocation6], %s461
        %s463 = sand.u32 %s82, 1
        %s464 = smul.addr %s463, 16
        %s465 = scalar_lea.vmem [#allocation5], %s464
        // Predicated region
        $region65: #{decoder_layer.3} parent=59 // pred_check
          %p466 = pneg %p95
        $region66: #{decoder_layer.3} parent=59 // pred_check_branch
          %468 = sbr.rel (%p466) target = $region68
        $region67: #{decoder_layer.3} parent=59 // pred_region
          %469 = dma.done %s462, 256
        $region68: #{decoder_layer.3} parent=59 // pred_fallthru
          _
        // Predicated region
        $region69: #{decoder_layer.3} parent=59 // pred_check
          %p470 = pneg %p116
        $region70: #{decoder_layer.3} parent=59 // pred_check_branch
          %472 = sbr.rel (%p470) target = $region72
        $region71: #{decoder_layer.3} parent=59 // pred_region
          %473 = dma.done [#allocation6], 1024
        $region72: #{decoder_layer.3} parent=59 // pred_fallthru
          _
        // Predicated region
        $region73: #{decoder_layer.3} parent=59 // pred_check
          %p474 = pneg %p137
        $region74: #{decoder_layer.3} parent=59 // pred_check_branch
          %476 = sbr.rel (%p474) target = $region76
        $region75: #{decoder_layer.3} parent=59 // pred_region
          %477 = dma.done [#allocation9], 16
        $region76: #{decoder_layer.3} parent=59 // pred_fallthru
          _
        // Predicated region
        $region77: #{decoder_layer.3} parent=59 // pred_check
          %p478 = pneg %p158
        $region78: #{decoder_layer.3} parent=59 // pred_check_branch
          %480 = sbr.rel (%p478) target = $region80
        $region79: #{decoder_layer.3} parent=59 // pred_region
          %481 = dma.done [#allocation9], 1024
        $region80: #{decoder_layer.3} parent=59 // pred_fallthru
          _
        // Predicated region
        $region81: #{decoder_layer.3} parent=59 // pred_check
          %p482 = pneg %p179
        $region82: #{decoder_layer.3} parent=59 // pred_check_branch
          %484 = sbr.rel (%p482) target = $region84
        $region83: #{decoder_layer.3} parent=59 // pred_region
          %485 = dma.done [#allocation12], 16
        $region84: #{decoder_layer.3} parent=59 // pred_fallthru
          _
        // Predicated region
        $region85: #{decoder_layer.3} parent=59 // pred_check
          %p486 = pneg %p200
        $region86: #{decoder_layer.3} parent=59 // pred_check_branch
          %488 = sbr.rel (%p486) target = $region88
        $region87: #{decoder_layer.3} parent=59 // pred_region
          %489 = dma.done [#allocation12], 1024
        $region88: #{decoder_layer.3} parent=59 // pred_fallthru
          _
        // Predicated region
        $region89: #{decoder_layer.3} parent=59 // pred_check
          %p490 = pneg %p221
        $region90: #{decoder_layer.3} parent=59 // pred_check_branch
          %492 = sbr.rel (%p490) target = $region92
        $region91: #{decoder_layer.3} parent=59 // pred_region
          %493 = dma.done [#allocation15], 16
        $region92: #{decoder_layer.3} parent=59 // pred_fallthru
          _
        // Predicated region
        $region93: #{decoder_layer.3} parent=59 // pred_check
          %p494 = pneg %p242
        $region94: #{decoder_layer.3} parent=59 // pred_check_branch
          %496 = sbr.rel (%p494) target = $region96
        $region95: #{decoder_layer.3} parent=59 // pred_region
          %497 = dma.done [#allocation15], 16
        $region96: #{decoder_layer.3} parent=59 // pred_fallthru
          _
        // Predicated region
        $region97: #{decoder_layer.3} parent=59 // pred_check
          %p498 = pneg %p263
        $region98: #{decoder_layer.3} parent=59 // pred_check_branch
          %500 = sbr.rel (%p498) target = $region100
        $region99: #{decoder_layer.3} parent=59 // pred_region
          %501 = dma.done [#allocation18], 16
        $region100: #{decoder_layer.3} parent=59 // pred_fallthru
          _
        %s502 = sand.u32 %s56, 1
        %s503 = scalar_lea.sflag [#allocation3], %s502
        %s504 = sand.u32 %s56, 1
        %s505 = smul.addr %s504, 8
        %s506 = scalar_lea.vmem [#allocation2], %s505
        %p507 = pneg %p69
        %p508 = pneg %p66
        %s509 = sand.u32 %s34, 1
        %s510 = scalar_lea.sflag [#allocation6], %s509
        %s511 = sand.u32 %s82, 1
        %s512 = smul.addr %s511, 16
        %s513 = scalar_lea.vmem [#allocation5], %s512
        %p514 = pneg %p95
        %p515 = pneg %p92
        %p516 = pneg %p116
        %p517 = pneg %p113
        %p518 = pneg %p137
        %p519 = pneg %p134
        %p520 = pneg %p158
        %p521 = pneg %p155
        %p522 = pneg %p179
        %p523 = pneg %p176
        %p524 = pneg %p200
        %p525 = pneg %p197
        %p526 = pneg %p221
        %p527 = pneg %p218
        %p528 = pneg %p242
        %p529 = pneg %p239
        %p530 = pneg %p263
        %p531 = pneg %p260
        %p532 = pneg %p291
        %p533 = pneg %p288
        %s534 = sand.u32 %s278, 1
        %s535 = scalar_lea.sflag [#allocation4], %s534
        %s536 = sand.u32 %s278, 1
        %s537 = smul.addr %s536, 8
        %s538 = scalar_lea.vmem [#allocation19], %s537
        %v539 = vld [vmem:[%s456] sm:$0xff]
        %v540 = vld [vmem:[%s465] sm:$0xff]
        %v541 = vld [vmem:[%s465 + $0x8] sm:$0xff]
        %v542 = vld [vmem:[#allocation7] sm:$0xff]
        %v543 = vld [vmem:[#allocation7 + $0x8] sm:$0xff]
        %v544 = vld [vmem:[#allocation7 + $0x10] sm:$0xff]
        %v545 = vld [vmem:[#allocation7 + $0x18] sm:$0xff]
        %v546 = vld [vmem:[#allocation7 + $0x20] sm:$0xff]
        %v547 = vld [vmem:[#allocation7 + $0x28] sm:$0xff]
        %v548 = vld [vmem:[#allocation7 + $0x30] sm:$0xff]
        %v549 = vld [vmem:[#allocation7 + $0x38] sm:$0xff]
        %v550 = vld [vmem:[#allocation8] sm:$0x1]
        %v552 = vlaneseq
        %v553 = vshrl.u32 %v552, 7
        %v554 = vsub.s32 0, %v553
        %v555 = vrot.slane %v550, %v554
        %vm557 = vcmask 523264
        %v559 = vsel %vm557, %v539, 0
        %561 = vmatprep.subr.mxu0 0.0
        %562 = vmatpush1.msra.mxu0 %v542
        %563 = vmatprep.subr.mxu0 0.0
        %564 = vmatpush1.msra.mxu0 %v543
        %565 = vmatprep.subr.mxu0 0.0
        %566 = vmatpush1.msra.mxu0 %v544
        %567 = vmatprep.subr.mxu0 0.0
        %568 = vmatpush1.msra.mxu0 %v545
        %569 = vmatprep.subr.mxu0 0.0
        %570 = vmatpush1.msra.mxu0 %v546
        %571 = vmatprep.subr.mxu0 0.0
        %572 = vmatpush1.msra.mxu0 %v547
        %573 = vmatprep.subr.mxu0 0.0
        %574 = vmatpush1.msra.mxu0 %v548
        %575 = vmatprep.subr.mxu0 0.0
        %576 = vmatpush1.msra.mxu0 %v549
        %577 = vmatprep.subr.mxu0 0.0
        %578 = vmatpush1.msra.mxu0 0.0
        %579 = vmatprep.subr.mxu0 0.0
        %580 = vmatpush1.msra.mxu0 0.0
        %581 = vmatprep.subr.mxu0 0.0
        %582 = vmatpush1.msra.mxu0 0.0
        %583 = vmatprep.subr.mxu0 0.0
        %584 = vmatpush1.msra.mxu0 0.0
        %585 = vmatprep.subr.mxu0 0.0
        %586 = vmatpush1.msra.mxu0 0.0
        %587 = vmatprep.subr.mxu0 0.0
        %588 = vmatpush1.msra.mxu0 0.0
        %589 = vmatprep.subr.mxu0 0.0
        %590 = vmatpush1.msra.mxu0 0.0
        %591 = vmatprep.subr.mxu0 0.0
        %592 = vmatpush1.msra.mxu0 0.0
        %593 = vmatprep.subr.mxu0 0.0
        %594 = vmatpush1.msra.mxu0 0.0
        %595 = vmatprep.subr.mxu0 0.0
        %596 = vmatpush1.msra.mxu0 0.0
        %597 = vmatprep.subr.mxu0 0.0
        %598 = vmatpush1.msra.mxu0 0.0
        %599 = vmatprep.subr.mxu0 0.0
        %600 = vmatpush1.msra.mxu0 0.0
        %601 = vmatprep.subr.mxu0 0.0
        %602 = vmatpush1.msra.mxu0 0.0
        %603 = vmatprep.subr.mxu0 0.0
        %604 = vmatpush1.msra.mxu0 0.0
        %605 = vmatprep.subr.mxu0 0.0
        %606 = vmatpush1.msra.mxu0 0.0
        %607 = vmatprep.subr.mxu0 0.0
        %608 = vmatpush1.msra.mxu0 0.0
        %609 = vmatprep.subr.mxu0 0.0
        %610 = vmatpush1.msra.mxu0 0.0
        %611 = vmatprep.subr.mxu0 0.0
        %612 = vmatpush1.msra.mxu0 0.0
        %613 = vmatprep.subr.mxu0 0.0
        %614 = vmatpush1.msra.mxu0 0.0
        %615 = vmatprep.subr.mxu0 0.0
        %616 = vmatpush1.msra.mxu0 0.0
        %617 = vmatprep.subr.mxu0 0.0
        %618 = vmatpush1.msra.mxu0 0.0
        %619 = vmatprep.subr.mxu0 0.0
        %620 = vmatpush1.msra.mxu0 0.0
        %621 = vmatprep.subr.mxu0 0.0
        %622 = vmatpush1.msra.mxu0 0.0
        %623 = vmatprep.subr.mxu0 0.0
        %624 = vmatpush1.msra.mxu0 0.0
        %625 = vmatprep.mubr.f32.mxu0 0.0
        %626 = vmatmul.mubr.f32.gmra.mrb[0].mxu0 %v559
        %v627 = vpop.f32.mrb[0].mxu0
        %v628 = vadd.f32 %v555, %v627
        %v629 = vpop.f32.mrb[0].mxu0
        %630 = vdwg.mxu0
        %v631 = vld [vmem:[#allocation10] sm:$0xff]
        %v632 = vld [vmem:[#allocation10 + $0x8] sm:$0xff]
        %v633 = vld [vmem:[#allocation10 + $0x10] sm:$0xff]
        %v634 = vld [vmem:[#allocation10 + $0x18] sm:$0xff]
        %v635 = vld [vmem:[#allocation10 + $0x20] sm:$0xff]
        %v636 = vld [vmem:[#allocation10 + $0x28] sm:$0xff]
        %v637 = vld [vmem:[#allocation10 + $0x30] sm:$0xff]
        %v638 = vld [vmem:[#allocation10 + $0x38] sm:$0xff]
        %v639 = vld [vmem:[#allocation11] sm:$0x1]
        %v641 = vlaneseq
        %v642 = vshrl.u32 %v641, 7
        %v643 = vsub.s32 0, %v642
        %v644 = vrot.slane %v639, %v643
        %v647 = vsel %vm557, %v540, 0
        %v650 = vsel %vm557, %v541, 0
        %652 = vmatprep.subr.mxu0 0.0
        %653 = vmatpush1.msra.mxu0 %v631
        %654 = vmatprep.subr.mxu0 0.0
        %655 = vmatpush1.msra.mxu0 %v632
        %656 = vmatprep.subr.mxu0 0.0
        %657 = vmatpush1.msra.mxu0 %v633
        %658 = vmatprep.subr.mxu0 0.0
        %659 = vmatpush1.msra.mxu0 %v634
        %660 = vmatprep.subr.mxu0 0.0
        %661 = vmatpush1.msra.mxu0 %v635
        %662 = vmatprep.subr.mxu0 0.0
        %663 = vmatpush1.msra.mxu0 %v636
        %664 = vmatprep.subr.mxu0 0.0
        %665 = vmatpush1.msra.mxu0 %v637
        %666 = vmatprep.subr.mxu0 0.0
        %667 = vmatpush1.msra.mxu0 %v638
        %668 = vmatprep.subr.mxu0 0.0
        %669 = vmatpush1.msra.mxu0 0.0
        %670 = vmatprep.subr.mxu0 0.0
        %671 = vmatpush1.msra.mxu0 0.0
        %672 = vmatprep.subr.mxu0 0.0
        %673 = vmatpush1.msra.mxu0 0.0
        %674 = vmatprep.subr.mxu0 0.0
        %675 = vmatpush1.msra.mxu0 0.0
        %676 = vmatprep.subr.mxu0 0.0
        %677 = vmatpush1.msra.mxu0 0.0
        %678 = vmatprep.subr.mxu0 0.0
        %679 = vmatpush1.msra.mxu0 0.0
        %680 = vmatprep.subr.mxu0 0.0
        %681 = vmatpush1.msra.mxu0 0.0
        %682 = vmatprep.subr.mxu0 0.0
        %683 = vmatpush1.msra.mxu0 0.0
        %684 = vmatprep.subr.mxu0 0.0
        %685 = vmatpush1.msra.mxu0 0.0
        %686 = vmatprep.subr.mxu0 0.0
        %687 = vmatpush1.msra.mxu0 0.0
        %688 = vmatprep.subr.mxu0 0.0
        %689 = vmatpush1.msra.mxu0 0.0
        %690 = vmatprep.subr.mxu0 0.0
        %691 = vmatpush1.msra.mxu0 0.0
        %692 = vmatprep.subr.mxu0 0.0
        %693 = vmatpush1.msra.mxu0 0.0
        %694 = vmatprep.subr.mxu0 0.0
        %695 = vmatpush1.msra.mxu0 0.0
        %696 = vmatprep.subr.mxu0 0.0
        %697 = vmatpush1.msra.mxu0 0.0
        %698 = vmatprep.subr.mxu0 0.0
        %699 = vmatpush1.msra.mxu0 0.0
        %700 = vmatprep.subr.mxu0 0.0
        %701 = vmatpush1.msra.mxu0 0.0
        %702 = vmatprep.subr.mxu0 0.0
        %703 = vmatpush1.msra.mxu0 0.0
        %704 = vmatprep.subr.mxu0 0.0
        %705 = vmatpush1.msra.mxu0 0.0
        %706 = vmatprep.subr.mxu0 0.0
        %707 = vmatpush1.msra.mxu0 0.0
        %708 = vmatprep.subr.mxu0 0.0
        %709 = vmatpush1.msra.mxu0 0.0
        %710 = vmatprep.subr.mxu0 0.0
        %711 = vmatpush1.msra.mxu0 0.0
        %712 = vmatprep.subr.mxu0 0.0
        %713 = vmatpush1.msra.mxu0 0.0
        %714 = vmatprep.subr.mxu0 0.0
        %715 = vmatpush1.msra.mxu0 0.0
        %716 = vmatprep.mubr.f32.mxu0 0.0
        %717 = vmatmul.mubr.f32.gmra.mrb[0].mxu0 %v647
        %v718 = vpop.f32.mrb[0].mxu0
        %v719 = vadd.f32 %v644, %v718
        %v720 = vpop.f32.mrb[0].mxu0
        %721 = vmatprep.mubr.f32.mxu0 0.0
        %722 = vmatmul.mubr.f32.gmra.mrb[0].mxu0 %v650
        %v723 = vpop.f32.mrb[0].mxu0
        %v724 = vadd.f32 %v644, %v723
        %v725 = vpop.f32.mrb[0].mxu0
        %726 = vdwg.mxu0
        %v727 = vmul.f32 %v628, 0.25
        %729 = vrot.lane.b32.xlu0 %v727, 112
        %v730 = vpop.permute.xlu0 %729
        %731 = vrot.lane.b32.xlu0 %v727, 96
        %v732 = vpop.permute.xlu0 %731
        %733 = vrot.lane.b32.xlu0 %v727, 80
        %v734 = vpop.permute.xlu0 %733
        %737 = vrot.lane.b32.xlu0 %v719, 112
        %v738 = vpop.permute.xlu0 %737
        %739 = vrot.lane.b32.xlu0 %v724, 112
        %v740 = vpop.permute.xlu0 %739
        %743 = vrot.lane.b32.xlu0 %v719, 96
        %v744 = vpop.permute.xlu0 %743
        %745 = vrot.lane.b32.xlu0 %v724, 96
        %v746 = vpop.permute.xlu0 %745
        %749 = vrot.lane.b32.xlu0 %v719, 80
        %v750 = vpop.permute.xlu0 %749
        %751 = vrot.lane.b32.xlu0 %v724, 80
        %v752 = vpop.permute.xlu0 %751
        %755 = vxpose.xlu0.b32.start [1/16] %v719, 128
        %756 = vxpose.xlu0.b32.cont [2/16] %v724, 128
        %757 = vxpose.xlu0.b32.cont [3/16] 0.0, 128
        %758 = vxpose.xlu0.b32.cont [4/16] 0.0, 128
        %759 = vxpose.xlu0.b32.cont [5/16] 0.0, 128
        %760 = vxpose.xlu0.b32.cont [6/16] 0.0, 128
        %761 = vxpose.xlu0.b32.cont [7/16] 0.0, 128
        %762 = vxpose.xlu0.b32.cont [8/16] 0.0, 128
        %763 = vxpose.xlu0.b32.cont [9/16] 0.0, 128
        %764 = vxpose.xlu0.b32.cont [10/16] 0.0, 128
        %765 = vxpose.xlu0.b32.cont [11/16] 0.0, 128
        %766 = vxpose.xlu0.b32.cont [12/16] 0.0, 128
        %767 = vxpose.xlu0.b32.cont [13/16] 0.0, 128
        %768 = vxpose.xlu0.b32.cont [14/16] 0.0, 128
        %769 = vxpose.xlu0.b32.cont [15/16] 0.0, 128
        %770 = vxpose.xlu0.b32.end [16/16] 0.0, 128
        %v771 = vpop.trf.xlu0
        %v772 = vpop.trf.xlu0
        %v773 = vpop.trf.xlu0
        %v774 = vpop.trf.xlu0
        %v775 = vpop.trf.xlu0
        %v776 = vpop.trf.xlu0
        %v777 = vpop.trf.xlu0
        %v778 = vpop.trf.xlu0
        %v779 = vpop.trf.xlu0
        %v780 = vpop.trf.xlu0
        %v781 = vpop.trf.xlu0
        %v782 = vpop.trf.xlu0
        %v783 = vpop.trf.xlu0
        %v784 = vpop.trf.xlu0
        %v785 = vpop.trf.xlu0
        %v786 = vpop.trf.xlu0
        %787 = vxpose.xlu0.b32.start [1/16] %v738, 128
        %788 = vxpose.xlu0.b32.cont [2/16] %v740, 128
        %789 = vxpose.xlu0.b32.cont [3/16] 0.0, 128
        %790 = vxpose.xlu0.b32.cont [4/16] 0.0, 128
        %791 = vxpose.xlu0.b32.cont [5/16] 0.0, 128
        %792 = vxpose.xlu0.b32.cont [6/16] 0.0, 128
        %793 = vxpose.xlu0.b32.cont [7/16] 0.0, 128
        %794 = vxpose.xlu0.b32.cont [8/16] 0.0, 128
        %795 = vxpose.xlu0.b32.cont [9/16] 0.0, 128
        %796 = vxpose.xlu0.b32.cont [10/16] 0.0, 128
        %797 = vxpose.xlu0.b32.cont [11/16] 0.0, 128
        %798 = vxpose.xlu0.b32.cont [12/16] 0.0, 128
        %799 = vxpose.xlu0.b32.cont [13/16] 0.0, 128
        %800 = vxpose.xlu0.b32.cont [14/16] 0.0, 128
        %801 = vxpose.xlu0.b32.cont [15/16] 0.0, 128
        %802 = vxpose.xlu0.b32.end [16/16] 0.0, 128
        %v803 = vpop.trf.xlu0
        %v804 = vpop.trf.xlu0
        %v805 = vpop.trf.xlu0
        %v806 = vpop.trf.xlu0
        %v807 = vpop.trf.xlu0
        %v808 = vpop.trf.xlu0
        %v809 = vpop.trf.xlu0
        %v810 = vpop.trf.xlu0
        %v811 = vpop.trf.xlu0
        %v812 = vpop.trf.xlu0
        %v813 = vpop.trf.xlu0
        %v814 = vpop.trf.xlu0
        %v815 = vpop.trf.xlu0
        %v816 = vpop.trf.xlu0
        %v817 = vpop.trf.xlu0
        %v818 = vpop.trf.xlu0
        %819 = vxpose.xlu0.b32.start [1/16] %v744, 128
        %820 = vxpose.xlu0.b32.cont [2/16] %v746, 128
        %821 = vxpose.xlu0.b32.cont [3/16] 0.0, 128
        %822 = vxpose.xlu0.b32.cont [4/16] 0.0, 128
        %823 = vxpose.xlu0.b32.cont [5/16] 0.0, 128
        %824 = vxpose.xlu0.b32.cont [6/16] 0.0, 128
        %825 = vxpose.xlu0.b32.cont [7/16] 0.0, 128
        %826 = vxpose.xlu0.b32.cont [8/16] 0.0, 128
        %827 = vxpose.xlu0.b32.cont [9/16] 0.0, 128
        %828 = vxpose.xlu0.b32.cont [10/16] 0.0, 128
        %829 = vxpose.xlu0.b32.cont [11/16] 0.0, 128
        %830 = vxpose.xlu0.b32.cont [12/16] 0.0, 128
        %831 = vxpose.xlu0.b32.cont [13/16] 0.0, 128
        %832 = vxpose.xlu0.b32.cont [14/16] 0.0, 128
        %833 = vxpose.xlu0.b32.cont [15/16] 0.0, 128
        %834 = vxpose.xlu0.b32.end [16/16] 0.0, 128
        %v835 = vpop.trf.xlu0
        %v836 = vpop.trf.xlu0
        %v837 = vpop.trf.xlu0
        %v838 = vpop.trf.xlu0
        %v839 = vpop.trf.xlu0
        %v840 = vpop.trf.xlu0
        %v841 = vpop.trf.xlu0
        %v842 = vpop.trf.xlu0
        %v843 = vpop.trf.xlu0
        %v844 = vpop.trf.xlu0
        %v845 = vpop.trf.xlu0
        %v846 = vpop.trf.xlu0
        %v847 = vpop.trf.xlu0
        %v848 = vpop.trf.xlu0
        %v849 = vpop.trf.xlu0
        %v850 = vpop.trf.xlu0
        %851 = vxpose.xlu0.b32.start [1/16] %v750, 128
        %852 = vxpose.xlu0.b32.cont [2/16] %v752, 128
        %853 = vxpose.xlu0.b32.cont [3/16] 0.0, 128
        %854 = vxpose.xlu0.b32.cont [4/16] 0.0, 128
        %855 = vxpose.xlu0.b32.cont [5/16] 0.0, 128
        %856 = vxpose.xlu0.b32.cont [6/16] 0.0, 128
        %857 = vxpose.xlu0.b32.cont [7/16] 0.0, 128
        %858 = vxpose.xlu0.b32.cont [8/16] 0.0, 128
        %859 = vxpose.xlu0.b32.cont [9/16] 0.0, 128
        %860 = vxpose.xlu0.b32.cont [10/16] 0.0, 128
        %861 = vxpose.xlu0.b32.cont [11/16] 0.0, 128
        %862 = vxpose.xlu0.b32.cont [12/16] 0.0, 128
        %863 = vxpose.xlu0.b32.cont [13/16] 0.0, 128
        %864 = vxpose.xlu0.b32.cont [14/16] 0.0, 128
        %865 = vxpose.xlu0.b32.cont [15/16] 0.0, 128
        %866 = vxpose.xlu0.b32.end [16/16] 0.0, 128
        %v867 = vpop.trf.xlu0
        %v868 = vpop.trf.xlu0
        %v869 = vpop.trf.xlu0
        %v870 = vpop.trf.xlu0
        %v871 = vpop.trf.xlu0
        %v872 = vpop.trf.xlu0
        %v873 = vpop.trf.xlu0
        %v874 = vpop.trf.xlu0
        %v875 = vpop.trf.xlu0
        %v876 = vpop.trf.xlu0
        %v877 = vpop.trf.xlu0
        %v878 = vpop.trf.xlu0
        %v879 = vpop.trf.xlu0
        %v880 = vpop.trf.xlu0
        %v881 = vpop.trf.xlu0
        %v882 = vpop.trf.xlu0
        %vm883 = vcmask 130048
        %v884 = vsel %vm883, %v727, 0
        %886 = vmatprep.subr.mxu0 0.0
        %887 = vmatpush1.msra.mxu0 %v771
        %888 = vmatprep.subr.mxu0 0.0
        %889 = vmatpush1.msra.mxu0 %v772
        %890 = vmatprep.subr.mxu0 0.0
        %891 = vmatpush1.msra.mxu0 0.0
        %892 = vmatprep.subr.mxu0 0.0
        %893 = vmatpush1.msra.mxu0 0.0
        %894 = vmatprep.subr.mxu0 0.0
        %895 = vmatpush1.msra.mxu0 0.0
        %896 = vmatprep.subr.mxu0 0.0
        %897 = vmatpush1.msra.mxu0 0.0
        %898 = vmatprep.subr.mxu0 0.0
        %899 = vmatpush1.msra.mxu0 0.0
        %900 = vmatprep.subr.mxu0 0.0
        %901 = vmatpush1.msra.mxu0 0.0
        %902 = vmatprep.subr.mxu0 0.0
        %903 = vmatpush1.msra.mxu0 0.0
        %904 = vmatprep.subr.mxu0 0.0
        %905 = vmatpush1.msra.mxu0 0.0
        %906 = vmatprep.subr.mxu0 0.0
        %907 = vmatpush1.msra.mxu0 0.0
        %908 = vmatprep.subr.mxu0 0.0
        %909 = vmatpush1.msra.mxu0 0.0
        %910 = vmatprep.subr.mxu0 0.0
        %911 = vmatpush1.msra.mxu0 0.0
        %912 = vmatprep.subr.mxu0 0.0
        %913 = vmatpush1.msra.mxu0 0.0
        %914 = vmatprep.subr.mxu0 0.0
        %915 = vmatpush1.msra.mxu0 0.0
        %916 = vmatprep.subr.mxu0 0.0
        %917 = vmatpush1.msra.mxu0 0.0
        %918 = vmatprep.subr.mxu0 0.0
        %919 = vmatpush1.msra.mxu0 0.0
        %920 = vmatprep.subr.mxu0 0.0
        %921 = vmatpush1.msra.mxu0 0.0
        %922 = vmatprep.subr.mxu0 0.0
        %923 = vmatpush1.msra.mxu0 0.0
        %924 = vmatprep.subr.mxu0 0.0
        %925 = vmatpush1.msra.mxu0 0.0
        %926 = vmatprep.subr.mxu0 0.0
        %927 = vmatpush1.msra.mxu0 0.0
        %928 = vmatprep.subr.mxu0 0.0
        %929 = vmatpush1.msra.mxu0 0.0
        %930 = vmatprep.subr.mxu0 0.0
        %931 = vmatpush1.msra.mxu0 0.0
        %932 = vmatprep.subr.mxu0 0.0
        %933 = vmatpush1.msra.mxu0 0.0
        %934 = vmatprep.subr.mxu0 0.0
        %935 = vmatpush1.msra.mxu0 0.0
        %936 = vmatprep.subr.mxu0 0.0
        %937 = vmatpush1.msra.mxu0 0.0
        %938 = vmatprep.subr.mxu0 0.0
        %939 = vmatpush1.msra.mxu0 0.0
        %940 = vmatprep.subr.mxu0 0.0
        %941 = vmatpush1.msra.mxu0 0.0
        %942 = vmatprep.subr.mxu0 0.0
        %943 = vmatpush1.msra.mxu0 0.0
        %944 = vmatprep.subr.mxu0 0.0
        %945 = vmatpush1.msra.mxu0 0.0
        %946 = vmatprep.subr.mxu0 0.0
        %947 = vmatpush1.msra.mxu0 0.0
        %948 = vmatprep.subr.mxu0 0.0
        %949 = vmatpush1.msra.mxu0 0.0
        %950 = vmatprep.mubr.f32.mxu0 0.0
        %951 = vmatmul.mubr.f32.gmra.mrb[0].mxu0 %v884
        %v952 = vpop.f32.mrb[0].mxu0
        %v953 = vadd.f32 0.0, %v952
        %v954 = vpop.f32.mrb[0].mxu0
        %955 = vdwg.mxu0
        %v956 = vsel %vm883, %v730, 0
        %958 = vmatprep.subr.mxu0 0.0
        %959 = vmatpush1.msra.mxu0 %v803
        %960 = vmatprep.subr.mxu0 0.0
        %961 = vmatpush1.msra.mxu0 %v804
        %962 = vmatprep.subr.mxu0 0.0
        %963 = vmatpush1.msra.mxu0 0.0
        %964 = vmatprep.subr.mxu0 0.0
        %965 = vmatpush1.msra.mxu0 0.0
        %966 = vmatprep.subr.mxu0 0.0
        %967 = vmatpush1.msra.mxu0 0.0
        %968 = vmatprep.subr.mxu0 0.0
        %969 = vmatpush1.msra.mxu0 0.0
        %970 = vmatprep.subr.mxu0 0.0
        %971 = vmatpush1.msra.mxu0 0.0
        %972 = vmatprep.subr.mxu0 0.0
        %973 = vmatpush1.msra.mxu0 0.0
        %974 = vmatprep.subr.mxu0 0.0
        %975 = vmatpush1.msra.mxu0 0.0
        %976 = vmatprep.subr.mxu0 0.0
        %977 = vmatpush1.msra.mxu0 0.0
        %978 = vmatprep.subr.mxu0 0.0
        %979 = vmatpush1.msra.mxu0 0.0
        %980 = vmatprep.subr.mxu0 0.0
        %981 = vmatpush1.msra.mxu0 0.0
        %982 = vmatprep.subr.mxu0 0.0
        %983 = vmatpush1.msra.mxu0 0.0
        %984 = vmatprep.subr.mxu0 0.0
        %985 = vmatpush1.msra.mxu0 0.0
        %986 = vmatprep.subr.mxu0 0.0
        %987 = vmatpush1.msra.mxu0 0.0
        %988 = vmatprep.subr.mxu0 0.0
        %989 = vmatpush1.msra.mxu0 0.0
        %990 = vmatprep.subr.mxu0 0.0
        %991 = vmatpush1.msra.mxu0 0.0
        %992 = vmatprep.subr.mxu0 0.0
        %993 = vmatpush1.msra.mxu0 0.0
        %994 = vmatprep.subr.mxu0 0.0
        %995 = vmatpush1.msra.mxu0 0.0
        %996 = vmatprep.subr.mxu0 0.0
        %997 = vmatpush1.msra.mxu0 0.0
        %998 = vmatprep.subr.mxu0 0.0
        %999 = vmatpush1.msra.mxu0 0.0
        %1000 = vmatprep.subr.mxu0 0.0
        %1001 = vmatpush1.msra.mxu0 0.0
        %1002 = vmatprep.subr.mxu0 0.0
        %1003 = vmatpush1.msra.mxu0 0.0
        %1004 = vmatprep.subr.mxu0 0.0
        %1005 = vmatpush1.msra.mxu0 0.0
        %1006 = vmatprep.subr.mxu0 0.0
        %1007 = vmatpush1.msra.mxu0 0.0
        %1008 = vmatprep.subr.mxu0 0.0
        %1009 = vmatpush1.msra.mxu0 0.0
        %1010 = vmatprep.subr.mxu0 0.0
        %1011 = vmatpush1.msra.mxu0 0.0
        %1012 = vmatprep.subr.mxu0 0.0
        %1013 = vmatpush1.msra.mxu0 0.0
        %1014 = vmatprep.subr.mxu0 0.0
        %1015 = vmatpush1.msra.mxu0 0.0
        %1016 = vmatprep.subr.mxu0 0.0
        %1017 = vmatpush1.msra.mxu0 0.0
        %1018 = vmatprep.subr.mxu0 0.0
        %1019 = vmatpush1.msra.mxu0 0.0
        %1020 = vmatprep.subr.mxu0 0.0
        %1021 = vmatpush1.msra.mxu0 0.0
        %1022 = vmatprep.mubr.f32.mxu0 0.0
        %1023 = vmatmul.mubr.f32.gmra.mrb[0].mxu0 %v956
        %v1024 = vpop.f32.mrb[0].mxu0
        %v1025 = vadd.f32 0.0, %v1024
        %v1026 = vpop.f32.mrb[0].mxu0
        %1027 = vdwg.mxu0
        %v1028 = vsel %vm883, %v732, 0
        %1030 = vmatprep.subr.mxu0 0.0
        %1031 = vmatpush1.msra.mxu0 %v835
        %1032 = vmatprep.subr.mxu0 0.0
        %1033 = vmatpush1.msra.mxu0 %v836
        %1034 = vmatprep.subr.mxu0 0.0
        %1035 = vmatpush1.msra.mxu0 0.0
        %1036 = vmatprep.subr.mxu0 0.0
        %1037 = vmatpush1.msra.mxu0 0.0
        %1038 = vmatprep.subr.mxu0 0.0
        %1039 = vmatpush1.msra.mxu0 0.0
        %1040 = vmatprep.subr.mxu0 0.0
        %1041 = vmatpush1.msra.mxu0 0.0
        %1042 = vmatprep.subr.mxu0 0.0
        %1043 = vmatpush1.msra.mxu0 0.0
        %1044 = vmatprep.subr.mxu0 0.0
        %1045 = vmatpush1.msra.mxu0 0.0
        %1046 = vmatprep.subr.mxu0 0.0
        %1047 = vmatpush1.msra.mxu0 0.0
        %1048 = vmatprep.subr.mxu0 0.0
        %1049 = vmatpush1.msra.mxu0 0.0
        %1050 = vmatprep.subr.mxu0 0.0
        %1051 = vmatpush1.msra.mxu0 0.0
        %1052 = vmatprep.subr.mxu0 0.0
        %1053 = vmatpush1.msra.mxu0 0.0
        %1054 = vmatprep.subr.mxu0 0.0
        %1055 = vmatpush1.msra.mxu0 0.0
        %1056 = vmatprep.subr.mxu0 0.0
        %1057 = vmatpush1.msra.mxu0 0.0
        %1058 = vmatprep.subr.mxu0 0.0
        %1059 = vmatpush1.msra.mxu0 0.0
        %1060 = vmatprep.subr.mxu0 0.0
        %1061 = vmatpush1.msra.mxu0 0.0
        %1062 = vmatprep.subr.mxu0 0.0
        %1063 = vmatpush1.msra.mxu0 0.0
        %1064 = vmatprep.subr.mxu0 0.0
        %1065 = vmatpush1.msra.mxu0 0.0
        %1066 = vmatprep.subr.mxu0 0.0
        %1067 = vmatpush1.msra.mxu0 0.0
        %1068 = vmatprep.subr.mxu0 0.0
        %1069 = vmatpush1.msra.mxu0 0.0
        %1070 = vmatprep.subr.mxu0 0.0
        %1071 = vmatpush1.msra.mxu0 0.0
        %1072 = vmatprep.subr.mxu0 0.0
        %1073 = vmatpush1.msra.mxu0 0.0
        %1074 = vmatprep.subr.mxu0 0.0
        %1075 = vmatpush1.msra.mxu0 0.0
        %1076 = vmatprep.subr.mxu0 0.0
        %1077 = vmatpush1.msra.mxu0 0.0
        %1078 = vmatprep.subr.mxu0 0.0
        %1079 = vmatpush1.msra.mxu0 0.0
        %1080 = vmatprep.subr.mxu0 0.0
        %1081 = vmatpush1.msra.mxu0 0.0
        %1082 = vmatprep.subr.mxu0 0.0
        %1083 = vmatpush1.msra.mxu0 0.0
        %1084 = vmatprep.subr.mxu0 0.0
        %1085 = vmatpush1.msra.mxu0 0.0
        %1086 = vmatprep.subr.mxu0 0.0
        %1087 = vmatpush1.msra.mxu0 0.0
        %1088 = vmatprep.subr.mxu0 0.0
        %1089 = vmatpush1.msra.mxu0 0.0
        %1090 = vmatprep.subr.mxu0 0.0
        %1091 = vmatpush1.msra.mxu0 0.0
        %1092 = vmatprep.subr.mxu0 0.0
        %1093 = vmatpush1.msra.mxu0 0.0
        %1094 = vmatprep.mubr.f32.mxu0 0.0
        %1095 = vmatmul.mubr.f32.gmra.mrb[0].mxu0 %v1028
        %v1096 = vpop.f32.mrb[0].mxu0
        %v1097 = vadd.f32 0.0, %v1096
        %v1098 = vpop.f32.mrb[0].mxu0
        %1099 = vdwg.mxu0
        %v1100 = vsel %vm883, %v734, 0
        %1102 = vmatprep.subr.mxu0 0.0
        %1103 = vmatpush1.msra.mxu0 %v867
        %1104 = vmatprep.subr.mxu0 0.0
        %1105 = vmatpush1.msra.mxu0 %v868
        %1106 = vmatprep.subr.mxu0 0.0
        %1107 = vmatpush1.msra.mxu0 0.0
        %1108 = vmatprep.subr.mxu0 0.0
        %1109 = vmatpush1.msra.mxu0 0.0
        %1110 = vmatprep.subr.mxu0 0.0
        %1111 = vmatpush1.msra.mxu0 0.0
        %1112 = vmatprep.subr.mxu0 0.0
        %1113 = vmatpush1.msra.mxu0 0.0
        %1114 = vmatprep.subr.mxu0 0.0
        %1115 = vmatpush1.msra.mxu0 0.0
        %1116 = vmatprep.subr.mxu0 0.0
        %1117 = vmatpush1.msra.mxu0 0.0
        %1118 = vmatprep.subr.mxu0 0.0
        %1119 = vmatpush1.msra.mxu0 0.0
        %1120 = vmatprep.subr.mxu0 0.0
        %1121 = vmatpush1.msra.mxu0 0.0
        %1122 = vmatprep.subr.mxu0 0.0
        %1123 = vmatpush1.msra.mxu0 0.0
        %1124 = vmatprep.subr.mxu0 0.0
        %1125 = vmatpush1.msra.mxu0 0.0
        %1126 = vmatprep.subr.mxu0 0.0
        %1127 = vmatpush1.msra.mxu0 0.0
        %1128 = vmatprep.subr.mxu0 0.0
        %1129 = vmatpush1.msra.mxu0 0.0
        %1130 = vmatprep.subr.mxu0 0.0
        %1131 = vmatpush1.msra.mxu0 0.0
        %1132 = vmatprep.subr.mxu0 0.0
        %1133 = vmatpush1.msra.mxu0 0.0
        %1134 = vmatprep.subr.mxu0 0.0
        %1135 = vmatpush1.msra.mxu0 0.0
        %1136 = vmatprep.subr.mxu0 0.0
        %1137 = vmatpush1.msra.mxu0 0.0
        %1138 = vmatprep.subr.mxu0 0.0
        %1139 = vmatpush1.msra.mxu0 0.0
        %1140 = vmatprep.subr.mxu0 0.0
        %1141 = vmatpush1.msra.mxu0 0.0
        %1142 = vmatprep.subr.mxu0 0.0
        %1143 = vmatpush1.msra.mxu0 0.0
        %1144 = vmatprep.subr.mxu0 0.0
        %1145 = vmatpush1.msra.mxu0 0.0
        %1146 = vmatprep.subr.mxu0 0.0
        %1147 = vmatpush1.msra.mxu0 0.0
        %1148 = vmatprep.subr.mxu0 0.0
        %1149 = vmatpush1.msra.mxu0 0.0
        %1150 = vmatprep.subr.mxu0 0.0
        %1151 = vmatpush1.msra.mxu0 0.0
        %1152 = vmatprep.subr.mxu0 0.0
        %1153 = vmatpush1.msra.mxu0 0.0
        %1154 = vmatprep.subr.mxu0 0.0
        %1155 = vmatpush1.msra.mxu0 0.0
        %1156 = vmatprep.subr.mxu0 0.0
        %1157 = vmatpush1.msra.mxu0 0.0
        %1158 = vmatprep.subr.mxu0 0.0
        %1159 = vmatpush1.msra.mxu0 0.0
        %1160 = vmatprep.subr.mxu0 0.0
        %1161 = vmatpush1.msra.mxu0 0.0
        %1162 = vmatprep.subr.mxu0 0.0
        %1163 = vmatpush1.msra.mxu0 0.0
        %1164 = vmatprep.subr.mxu0 0.0
        %1165 = vmatpush1.msra.mxu0 0.0
        %1166 = vmatprep.mubr.f32.mxu0 0.0
        %1167 = vmatmul.mubr.f32.gmra.mrb[0].mxu0 %v1100
        %v1168 = vpop.f32.mrb[0].mxu0
        %v1169 = vadd.f32 0.0, %v1168
        %v1170 = vpop.f32.mrb[0].mxu0
        %1171 = vdwg.mxu0
        %s1172 = smul.u32 %s39, 8
        %v1173 = vlaneseq
        %v1174 = vshrl.u32 %v1173, 7
        %v1175 = vstv %s1172
        %v1176 = vadd.s32 %v1174, %v1175
        %v1177 = vlaneseq
        %v1178 = vand.u32 %v1177, 127
        %vm1179 = vcmp.ge.s32.totalorder %v1176, %v1178
        %v1180 = vsel %vm1179, 1, 0
        %vm1181 = vcmp.eq.s32.totalorder %v1180, 1
        %v1182 = vsel %vm1181, %v953, -1e+09
        %v1183 = vsel %vm1181, %v1025, -1e+09
        %v1184 = vsel %vm1181, %v1097, -1e+09
        %v1185 = vsel %vm1181, %v1169, -1e+09
        %v1186 = vsel %vm883, %v1182, -inf
        %1187 = vmax.xlane.f32.xlu0 %v1186
        %v1188 = vpop.xlane.xlu0 %1187
        %v1189 = vsel %vm883, %v1183, -inf
        %1190 = vmax.xlane.f32.xlu0 %v1189
        %v1191 = vpop.xlane.xlu0 %1190
        %v1192 = vsel %vm883, %v1184, -inf
        %1193 = vmax.xlane.f32.xlu0 %v1192
        %v1194 = vpop.xlane.xlu0 %1193
        %v1195 = vsel %vm883, %v1185, -inf
        %1196 = vmax.xlane.f32.xlu0 %v1195
        %v1197 = vpop.xlane.xlu0 %1196
        %v1198 = vsub.f32 %v1182, %v1188
        %v1199 = vsub.f32 %v1183, %v1191
        %v1200 = vsub.f32 %v1184, %v1194
        %v1201 = vsub.f32 %v1185, %v1197
        %v1202 = vmul.f32 %v1198, 1.442695
        %v1203 = vpow.pop %v1202
        %v1204 = vmul.f32 %v1199, 1.442695
        %v1205 = vpow.pop %v1204
        %v1206 = vmul.f32 %v1200, 1.442695
        %v1207 = vpow.pop %v1206
        %v1208 = vmul.f32 %v1201, 1.442695
        %v1209 = vpow.pop %v1208
        %v1210 = vsel %vm883, %v1203, 0.0
        %1211 = vadd.xlane.f32.xlu0 %v1210
        %v1212 = vpop.xlane.xlu0 %1211
        %v1213 = vsel %vm883, %v1205, 0.0
        %1214 = vadd.xlane.f32.xlu0 %v1213
        %v1215 = vpop.xlane.xlu0 %1214
        %v1216 = vsel %vm883, %v1207, 0.0
        %1217 = vadd.xlane.f32.xlu0 %v1216
        %v1218 = vpop.xlane.xlu0 %1217
        %v1219 = vsel %vm883, %v1209, 0.0
        %1220 = vadd.xlane.f32.xlu0 %v1219
        %v1221 = vpop.xlane.xlu0 %1220
        %v1222 = vrcp.pop %v1212
        %v1223 = vrcp.pop %v1215
        %v1224 = vrcp.pop %v1218
        %v1225 = vrcp.pop %v1221
        %v1226 = vmul.f32 %v1203, %v1222
        %v1227 = vmul.f32 %v1205, %v1223
        %v1228 = vmul.f32 %v1207, %v1224
        %v1229 = vmul.f32 %v1209, %v1225
        %1230 = vrot.lane.b32.xlu0 %v719, 64
        %v1231 = vpop.permute.xlu0 %1230
        %1232 = vrot.lane.b32.xlu0 %v724, 64
        %v1233 = vpop.permute.xlu0 %1232
        %1234 = vrot.lane.b32.xlu0 %v738, 64
        %v1235 = vpop.permute.xlu0 %1234
        %1236 = vrot.lane.b32.xlu0 %v740, 64
        %v1237 = vpop.permute.xlu0 %1236
        %1238 = vrot.lane.b32.xlu0 %v744, 64
        %v1239 = vpop.permute.xlu0 %1238
        %1240 = vrot.lane.b32.xlu0 %v746, 64
        %v1241 = vpop.permute.xlu0 %1240
        %1242 = vrot.lane.b32.xlu0 %v750, 64
        %v1243 = vpop.permute.xlu0 %1242
        %1244 = vrot.lane.b32.xlu0 %v752, 64
        %v1245 = vpop.permute.xlu0 %1244
        %1254 = vxpose.xlu0.b32.start [1/16] %v1231, 128
        %1255 = vxpose.xlu0.b32.cont [2/16] %v1233, 128
        %1256 = vxpose.xlu0.b32.cont [3/16] 0.0, 128
        %1257 = vxpose.xlu0.b32.cont [4/16] 0.0, 128
        %1258 = vxpose.xlu0.b32.cont [5/16] 0.0, 128
        %1259 = vxpose.xlu0.b32.cont [6/16] 0.0, 128
        %1260 = vxpose.xlu0.b32.cont [7/16] 0.0, 128
        %1261 = vxpose.xlu0.b32.cont [8/16] 0.0, 128
        %1262 = vxpose.xlu0.b32.cont [9/16] 0.0, 128
        %1263 = vxpose.xlu0.b32.cont [10/16] 0.0, 128
        %1264 = vxpose.xlu0.b32.cont [11/16] 0.0, 128
        %1265 = vxpose.xlu0.b32.cont [12/16] 0.0, 128
        %1266 = vxpose.xlu0.b32.cont [13/16] 0.0, 128
        %1267 = vxpose.xlu0.b32.cont [14/16] 0.0, 128
        %1268 = vxpose.xlu0.b32.cont [15/16] 0.0, 128
        %1269 = vxpose.xlu0.b32.end [16/16] 0.0, 128
        %v1270 = vpop.trf.xlu0
        %v1271 = vpop.trf.xlu0
        %v1272 = vpop.trf.xlu0
        %v1273 = vpop.trf.xlu0
        %v1274 = vpop.trf.xlu0
        %v1275 = vpop.trf.xlu0
        %v1276 = vpop.trf.xlu0
        %v1277 = vpop.trf.xlu0
        %v1278 = vpop.trf.xlu0
        %v1279 = vpop.trf.xlu0
        %v1280 = vpop.trf.xlu0
        %v1281 = vpop.trf.xlu0
        %v1282 = vpop.trf.xlu0
        %v1283 = vpop.trf.xlu0
        %v1284 = vpop.trf.xlu0
        %v1285 = vpop.trf.xlu0
        %1286 = vxpose.xlu0.b32.start [1/16] %v1235, 128
        %1287 = vxpose.xlu0.b32.cont [2/16] %v1237, 128
        %1288 = vxpose.xlu0.b32.cont [3/16] 0.0, 128
        %1289 = vxpose.xlu0.b32.cont [4/16] 0.0, 128
        %1290 = vxpose.xlu0.b32.cont [5/16] 0.0, 128
        %1291 = vxpose.xlu0.b32.cont [6/16] 0.0, 128
        %1292 = vxpose.xlu0.b32.cont [7/16] 0.0, 128
        %1293 = vxpose.xlu0.b32.cont [8/16] 0.0, 128
        %1294 = vxpose.xlu0.b32.cont [9/16] 0.0, 128
        %1295 = vxpose.xlu0.b32.cont [10/16] 0.0, 128
        %1296 = vxpose.xlu0.b32.cont [11/16] 0.0, 128
        %1297 = vxpose.xlu0.b32.cont [12/16] 0.0, 128
        %1298 = vxpose.xlu0.b32.cont [13/16] 0.0, 128
        %1299 = vxpose.xlu0.b32.cont [14/16] 0.0, 128
        %1300 = vxpose.xlu0.b32.cont [15/16] 0.0, 128
        %1301 = vxpose.xlu0.b32.end [16/16] 0.0, 128
        %v1302 = vpop.trf.xlu0
        %v1303 = vpop.trf.xlu0
        %v1304 = vpop.trf.xlu0
        %v1305 = vpop.trf.xlu0
        %v1306 = vpop.trf.xlu0
        %v1307 = vpop.trf.xlu0
        %v1308 = vpop.trf.xlu0
        %v1309 = vpop.trf.xlu0
        %v1310 = vpop.trf.xlu0
        %v1311 = vpop.trf.xlu0
        %v1312 = vpop.trf.xlu0
        %v1313 = vpop.trf.xlu0
        %v1314 = vpop.trf.xlu0
        %v1315 = vpop.trf.xlu0
        %v1316 = vpop.trf.xlu0
        %v1317 = vpop.trf.xlu0
        %1318 = vxpose.xlu0.b32.start [1/16] %v1239, 128
        %1319 = vxpose.xlu0.b32.cont [2/16] %v1241, 128
        %1320 = vxpose.xlu0.b32.cont [3/16] 0.0, 128
        %1321 = vxpose.xlu0.b32.cont [4/16] 0.0, 128
        %1322 = vxpose.xlu0.b32.cont [5/16] 0.0, 128
        %1323 = vxpose.xlu0.b32.cont [6/16] 0.0, 128
        %1324 = vxpose.xlu0.b32.cont [7/16] 0.0, 128
        %1325 = vxpose.xlu0.b32.cont [8/16] 0.0, 128
        %1326 = vxpose.xlu0.b32.cont [9/16] 0.0, 128
        %1327 = vxpose.xlu0.b32.cont [10/16] 0.0, 128
        %1328 = vxpose.xlu0.b32.cont [11/16] 0.0, 128
        %1329 = vxpose.xlu0.b32.cont [12/16] 0.0, 128
        %1330 = vxpose.xlu0.b32.cont [13/16] 0.0, 128
        %1331 = vxpose.xlu0.b32.cont [14/16] 0.0, 128
        %1332 = vxpose.xlu0.b32.cont [15/16] 0.0, 128
        %1333 = vxpose.xlu0.b32.end [16/16] 0.0, 128
        %v1334 = vpop.trf.xlu0
        %v1335 = vpop.trf.xlu0
        %v1336 = vpop.trf.xlu0
        %v1337 = vpop.trf.xlu0
        %v1338 = vpop.trf.xlu0
        %v1339 = vpop.trf.xlu0
        %v1340 = vpop.trf.xlu0
        %v1341 = vpop.trf.xlu0
        %v1342 = vpop.trf.xlu0
        %v1343 = vpop.trf.xlu0
        %v1344 = vpop.trf.xlu0
        %v1345 = vpop.trf.xlu0
        %v1346 = vpop.trf.xlu0
        %v1347 = vpop.trf.xlu0
        %v1348 = vpop.trf.xlu0
        %v1349 = vpop.trf.xlu0
        %1350 = vxpose.xlu0.b32.start [1/16] %v1243, 128
        %1351 = vxpose.xlu0.b32.cont [2/16] %v1245, 128
        %1352 = vxpose.xlu0.b32.cont [3/16] 0.0, 128
        %1353 = vxpose.xlu0.b32.cont [4/16] 0.0, 128
        %1354 = vxpose.xlu0.b32.cont [5/16] 0.0, 128
        %1355 = vxpose.xlu0.b32.cont [6/16] 0.0, 128
        %1356 = vxpose.xlu0.b32.cont [7/16] 0.0, 128
        %1357 = vxpose.xlu0.b32.cont [8/16] 0.0, 128
        %1358 = vxpose.xlu0.b32.cont [9/16] 0.0, 128
        %1359 = vxpose.xlu0.b32.cont [10/16] 0.0, 128
        %1360 = vxpose.xlu0.b32.cont [11/16] 0.0, 128
        %1361 = vxpose.xlu0.b32.cont [12/16] 0.0, 128
        %1362 = vxpose.xlu0.b32.cont [13/16] 0.0, 128
        %1363 = vxpose.xlu0.b32.cont [14/16] 0.0, 128
        %1364 = vxpose.xlu0.b32.cont [15/16] 0.0, 128
        %1365 = vxpose.xlu0.b32.end [16/16] 0.0, 128
        %v1366 = vpop.trf.xlu0
        %v1367 = vpop.trf.xlu0
        %v1368 = vpop.trf.xlu0
        %v1369 = vpop.trf.xlu0
        %v1370 = vpop.trf.xlu0
        %v1371 = vpop.trf.xlu0
        %v1372 = vpop.trf.xlu0
        %v1373 = vpop.trf.xlu0
        %v1374 = vpop.trf.xlu0
        %v1375 = vpop.trf.xlu0
        %v1376 = vpop.trf.xlu0
        %v1377 = vpop.trf.xlu0
        %v1378 = vpop.trf.xlu0
        %v1379 = vpop.trf.xlu0
        %v1380 = vpop.trf.xlu0
        %v1381 = vpop.trf.xlu0
        %v1383 = vsel %vm883, %v1270, 0
        %v1386 = vsel %vm883, %v1271, 0
        %v1389 = vsel %vm883, %v1226, 0
        %1391 = vmatprep.subr.mxu0 0.0
        %1392 = vmatpush1.xpose.msra.mxu0 %v1389
        %1393 = vmatprep.subr.mxu0 0.0
        %1394 = vmatpush1.xpose.msra.mxu0 0.0
        %1395 = vmatprep.subr.mxu0 0.0
        %1396 = vmatpush1.xpose.msra.mxu0 0.0
        %1397 = vmatprep.subr.mxu0 0.0
        %1398 = vmatpush1.xpose.msra.mxu0 0.0
        %1399 = vmatprep.subr.mxu0 0.0
        %1400 = vmatpush1.xpose.msra.mxu0 0.0
        %1401 = vmatprep.subr.mxu0 0.0
        %1402 = vmatpush1.xpose.msra.mxu0 0.0
        %1403 = vmatprep.subr.mxu0 0.0
        %1404 = vmatpush1.xpose.msra.mxu0 0.0
        %1405 = vmatprep.subr.mxu0 0.0
        %1406 = vmatpush1.xpose.msra.mxu0 0.0
        %1407 = vmatprep.subr.mxu0 0.0
        %1408 = vmatpush1.xpose.msra.mxu0 0.0
        %1409 = vmatprep.subr.mxu0 0.0
        %1410 = vmatpush1.xpose.msra.mxu0 0.0
        %1411 = vmatprep.subr.mxu0 0.0
        %1412 = vmatpush1.xpose.msra.mxu0 0.0
        %1413 = vmatprep.subr.mxu0 0.0
        %1414 = vmatpush1.xpose.msra.mxu0 0.0
        %1415 = vmatprep.subr.mxu0 0.0
        %1416 = vmatpush1.xpose.msra.mxu0 0.0
        %1417 = vmatprep.subr.mxu0 0.0
        %1418 = vmatpush1.xpose.msra.mxu0 0.0
        %1419 = vmatprep.subr.mxu0 0.0
        %1420 = vmatpush1.xpose.msra.mxu0 0.0
        %1421 = vmatprep.subr.mxu0 0.0
        %1422 = vmatpush1.xpose.msra.mxu0 0.0
        %1423 = vmatprep.subr.mxu0 0.0
        %1424 = vmatpush1.xpose.msra.mxu0 0.0
        %1425 = vmatprep.subr.mxu0 0.0
        %1426 = vmatpush1.xpose.msra.mxu0 0.0
        %1427 = vmatprep.subr.mxu0 0.0
        %1428 = vmatpush1.xpose.msra.mxu0 0.0
        %1429 = vmatprep.subr.mxu0 0.0
        %1430 = vmatpush1.xpose.msra.mxu0 0.0
        %1431 = vmatprep.subr.mxu0 0.0
        %1432 = vmatpush1.xpose.msra.mxu0 0.0
        %1433 = vmatprep.subr.mxu0 0.0
        %1434 = vmatpush1.xpose.msra.mxu0 0.0
        %1435 = vmatprep.subr.mxu0 0.0
        %1436 = vmatpush1.xpose.msra.mxu0 0.0
        %1437 = vmatprep.subr.mxu0 0.0
        %1438 = vmatpush1.xpose.msra.mxu0 0.0
        %1439 = vmatprep.subr.mxu0 0.0
        %1440 = vmatpush1.xpose.msra.mxu0 0.0
        %1441 = vmatprep.subr.mxu0 0.0
        %1442 = vmatpush1.xpose.msra.mxu0 0.0
        %1443 = vmatprep.subr.mxu0 0.0
        %1444 = vmatpush1.xpose.msra.mxu0 0.0
        %1445 = vmatprep.subr.mxu0 0.0
        %1446 = vmatpush1.xpose.msra.mxu0 0.0
        %1447 = vmatprep.subr.mxu0 0.0
        %1448 = vmatpush1.xpose.msra.mxu0 0.0
        %1449 = vmatprep.subr.mxu0 0.0
        %1450 = vmatpush1.xpose.msra.mxu0 0.0
        %1451 = vmatprep.subr.mxu0 0.0
        %1452 = vmatpush1.xpose.msra.mxu0 0.0
        %1453 = vmatprep.subr.mxu0 0.0
        %1454 = vmatpush1.xpose.msra.mxu0 0.0
        %1455 = vmatprep.mubr.f32.mxu0 0.0
        %1456 = vmatmul.mubr.f32.gmra.mrb[0].mxu0 %v1383
        %v1457 = vpop.f32.mrb[0].mxu0
        %v1458 = vadd.f32 0.0, %v1457
        %v1459 = vpop.f32.mrb[0].mxu0
        %1460 = vmatprep.mubr.f32.mxu0 0.0
        %1461 = vmatmul.mubr.f32.gmra.mrb[0].mxu0 %v1386
        %v1462 = vpop.f32.mrb[0].mxu0
        %v1463 = vadd.f32 0.0, %v1462
        %v1464 = vpop.f32.mrb[0].mxu0
        %1465 = vdwg.mxu0
        %v1467 = vsel %vm883, %v1302, 0
        %v1470 = vsel %vm883, %v1303, 0
        %v1473 = vsel %vm883, %v1227, 0
        %1475 = vmatprep.subr.mxu0 0.0
        %1476 = vmatpush1.xpose.msra.mxu0 %v1473
        %1477 = vmatprep.subr.mxu0 0.0
        %1478 = vmatpush1.xpose.msra.mxu0 0.0
        %1479 = vmatprep.subr.mxu0 0.0
        %1480 = vmatpush1.xpose.msra.mxu0 0.0
        %1481 = vmatprep.subr.mxu0 0.0
        %1482 = vmatpush1.xpose.msra.mxu0 0.0
        %1483 = vmatprep.subr.mxu0 0.0
        %1484 = vmatpush1.xpose.msra.mxu0 0.0
        %1485 = vmatprep.subr.mxu0 0.0
        %1486 = vmatpush1.xpose.msra.mxu0 0.0
        %1487 = vmatprep.subr.mxu0 0.0
        %1488 = vmatpush1.xpose.msra.mxu0 0.0
        %1489 = vmatprep.subr.mxu0 0.0
        %1490 = vmatpush1.xpose.msra.mxu0 0.0
        %1491 = vmatprep.subr.mxu0 0.0
        %1492 = vmatpush1.xpose.msra.mxu0 0.0
        %1493 = vmatprep.subr.mxu0 0.0
        %1494 = vmatpush1.xpose.msra.mxu0 0.0
        %1495 = vmatprep.subr.mxu0 0.0
        %1496 = vmatpush1.xpose.msra.mxu0 0.0
        %1497 = vmatprep.subr.mxu0 0.0
        %1498 = vmatpush1.xpose.msra.mxu0 0.0
        %1499 = vmatprep.subr.mxu0 0.0
        %1500 = vmatpush1.xpose.msra.mxu0 0.0
        %1501 = vmatprep.subr.mxu0 0.0
        %1502 = vmatpush1.xpose.msra.mxu0 0.0
        %1503 = vmatprep.subr.mxu0 0.0
        %1504 = vmatpush1.xpose.msra.mxu0 0.0
        %1505 = vmatprep.subr.mxu0 0.0
        %1506 = vmatpush1.xpose.msra.mxu0 0.0
        %1507 = vmatprep.subr.mxu0 0.0
        %1508 = vmatpush1.xpose.msra.mxu0 0.0
        %1509 = vmatprep.subr.mxu0 0.0
        %1510 = vmatpush1.xpose.msra.mxu0 0.0
        %1511 = vmatprep.subr.mxu0 0.0
        %1512 = vmatpush1.xpose.msra.mxu0 0.0
        %1513 = vmatprep.subr.mxu0 0.0
        %1514 = vmatpush1.xpose.msra.mxu0 0.0
        %1515 = vmatprep.subr.mxu0 0.0
        %1516 = vmatpush1.xpose.msra.mxu0 0.0
        %1517 = vmatprep.subr.mxu0 0.0
        %1518 = vmatpush1.xpose.msra.mxu0 0.0
        %1519 = vmatprep.subr.mxu0 0.0
        %1520 = vmatpush1.xpose.msra.mxu0 0.0
        %1521 = vmatprep.subr.mxu0 0.0
        %1522 = vmatpush1.xpose.msra.mxu0 0.0
        %1523 = vmatprep.subr.mxu0 0.0
        %1524 = vmatpush1.xpose.msra.mxu0 0.0
        %1525 = vmatprep.subr.mxu0 0.0
        %1526 = vmatpush1.xpose.msra.mxu0 0.0
        %1527 = vmatprep.subr.mxu0 0.0
        %1528 = vmatpush1.xpose.msra.mxu0 0.0
        %1529 = vmatprep.subr.mxu0 0.0
        %1530 = vmatpush1.xpose.msra.mxu0 0.0
        %1531 = vmatprep.subr.mxu0 0.0
        %1532 = vmatpush1.xpose.msra.mxu0 0.0
        %1533 = vmatprep.subr.mxu0 0.0
        %1534 = vmatpush1.xpose.msra.mxu0 0.0
        %1535 = vmatprep.subr.mxu0 0.0
        %1536 = vmatpush1.xpose.msra.mxu0 0.0
        %1537 = vmatprep.subr.mxu0 0.0
        %1538 = vmatpush1.xpose.msra.mxu0 0.0
        %1539 = vmatprep.mubr.f32.mxu0 0.0
        %1540 = vmatmul.mubr.f32.gmra.mrb[0].mxu0 %v1467
        %v1541 = vpop.f32.mrb[0].mxu0
        %v1542 = vadd.f32 0.0, %v1541
        %v1543 = vpop.f32.mrb[0].mxu0
        %1544 = vmatprep.mubr.f32.mxu0 0.0
        %1545 = vmatmul.mubr.f32.gmra.mrb[0].mxu0 %v1470
        %v1546 = vpop.f32.mrb[0].mxu0
        %v1547 = vadd.f32 0.0, %v1546
        %v1548 = vpop.f32.mrb[0].mxu0
        %1549 = vdwg.mxu0
        %v1551 = vsel %vm883, %v1334, 0
        %v1554 = vsel %vm883, %v1335, 0
        %v1557 = vsel %vm883, %v1228, 0
        %1559 = vmatprep.subr.mxu0 0.0
        %1560 = vmatpush1.xpose.msra.mxu0 %v1557
        %1561 = vmatprep.subr.mxu0 0.0
        %1562 = vmatpush1.xpose.msra.mxu0 0.0
        %1563 = vmatprep.subr.mxu0 0.0
        %1564 = vmatpush1.xpose.msra.mxu0 0.0
        %1565 = vmatprep.subr.mxu0 0.0
        %1566 = vmatpush1.xpose.msra.mxu0 0.0
        %1567 = vmatprep.subr.mxu0 0.0
        %1568 = vmatpush1.xpose.msra.mxu0 0.0
        %1569 = vmatprep.subr.mxu0 0.0
        %1570 = vmatpush1.xpose.msra.mxu0 0.0
        %1571 = vmatprep.subr.mxu0 0.0
        %1572 = vmatpush1.xpose.msra.mxu0 0.0
        %1573 = vmatprep.subr.mxu0 0.0
        %1574 = vmatpush1.xpose.msra.mxu0 0.0
        %1575 = vmatprep.subr.mxu0 0.0
        %1576 = vmatpush1.xpose.msra.mxu0 0.0
        %1577 = vmatprep.subr.mxu0 0.0
        %1578 = vmatpush1.xpose.msra.mxu0 0.0
        %1579 = vmatprep.subr.mxu0 0.0
        %1580 = vmatpush1.xpose.msra.mxu0 0.0
        %1581 = vmatprep.subr.mxu0 0.0
        %1582 = vmatpush1.xpose.msra.mxu0 0.0
        %1583 = vmatprep.subr.mxu0 0.0
        %1584 = vmatpush1.xpose.msra.mxu0 0.0
        %1585 = vmatprep.subr.mxu0 0.0
        %1586 = vmatpush1.xpose.msra.mxu0 0.0
        %1587 = vmatprep.subr.mxu0 0.0
        %1588 = vmatpush1.xpose.msra.mxu0 0.0
        %1589 = vmatprep.subr.mxu0 0.0
        %1590 = vmatpush1.xpose.msra.mxu0 0.0
        %1591 = vmatprep.subr.mxu0 0.0
        %1592 = vmatpush1.xpose.msra.mxu0 0.0
        %1593 = vmatprep.subr.mxu0 0.0
        %1594 = vmatpush1.xpose.msra.mxu0 0.0
        %1595 = vmatprep.subr.mxu0 0.0
        %1596 = vmatpush1.xpose.msra.mxu0 0.0
        %1597 = vmatprep.subr.mxu0 0.0
        %1598 = vmatpush1.xpose.msra.mxu0 0.0
        %1599 = vmatprep.subr.mxu0 0.0
        %1600 = vmatpush1.xpose.msra.mxu0 0.0
        %1601 = vmatprep.subr.mxu0 0.0
        %1602 = vmatpush1.xpose.msra.mxu0 0.0
        %1603 = vmatprep.subr.mxu0 0.0
        %1604 = vmatpush1.xpose.msra.mxu0 0.0
        %1605 = vmatprep.subr.mxu0 0.0
        %1606 = vmatpush1.xpose.msra.mxu0 0.0
        %1607 = vmatprep.subr.mxu0 0.0
        %1608 = vmatpush1.xpose.msra.mxu0 0.0
        %1609 = vmatprep.subr.mxu0 0.0
        %1610 = vmatpush1.xpose.msra.mxu0 0.0
        %1611 = vmatprep.subr.mxu0 0.0
        %1612 = vmatpush1.xpose.msra.mxu0 0.0
        %1613 = vmatprep.subr.mxu0 0.0
        %1614 = vmatpush1.xpose.msra.mxu0 0.0
        %1615 = vmatprep.subr.mxu0 0.0
        %1616 = vmatpush1.xpose.msra.mxu0 0.0
        %1617 = vmatprep.subr.mxu0 0.0
        %1618 = vmatpush1.xpose.msra.mxu0 0.0
        %1619 = vmatprep.subr.mxu0 0.0
        %1620 = vmatpush1.xpose.msra.mxu0 0.0
        %1621 = vmatprep.subr.mxu0 0.0
        %1622 = vmatpush1.xpose.msra.mxu0 0.0
        %1623 = vmatprep.mubr.f32.mxu0 0.0
        %1624 = vmatmul.mubr.f32.gmra.mrb[0].mxu0 %v1551
        %v1625 = vpop.f32.mrb[0].mxu0
        %v1626 = vadd.f32 0.0, %v1625
        %v1627 = vpop.f32.mrb[0].mxu0
        %1628 = vmatprep.mubr.f32.mxu0 0.0
        %1629 = vmatmul.mubr.f32.gmra.mrb[0].mxu0 %v1554
        %v1630 = vpop.f32.mrb[0].mxu0
        %v1631 = vadd.f32 0.0, %v1630
        %v1632 = vpop.f32.mrb[0].mxu0
        %1633 = vdwg.mxu0
        %v1635 = vsel %vm883, %v1366, 0
        %v1638 = vsel %vm883, %v1367, 0
        %v1641 = vsel %vm883, %v1229, 0
        %1643 = vmatprep.subr.mxu0 0.0
        %1644 = vmatpush1.xpose.msra.mxu0 %v1641
        %1645 = vmatprep.subr.mxu0 0.0
        %1646 = vmatpush1.xpose.msra.mxu0 0.0
        %1647 = vmatprep.subr.mxu0 0.0
        %1648 = vmatpush1.xpose.msra.mxu0 0.0
        %1649 = vmatprep.subr.mxu0 0.0
        %1650 = vmatpush1.xpose.msra.mxu0 0.0
        %1651 = vmatprep.subr.mxu0 0.0
        %1652 = vmatpush1.xpose.msra.mxu0 0.0
        %1653 = vmatprep.subr.mxu0 0.0
        %1654 = vmatpush1.xpose.msra.mxu0 0.0
        %1655 = vmatprep.subr.mxu0 0.0
        %1656 = vmatpush1.xpose.msra.mxu0 0.0
        %1657 = vmatprep.subr.mxu0 0.0
        %1658 = vmatpush1.xpose.msra.mxu0 0.0
        %1659 = vmatprep.subr.mxu0 0.0
        %1660 = vmatpush1.xpose.msra.mxu0 0.0
        %1661 = vmatprep.subr.mxu0 0.0
        %1662 = vmatpush1.xpose.msra.mxu0 0.0
        %1663 = vmatprep.subr.mxu0 0.0
        %1664 = vmatpush1.xpose.msra.mxu0 0.0
        %1665 = vmatprep.subr.mxu0 0.0
        %1666 = vmatpush1.xpose.msra.mxu0 0.0
        %1667 = vmatprep.subr.mxu0 0.0
        %1668 = vmatpush1.xpose.msra.mxu0 0.0
        %1669 = vmatprep.subr.mxu0 0.0
        %1670 = vmatpush1.xpose.msra.mxu0 0.0
        %1671 = vmatprep.subr.mxu0 0.0
        %1672 = vmatpush1.xpose.msra.mxu0 0.0
        %1673 = vmatprep.subr.mxu0 0.0
        %1674 = vmatpush1.xpose.msra.mxu0 0.0
        %1675 = vmatprep.subr.mxu0 0.0
        %1676 = vmatpush1.xpose.msra.mxu0 0.0
        %1677 = vmatprep.subr.mxu0 0.0
        %1678 = vmatpush1.xpose.msra.mxu0 0.0
        %1679 = vmatprep.subr.mxu0 0.0
        %1680 = vmatpush1.xpose.msra.mxu0 0.0
        %1681 = vmatprep.subr.mxu0 0.0
        %1682 = vmatpush1.xpose.msra.mxu0 0.0
        %1683 = vmatprep.subr.mxu0 0.0
        %1684 = vmatpush1.xpose.msra.mxu0 0.0
        %1685 = vmatprep.subr.mxu0 0.0
        %1686 = vmatpush1.xpose.msra.mxu0 0.0
        %1687 = vmatprep.subr.mxu0 0.0
        %1688 = vmatpush1.xpose.msra.mxu0 0.0
        %1689 = vmatprep.subr.mxu0 0.0
        %1690 = vmatpush1.xpose.msra.mxu0 0.0
        %1691 = vmatprep.subr.mxu0 0.0
        %1692 = vmatpush1.xpose.msra.mxu0 0.0
        %1693 = vmatprep.subr.mxu0 0.0
        %1694 = vmatpush1.xpose.msra.mxu0 0.0
        %1695 = vmatprep.subr.mxu0 0.0
        %1696 = vmatpush1.xpose.msra.mxu0 0.0
        %1697 = vmatprep.subr.mxu0 0.0
        %1698 = vmatpush1.xpose.msra.mxu0 0.0
        %1699 = vmatprep.subr.mxu0 0.0
        %1700 = vmatpush1.xpose.msra.mxu0 0.0
        %1701 = vmatprep.subr.mxu0 0.0
        %1702 = vmatpush1.xpose.msra.mxu0 0.0
        %1703 = vmatprep.subr.mxu0 0.0
        %1704 = vmatpush1.xpose.msra.mxu0 0.0
        %1705 = vmatprep.subr.mxu0 0.0
        %1706 = vmatpush1.xpose.msra.mxu0 0.0
        %1707 = vmatprep.mubr.f32.mxu0 0.0
        %1708 = vmatmul.mubr.f32.gmra.mrb[0].mxu0 %v1635
        %v1709 = vpop.f32.mrb[0].mxu0
        %v1710 = vadd.f32 0.0, %v1709
        %v1711 = vpop.f32.mrb[0].mxu0
        %1712 = vmatprep.mubr.f32.mxu0 0.0
        %1713 = vmatmul.mubr.f32.gmra.mrb[0].mxu0 %v1638
        %v1714 = vpop.f32.mrb[0].mxu0
        %v1715 = vadd.f32 0.0, %v1714
        %v1716 = vpop.f32.mrb[0].mxu0
        %1717 = vdwg.mxu0
        %1718 = vxpose.xlu0.b32.start [1/16] %v1458, 128
        %1719 = vxpose.xlu0.b32.cont [2/16] %v1463, 128
        %1720 = vxpose.xlu0.b32.cont [3/16] 0.0, 128
        %1721 = vxpose.xlu0.b32.cont [4/16] 0.0, 128
        %1722 = vxpose.xlu0.b32.cont [5/16] 0.0, 128
        %1723 = vxpose.xlu0.b32.cont [6/16] 0.0, 128
        %1724 = vxpose.xlu0.b32.cont [7/16] 0.0, 128
        %1725 = vxpose.xlu0.b32.cont [8/16] 0.0, 128
        %1726 = vxpose.xlu0.b32.cont [9/16] 0.0, 128
        %1727 = vxpose.xlu0.b32.cont [10/16] 0.0, 128
        %1728 = vxpose.xlu0.b32.cont [11/16] 0.0, 128
        %1729 = vxpose.xlu0.b32.cont [12/16] 0.0, 128
        %1730 = vxpose.xlu0.b32.cont [13/16] 0.0, 128
        %1731 = vxpose.xlu0.b32.cont [14/16] 0.0, 128
        %1732 = vxpose.xlu0.b32.cont [15/16] 0.0, 128
        %1733 = vxpose.xlu0.b32.end [16/16] 0.0, 128
        %v1734 = vpop.trf.xlu0
        %v1735 = vpop.trf.xlu0
        %v1736 = vpop.trf.xlu0
        %v1737 = vpop.trf.xlu0
        %v1738 = vpop.trf.xlu0
        %v1739 = vpop.trf.xlu0
        %v1740 = vpop.trf.xlu0
        %v1741 = vpop.trf.xlu0
        %v1742 = vpop.trf.xlu0
        %v1743 = vpop.trf.xlu0
        %v1744 = vpop.trf.xlu0
        %v1745 = vpop.trf.xlu0
        %v1746 = vpop.trf.xlu0
        %v1747 = vpop.trf.xlu0
        %v1748 = vpop.trf.xlu0
        %v1749 = vpop.trf.xlu0
        %1750 = vxpose.xlu0.b32.start [1/16] %v1542, 128
        %1751 = vxpose.xlu0.b32.cont [2/16] %v1547, 128
        %1752 = vxpose.xlu0.b32.cont [3/16] 0.0, 128
        %1753 = vxpose.xlu0.b32.cont [4/16] 0.0, 128
        %1754 = vxpose.xlu0.b32.cont [5/16] 0.0, 128
        %1755 = vxpose.xlu0.b32.cont [6/16] 0.0, 128
        %1756 = vxpose.xlu0.b32.cont [7/16] 0.0, 128
        %1757 = vxpose.xlu0.b32.cont [8/16] 0.0, 128
        %1758 = vxpose.xlu0.b32.cont [9/16] 0.0, 128
        %1759 = vxpose.xlu0.b32.cont [10/16] 0.0, 128
        %1760 = vxpose.xlu0.b32.cont [11/16] 0.0, 128
        %1761 = vxpose.xlu0.b32.cont [12/16] 0.0, 128
        %1762 = vxpose.xlu0.b32.cont [13/16] 0.0, 128
        %1763 = vxpose.xlu0.b32.cont [14/16] 0.0, 128
        %1764 = vxpose.xlu0.b32.cont [15/16] 0.0, 128
        %1765 = vxpose.xlu0.b32.end [16/16] 0.0, 128
        %v1766 = vpop.trf.xlu0
        %v1767 = vpop.trf.xlu0
        %v1768 = vpop.trf.xlu0
        %v1769 = vpop.trf.xlu0
        %v1770 = vpop.trf.xlu0
        %v1771 = vpop.trf.xlu0
        %v1772 = vpop.trf.xlu0
        %v1773 = vpop.trf.xlu0
        %v1774 = vpop.trf.xlu0
        %v1775 = vpop.trf.xlu0
        %v1776 = vpop.trf.xlu0
        %v1777 = vpop.trf.xlu0
        %v1778 = vpop.trf.xlu0
        %v1779 = vpop.trf.xlu0
        %v1780 = vpop.trf.xlu0
        %v1781 = vpop.trf.xlu0
        %1782 = vxpose.xlu0.b32.start [1/16] %v1626, 128
        %1783 = vxpose.xlu0.b32.cont [2/16] %v1631, 128
        %1784 = vxpose.xlu0.b32.cont [3/16] 0.0, 128
        %1785 = vxpose.xlu0.b32.cont [4/16] 0.0, 128
        %1786 = vxpose.xlu0.b32.cont [5/16] 0.0, 128
        %1787 = vxpose.xlu0.b32.cont [6/16] 0.0, 128
        %1788 = vxpose.xlu0.b32.cont [7/16] 0.0, 128
        %1789 = vxpose.xlu0.b32.cont [8/16] 0.0, 128
        %1790 = vxpose.xlu0.b32.cont [9/16] 0.0, 128
        %1791 = vxpose.xlu0.b32.cont [10/16] 0.0, 128
        %1792 = vxpose.xlu0.b32.cont [11/16] 0.0, 128
        %1793 = vxpose.xlu0.b32.cont [12/16] 0.0, 128
        %1794 = vxpose.xlu0.b32.cont [13/16] 0.0, 128
        %1795 = vxpose.xlu0.b32.cont [14/16] 0.0, 128
        %1796 = vxpose.xlu0.b32.cont [15/16] 0.0, 128
        %1797 = vxpose.xlu0.b32.end [16/16] 0.0, 128
        %v1798 = vpop.trf.xlu0
        %v1799 = vpop.trf.xlu0
        %v1800 = vpop.trf.xlu0
        %v1801 = vpop.trf.xlu0
        %v1802 = vpop.trf.xlu0
        %v1803 = vpop.trf.xlu0
        %v1804 = vpop.trf.xlu0
        %v1805 = vpop.trf.xlu0
        %v1806 = vpop.trf.xlu0
        %v1807 = vpop.trf.xlu0
        %v1808 = vpop.trf.xlu0
        %v1809 = vpop.trf.xlu0
        %v1810 = vpop.trf.xlu0
        %v1811 = vpop.trf.xlu0
        %v1812 = vpop.trf.xlu0
        %v1813 = vpop.trf.xlu0
        %1814 = vxpose.xlu0.b32.start [1/16] %v1710, 128
        %1815 = vxpose.xlu0.b32.cont [2/16] %v1715, 128
        %1816 = vxpose.xlu0.b32.cont [3/16] 0.0, 128
        %1817 = vxpose.xlu0.b32.cont [4/16] 0.0, 128
        %1818 = vxpose.xlu0.b32.cont [5/16] 0.0, 128
        %1819 = vxpose.xlu0.b32.cont [6/16] 0.0, 128
        %1820 = vxpose.xlu0.b32.cont [7/16] 0.0, 128
        %1821 = vxpose.xlu0.b32.cont [8/16] 0.0, 128
        %1822 = vxpose.xlu0.b32.cont [9/16] 0.0, 128
        %1823 = vxpose.xlu0.b32.cont [10/16] 0.0, 128
        %1824 = vxpose.xlu0.b32.cont [11/16] 0.0, 128
        %1825 = vxpose.xlu0.b32.cont [12/16] 0.0, 128
        %1826 = vxpose.xlu0.b32.cont [13/16] 0.0, 128
        %1827 = vxpose.xlu0.b32.cont [14/16] 0.0, 128
        %1828 = vxpose.xlu0.b32.cont [15/16] 0.0, 128
        %1829 = vxpose.xlu0.b32.end [16/16] 0.0, 128
        %v1830 = vpop.trf.xlu0
        %v1831 = vpop.trf.xlu0
        %v1832 = vpop.trf.xlu0
        %v1833 = vpop.trf.xlu0
        %v1834 = vpop.trf.xlu0
        %v1835 = vpop.trf.xlu0
        %v1836 = vpop.trf.xlu0
        %v1837 = vpop.trf.xlu0
        %v1838 = vpop.trf.xlu0
        %v1839 = vpop.trf.xlu0
        %v1840 = vpop.trf.xlu0
        %v1841 = vpop.trf.xlu0
        %v1842 = vpop.trf.xlu0
        %v1843 = vpop.trf.xlu0
        %v1844 = vpop.trf.xlu0
        %v1845 = vpop.trf.xlu0
        %v1846 = vcombine.low %v1734, %v1798
        %v1847 = vcombine.high %v1734, %v1798
        %v1849 = vunpack.c.l.s4 1983009808
        %v1850 = vunpack.c.0.s8 %v1849
        %v1851 = vlaneseq
        %v1852 = vshrl.u32 %v1851, 7
        %v1853 = vsub.s32 %v1850, %v1852
        %v1854 = vrot.slane %v1846, %v1853
        %v1856 = vunpack.c.l.s4 1983009808
        %v1857 = vunpack.c.0.s8 %v1856
        %v1858 = vlaneseq
        %v1859 = vshrl.u32 %v1858, 7
        %v1860 = vsub.s32 %v1857, %v1859
        %v1861 = vrot.slane %v1847, %v1860
        %v1862 = vcombine.low %v1766, %v1830
        %v1863 = vcombine.high %v1766, %v1830
        %v1865 = vunpack.c.l.s4 1983009808
        %v1866 = vunpack.c.0.s8 %v1865
        %v1867 = vlaneseq
        %v1868 = vshrl.u32 %v1867, 7
        %v1869 = vsub.s32 %v1866, %v1868
        %v1870 = vrot.slane %v1862, %v1869
        %v1872 = vunpack.c.l.s4 1983009808
        %v1873 = vunpack.c.0.s8 %v1872
        %v1874 = vlaneseq
        %v1875 = vshrl.u32 %v1874, 7
        %v1876 = vsub.s32 %v1873, %v1875
        %v1877 = vrot.slane %v1863, %v1876
        %v1878 = vcombine.low %v1854, %v1870
        %v1879 = vcombine.high %v1854, %v1870
        %v1881 = vunpack.c.l.s4 1934713408
        %v1882 = vunpack.c.0.s8 %v1881
        %v1883 = vlaneseq
        %v1884 = vshrl.u32 %v1883, 7
        %v1885 = vsub.s32 %v1882, %v1884
        %v1886 = vrot.slane %v1878, %v1885
        %v1888 = vunpack.c.l.s4 1934713408
        %v1889 = vunpack.c.0.s8 %v1888
        %v1890 = vlaneseq
        %v1891 = vshrl.u32 %v1890, 7
        %v1892 = vsub.s32 %v1889, %v1891
        %v1893 = vrot.slane %v1879, %v1892
        %v1894 = vcombine.low %v1861, %v1877
        %v1895 = vcombine.high %v1861, %v1877
        %v1897 = vunpack.c.l.s4 1934713408
        %v1898 = vunpack.c.0.s8 %v1897
        %v1899 = vlaneseq
        %v1900 = vshrl.u32 %v1899, 7
        %v1901 = vsub.s32 %v1898, %v1900
        %v1902 = vrot.slane %v1894, %v1901
        %v1904 = vunpack.c.l.s4 1934713408
        %v1905 = vunpack.c.0.s8 %v1904
        %v1906 = vlaneseq
        %v1907 = vshrl.u32 %v1906, 7
        %v1908 = vsub.s32 %v1905, %v1907
        %v1909 = vrot.slane %v1895, %v1908
        %v1910 = vcombine.high %v1886, 0.0
        %v1911 = vcombine.high %v1893, 0.0
        %v1912 = vcombine.high %v1902, 0.0
        %v1913 = vcombine.high %v1909, 0.0
        %v1914 = vcombine.low %v1886, %v1893
        %v1916 = vunpack.c.l.s4 1983009808
        %v1917 = vunpack.c.0.s8 %v1916
        %v1918 = vlaneseq
        %v1919 = vshrl.u32 %v1918, 7
        %v1920 = vsub.s32 %v1917, %v1919
        %v1921 = vrot.slane %v1914, %v1920
        %v1922 = vcombine.low %v1910, %v1911
        %v1924 = vunpack.c.l.s4 1983009808
        %v1925 = vunpack.c.0.s8 %v1924
        %v1926 = vlaneseq
        %v1927 = vshrl.u32 %v1926, 7
        %v1928 = vsub.s32 %v1925, %v1927
        %v1929 = vrot.slane %v1922, %v1928
        %v1930 = vcombine.low %v1902, %v1909
        %v1932 = vunpack.c.l.s4 1983009808
        %v1933 = vunpack.c.0.s8 %v1932
        %v1934 = vlaneseq
        %v1935 = vshrl.u32 %v1934, 7
        %v1936 = vsub.s32 %v1933, %v1935
        %v1937 = vrot.slane %v1930, %v1936
        %v1938 = vcombine.low %v1912, %v1913
        %v1940 = vunpack.c.l.s4 1983009808
        %v1941 = vunpack.c.0.s8 %v1940
        %v1942 = vlaneseq
        %v1943 = vshrl.u32 %v1942, 7
        %v1944 = vsub.s32 %v1941, %v1943
        %v1945 = vrot.slane %v1938, %v1944
        %v1946 = vcombine.low %v1921, %v1929
        %v1947 = vcombine.high %v1921, %v1929
        %v1949 = vunpack.c.l.s4 1934713408
        %v1950 = vunpack.c.0.s8 %v1949
        %v1951 = vlaneseq
        %v1952 = vshrl.u32 %v1951, 7
        %v1953 = vsub.s32 %v1950, %v1952
        %v1954 = vrot.slane %v1946, %v1953
        %v1956 = vunpack.c.l.s4 1934713408
        %v1957 = vunpack.c.0.s8 %v1956
        %v1958 = vlaneseq
        %v1959 = vshrl.u32 %v1958, 7
        %v1960 = vsub.s32 %v1957, %v1959
        %v1961 = vrot.slane %v1947, %v1960
        %v1962 = vcombine.low %v1937, %v1945
        %v1963 = vcombine.high %v1937, %v1945
        %v1965 = vunpack.c.l.s4 1934713408
        %v1966 = vunpack.c.0.s8 %v1965
        %v1967 = vlaneseq
        %v1968 = vshrl.u32 %v1967, 7
        %v1969 = vsub.s32 %v1966, %v1968
        %v1970 = vrot.slane %v1962, %v1969
        %v1972 = vunpack.c.l.s4 1934713408
        %v1973 = vunpack.c.0.s8 %v1972
        %v1974 = vlaneseq
        %v1975 = vshrl.u32 %v1974, 7
        %v1976 = vsub.s32 %v1973, %v1975
        %v1977 = vrot.slane %v1963, %v1976
        %v1978 = vcombine.low %v1954, %v1970
        %v1979 = vcombine.high %v1954, %v1970
        %v1980 = vcombine.low %v1961, %v1977
        %v1981 = vcombine.high %v1961, %v1977
        %1983 = vrot.lane.b32.xlu0 %v1979, 16
        %v1984 = vpop.permute.xlu0 %1983
        %1987 = vrot.lane.b32.xlu0 %v1980, 32
        %v1988 = vpop.permute.xlu0 %1987
        %1991 = vrot.lane.b32.xlu0 %v1981, 48
        %v1992 = vpop.permute.xlu0 %1991
        %v1994 = vsel %vm883, %v1978, %v1984
        %vm1995 = vcmask 261120
        %v1996 = vsel %vm1995, %v1994, %v1988
        %vm1997 = vcmask 392192
        %v1998 = vsel %vm1997, %v1996, %v1992
        %v1999 = vld [vmem:[#allocation13] sm:$0xff]
        %v2000 = vld [vmem:[#allocation13 + $0x8] sm:$0xff]
        %v2001 = vld [vmem:[#allocation13 + $0x10] sm:$0xff]
        %v2002 = vld [vmem:[#allocation13 + $0x18] sm:$0xff]
        %v2003 = vld [vmem:[#allocation13 + $0x20] sm:$0xff]
        %v2004 = vld [vmem:[#allocation13 + $0x28] sm:$0xff]
        %v2005 = vld [vmem:[#allocation13 + $0x30] sm:$0xff]
        %v2006 = vld [vmem:[#allocation13 + $0x38] sm:$0xff]
        %v2007 = vld [vmem:[#allocation14] sm:$0x1]
        %v2009 = vlaneseq
        %v2010 = vshrl.u32 %v2009, 7
        %v2011 = vsub.s32 0, %v2010
        %v2012 = vrot.slane %v2007, %v2011
        %v2015 = vsel %vm557, %v1998, 0
        %2017 = vmatprep.subr.mxu0 0.0
        %2018 = vmatpush1.msra.mxu0 %v1999
        %2019 = vmatprep.subr.mxu0 0.0
        %2020 = vmatpush1.msra.mxu0 %v2000
        %2021 = vmatprep.subr.mxu0 0.0
        %2022 = vmatpush1.msra.mxu0 %v2001
        %2023 = vmatprep.subr.mxu0 0.0
        %2024 = vmatpush1.msra.mxu0 %v2002
        %2025 = vmatprep.subr.mxu0 0.0
        %2026 = vmatpush1.msra.mxu0 %v2003
        %2027 = vmatprep.subr.mxu0 0.0
        %2028 = vmatpush1.msra.mxu0 %v2004
        %2029 = vmatprep.subr.mxu0 0.0
        %2030 = vmatpush1.msra.mxu0 %v2005
        %2031 = vmatprep.subr.mxu0 0.0
        %2032 = vmatpush1.msra.mxu0 %v2006
        %2033 = vmatprep.subr.mxu0 0.0
        %2034 = vmatpush1.msra.mxu0 0.0
        %2035 = vmatprep.subr.mxu0 0.0
        %2036 = vmatpush1.msra.mxu0 0.0
        %2037 = vmatprep.subr.mxu0 0.0
        %2038 = vmatpush1.msra.mxu0 0.0
        %2039 = vmatprep.subr.mxu0 0.0
        %2040 = vmatpush1.msra.mxu0 0.0
        %2041 = vmatprep.subr.mxu0 0.0
        %2042 = vmatpush1.msra.mxu0 0.0
        %2043 = vmatprep.subr.mxu0 0.0
        %2044 = vmatpush1.msra.mxu0 0.0
        %2045 = vmatprep.subr.mxu0 0.0
        %2046 = vmatpush1.msra.mxu0 0.0
        %2047 = vmatprep.subr.mxu0 0.0
        %2048 = vmatpush1.msra.mxu0 0.0
        %2049 = vmatprep.subr.mxu0 0.0
        %2050 = vmatpush1.msra.mxu0 0.0
        %2051 = vmatprep.subr.mxu0 0.0
        %2052 = vmatpush1.msra.mxu0 0.0
        %2053 = vmatprep.subr.mxu0 0.0
        %2054 = vmatpush1.msra.mxu0 0.0
        %2055 = vmatprep.subr.mxu0 0.0
        %2056 = vmatpush1.msra.mxu0 0.0
        %2057 = vmatprep.subr.mxu0 0.0
        %2058 = vmatpush1.msra.mxu0 0.0
        %2059 = vmatprep.subr.mxu0 0.0
        %2060 = vmatpush1.msra.mxu0 0.0
        %2061 = vmatprep.subr.mxu0 0.0
        %2062 = vmatpush1.msra.mxu0 0.0
        %2063 = vmatprep.subr.mxu0 0.0
        %2064 = vmatpush1.msra.mxu0 0.0
        %2065 = vmatprep.subr.mxu0 0.0
        %2066 = vmatpush1.msra.mxu0 0.0
        %2067 = vmatprep.subr.mxu0 0.0
        %2068 = vmatpush1.msra.mxu0 0.0
        %2069 = vmatprep.subr.mxu0 0.0
        %2070 = vmatpush1.msra.mxu0 0.0
        %2071 = vmatprep.subr.mxu0 0.0
        %2072 = vmatpush1.msra.mxu0 0.0
        %2073 = vmatprep.subr.mxu0 0.0
        %2074 = vmatpush1.msra.mxu0 0.0
        %2075 = vmatprep.subr.mxu0 0.0
        %2076 = vmatpush1.msra.mxu0 0.0
        %2077 = vmatprep.subr.mxu0 0.0
        %2078 = vmatpush1.msra.mxu0 0.0
        %2079 = vmatprep.subr.mxu0 0.0
        %2080 = vmatpush1.msra.mxu0 0.0
        %2081 = vmatprep.mubr.f32.mxu0 0.0
        %2082 = vmatmul.mubr.f32.gmra.mrb[0].mxu0 %v2015
        %v2083 = vpop.f32.mrb[0].mxu0
        %v2084 = vadd.f32 %v2012, %v2083
        %v2085 = vpop.f32.mrb[0].mxu0
        %2086 = vdwg.mxu0
        %v2087 = vadd.f32 %v2084, %v539
        %v2088 = vld [vmem:[#allocation16] sm:$0x1]
        %v2089 = vld [vmem:[#allocation17] sm:$0x1]
        %v2090 = vsel %vm557, %v2087, 0.0
        %2091 = vadd.xlane.f32.xlu0 %v2090
        %v2092 = vpop.xlane.xlu0 %2091
        %v2093 = vrcp.pop 64.0
        %v2094 = vmul.f32 %v2092, %v2093
        %v2095 = vsub.f32 %v2087, %v2094
        %v2096 = vmul.f32 %v2095, %v2095
        %v2097 = vsel %vm557, %v2096, 0.0
        %2098 = vadd.xlane.f32.xlu0 %v2097
        %v2099 = vpop.xlane.xlu0 %2098
        %v2100 = vmul.f32 %v2099, %v2093
        %v2101 = vadd.f32 %v2100, 1e-05
        %v2102 = vrsqrt.pop %v2101
        %v2103 = vmul.f32 %v2095, %v2102
        %v2105 = vlaneseq
        %v2106 = vshrl.u32 %v2105, 7
        %v2107 = vsub.s32 0, %v2106
        %v2108 = vrot.slane %v2088, %v2107
        %v2110 = vmul.f32 %v2103, %v2108
        %v2112 = vlaneseq
        %v2113 = vshrl.u32 %v2112, 7
        %v2114 = vsub.s32 0, %v2113
        %v2115 = vrot.slane %v2089, %v2114
        %v2117 = vadd.f32 %v2110, %v2115
        %2118 = vst.msk [vmem:[%s538] sm:$0xff] %vm557, %v2117
        %s2119 = sand.u32 %s278, 1
        %s2120 = scalar_lea.sflag [#allocation4], %s2119
        %s2121 = sand.u32 %s278, 1
        %s2122 = smul.addr %s2121, 8
        %s2123 = scalar_lea.vmem [#allocation19], %s2122
        // Predicated region
        $region101: #{decoder_layer.3} parent=59 // pred_check
          %p2124 = pneg %p288
        $region102: #{decoder_layer.3} parent=59 // pred_check_branch
          %2126 = sbr.rel (%p2124) target = $region104
        $region103: #{decoder_layer.3} parent=59 // pred_region
          %s2128 = ssub.s32 128, 128
          %2129 = vsyncadd %s2120, %s2128
          %s2130 = smul.addr %s38, 2
          %s2131 = sadd.s32 %s39, %s2130
          %s2132 = smul.addr %s2131, 128
          %s2133 = scalar_lea.hbm %s10, %s2132
          %s2135 = sshll.u32 %s2123, 4
          %s2136 = int_to_ptr.vmem [resolvable:$true] %s2135
          %2138 = dma.vmem_to_hbm [thread:$0]  %s2136, 128, %s2133, %s2120
        $region104: #{decoder_layer.3} parent=59 // pred_fallthru
          _
      $region60: #{decoder_layer.3} parent=5 // pred_fallthru
        _
      %p2139 = scmp.le.s32.totalorder 2, %s29
      // Predicated region
      $region105: #{decoder_layer.3} parent=5 // pred_check
        %p2140 = pneg %p2139
      $region106: #{decoder_layer.3} parent=5 // pred_check_branch
        %2142 = sbr.rel (%p2140) target = $region108
      $region107: #{decoder_layer.3} parent=5 // pred_region
        %s2143 = ssub.s32 %s29, 2
        // Predicated region
        $region109: #{decoder_layer.3} parent=107 // pred_check
          %p2144 = pneg %p294
        $region110: #{decoder_layer.3} parent=107 // pred_check_branch
          %2146 = sbr.rel (%p2144) target = $region112
        $region111: #{decoder_layer.3} parent=107 // pred_region
          %s2147 = sand.u32 %s279, 1
          %s2148 = scalar_lea.sflag [#allocation4], %s2147
          %s2149 = sand.u32 %s279, 1
          %s2150 = smul.addr %s2149, 8
          %s2151 = scalar_lea.vmem [#allocation19], %s2150
          %2152 = dma.done %s2148, 128
        $region112: #{decoder_layer.3} parent=107 // pred_fallthru
          _
      $region108: #{decoder_layer.3} parent=5 // pred_fallthru
        _
    $region6: #{decoder_layer.3} parent=1 // loop_footer
      %s33 = sadd.s32 1, %s29
    $region7: #{decoder_layer.3} parent=1 // loop_footer_branch
      %28 = sbr.rel target = $region3
    $region8: #{decoder_layer.3} parent=1 // loop_exit
      _
    %2153 = vsyncpa [#allocation3], 1
    %s2154 = scalar_lea.sflag [#allocation3], 1
    %2155 = vsyncpa %s2154, 1
    %2156 = vsyncpa [#allocation6], 1
    %s2157 = scalar_lea.sflag [#allocation6], 1
    %2158 = vsyncpa %s2157, 1
    %2159 = vsyncpa [#allocation9], 1
    %2160 = vsyncpa [#allocation12], 1
    %2161 = vsyncpa [#allocation15], 1
    %2162 = vsyncpa [#allocation18], 1
    %2163 = vsyncpa [#allocation4], 1
    %s2164 = scalar_lea.sflag [#allocation4], 1
    %2165 = vsyncpa %s2164, 1

// kernel: decoder_layer.4
$region0: #{decoder_layer.4}
  #allocation0 [shape = 'u32[]', space=smem, size = 0x4, offset = 0x4, fixed_abs, tag = 'smem constant byte address 0x4 - core index']
  #allocation1 [shape = 'u32[144,128]{1,0:T(1,128)}', space=vmem, size = 0x12000, scoped, tag = 'internal scratch']
  %s0 = inlined_call_operand.hbm [shape: f32[2,16,64], index: 0, kind: input, shape index: {}]
  %s1 = inlined_call_operand.hbm [shape: f32[2,16,64], index: 1, kind: input, shape index: {}]
  %s2 = inlined_call_operand.hbm [shape: f32[64,64], index: 2, kind: input, shape index: {}]
  %s3 = inlined_call_operand.hbm [shape: f32[1,64], index: 3, kind: input, shape index: {}]
  %s4 = inlined_call_operand.hbm [shape: f32[64,128], index: 4, kind: input, shape index: {}]
  %s5 = inlined_call_operand.hbm [shape: f32[1,128], index: 5, kind: input, shape index: {}]
  %s6 = inlined_call_operand.hbm [shape: f32[64,64], index: 6, kind: input, shape index: {}]
  %s7 = inlined_call_operand.hbm [shape: f32[1,64], index: 7, kind: input, shape index: {}]
  %s8 = inlined_call_operand.hbm [shape: f32[1,64], index: 8, kind: input, shape index: {}]
  %s9 = inlined_call_operand.hbm [shape: f32[1,64], index: 9, kind: input, shape index: {}]
  %s10 = inlined_call_operand.hbm [shape: f32[2,16,64], index: 10, kind: output, shape index: {}]
  %s11 = sld [smem:[#allocation0]]
  $region113: #{decoder_layer.4} parent=0
    _
  %s13 = ssub.s32 1, %s11
  %s14 = scalar_select 0, %s13, %s11
  $region1: #{decoder_layer.4} parent=0
    #allocation2 [shape = 'u8[8192]{0}', space=vmem, size = 0x2000, scoped, tag = 'input window, operand 0']
    #allocation3 [shape = 's32[2]{0}', space=sflag, size = 0x8, scoped, tag = 'scoped memory for decoder_layer.4']
    #allocation4 [shape = 's32[2]{0}', space=sflag, size = 0x8, scoped, tag = 'scoped memory for decoder_layer.4']
    #allocation5 [shape = 'u8[16384]{0}', space=vmem, size = 0x4000, scoped, tag = 'input window, operand 1']
    #allocation6 [shape = 's32[2]{0}', space=sflag, size = 0x8, scoped, tag = 'scoped memory for decoder_layer.4']
    #allocation7 [shape = 'u8[32768]{0}', space=vmem, size = 0x8000, scoped, tag = 'input window, operand 2, single buffered']
    #allocation8 [shape = 'u8[512]{0}', space=vmem, size = 0x400, scoped, tag = 'input window, operand 3, single buffered']
    #allocation9 [shape = 's32[1]{0}', space=sflag, size = 0x4, scoped, tag = 'scoped memory for decoder_layer.4']
    #allocation10 [shape = 'u8[32768]{0}', space=vmem, size = 0x8000, scoped, tag = 'input window, operand 4, single buffered']
    #allocation11 [shape = 'u8[512]{0}', space=vmem, size = 0x400, scoped, tag = 'input window, operand 5, single buffered']
    #allocation12 [shape = 's32[1]{0}', space=sflag, size = 0x4, scoped, tag = 'scoped memory for decoder_layer.4']
    #allocation13 [shape = 'u8[32768]{0}', space=vmem, size = 0x8000, scoped, tag = 'input window, operand 6, single buffered']
    #allocation14 [shape = 'u8[512]{0}', space=vmem, size = 0x400, scoped, tag = 'input window, operand 7, single buffered']
    #allocation15 [shape = 's32[1]{0}', space=sflag, size = 0x4, scoped, tag = 'scoped memory for decoder_layer.4']
    #allocation16 [shape = 'u8[512]{0}', space=vmem, size = 0x400, scoped, tag = 'input window, operand 8, single buffered']
    #allocation17 [shape = 'u8[512]{0}', space=vmem, size = 0x400, scoped, tag = 'input window, operand 9, single buffered']
    #allocation18 [shape = 's32[1]{0}', space=sflag, size = 0x4, scoped, tag = 'scoped memory for decoder_layer.4']
    #allocation19 [shape = 'u8[8192]{0}', space=vmem, size = 0x2000, scoped, tag = 'output window, operand 0']
    %15 = vsyncpa [#allocation3], 0
    %s16 = scalar_lea.sflag [#allocation3], 1
    %17 = vsyncpa %s16, 0
    %18 = vsyncpa [#allocation6], 0
    %s19 = scalar_lea.sflag [#allocation6], 1
    %20 = vsyncpa %s19, 0
    %21 = vsyncpa [#allocation9], 0
    %22 = vsyncpa [#allocation12], 0
    %23 = vsyncpa [#allocation15], 0
    %24 = vsyncpa [#allocation18], 0
    %25 = vsyncpa [#allocation4], 0
    %s26 = scalar_lea.sflag [#allocation4], 1
    %27 = vsyncpa %s26, 0
    loop: start=0, step=1, limit=6
    $region2: #{decoder_layer.4} parent=1 // loop_pre_header
      _
    $region3: #{decoder_layer.4} parent=1 // loop_header
      %s29 = sphi 0, %s33
      %p30 = scmp.ge.s32.totalorder %s29, 6
      %s36 = sphi 0, %s48
      %s37 = sphi 0, %s44
      %s38 = sphi 0, %s36
      %s39 = sphi 0, %s37
      %s40 = sphi 0, %s38
      %s41 = sphi 0, %s39
      %s53 = sphi 0, %s55
      %s56 = sphi 0, %s53
      %s57 = sphi 0, %s56
      %s73 = sphi 0, %s57
      %s79 = sphi 0, %s81
      %s82 = sphi 0, %s79
      %s83 = sphi 0, %s82
      %s99 = sphi 0, %s83
      %s103 = sphi 0, %s103
      %s105 = sphi 0, %s103
      %s106 = sphi 0, %s105
      %s120 = sphi 0, %s106
      %s124 = sphi 0, %s124
      %s126 = sphi 0, %s124
      %s127 = sphi 0, %s126
      %s141 = sphi 0, %s127
      %s145 = sphi 0, %s145
      %s147 = sphi 0, %s145
      %s148 = sphi 0, %s147
      %s162 = sphi 0, %s148
      %s166 = sphi 0, %s166
      %s168 = sphi 0, %s166
      %s169 = sphi 0, %s168
      %s183 = sphi 0, %s169
      %s187 = sphi 0, %s187
      %s189 = sphi 0, %s187
      %s190 = sphi 0, %s189
      %s204 = sphi 0, %s190
      %s208 = sphi 0, %s208
      %s210 = sphi 0, %s208
      %s211 = sphi 0, %s210
      %s225 = sphi 0, %s211
      %s229 = sphi 0, %s229
      %s231 = sphi 0, %s229
      %s232 = sphi 0, %s231
      %s246 = sphi 0, %s232
      %s250 = sphi 0, %s250
      %s252 = sphi 0, %s250
      %s253 = sphi 0, %s252
      %s267 = sphi 0, %s253
      %s275 = sphi 0, %s277
      %s278 = sphi 0, %s275
      %s279 = sphi 0, %s278
      %s295 = sphi 0, %s279
    $region4: #{decoder_layer.4} parent=1 // loop_header_branch
      %32 = sbr.rel (%p30) target = $region8
    $region5: #{decoder_layer.4} parent=1 // loop_body
      %s34 = ssub.s32 %s29, 1
      %s35 = ssub.s32 %s29, 2
      %s42 = sadd.s32 1, %s37
      %p43 = scmp.ge.s32.totalorder %s42, 2
      %s44 = scalar_select %p43, 0, %s42
      %s45 = sadd.s32 1, %s36
      %s46 = scalar_select %p43, %s45, %s36
      %p47 = scmp.ge.s32.totalorder %s46, 2
      %s48 = scalar_select %p47, 0, %s46
      %s49 = ssub.s32 %s36, %s48
      %s50 = ssub.s32 %s37, %s44
      %s51 = sor.u32 %s49, %s50
      %p52 = scmp.eq.s32.totalorder %s51, 0
      %s54 = sadd.s32 %s53, 1
      %s55 = scalar_select %p52, %s53, %s54
      %p58 = pneg %p52
      %p59 = scmp.eq.s32.totalorder %s29, 3
      %p60 = por %p58, %p59
      %p61 = scmp.ne.s32.totalorder %s53, %s56
      %p62 = scmp.eq.s32.totalorder %s29, 0
      %p63 = por %p61, %p62
      %p64 = scmp.ne.s32.totalorder %s53, %s56
      %p65 = scmp.eq.s32.totalorder %s34, 3
      %p66 = por %p64, %p65
      %p67 = scmp.ne.s32.totalorder %s56, %s57
      %p68 = scmp.eq.s32.totalorder %s34, 0
      %p69 = por %p67, %p68
      %p70 = scmp.ne.s32.totalorder %s56, %s57
      %p71 = scmp.eq.s32.totalorder %s35, 3
      %p72 = por %p70, %p71
      %p74 = scmp.ne.s32.totalorder %s57, %s73
      %p75 = scmp.eq.s32.totalorder %s35, 0
      %p76 = por %p74, %p75
      %s77 = ssub.s32 %s36, %s48
      %p78 = scmp.eq.s32.totalorder %s77, 0
      %s80 = sadd.s32 %s79, 1
      %s81 = scalar_select %p78, %s79, %s80
      %p84 = pneg %p78
      %p85 = scmp.eq.s32.totalorder %s29, 3
      %p86 = por %p84, %p85
      %p87 = scmp.ne.s32.totalorder %s79, %s82
      %p88 = scmp.eq.s32.totalorder %s29, 0
      %p89 = por %p87, %p88
      %p90 = scmp.ne.s32.totalorder %s79, %s82
      %p91 = scmp.eq.s32.totalorder %s34, 3
      %p92 = por %p90, %p91
      %p93 = scmp.ne.s32.totalorder %s82, %s83
      %p94 = scmp.eq.s32.totalorder %s34, 0
      %p95 = por %p93, %p94
      %p96 = scmp.ne.s32.totalorder %s82, %s83
      %p97 = scmp.eq.s32.totalorder %s35, 3
      %p98 = por %p96, %p97
      %p100 = scmp.ne.s32.totalorder %s83, %s99
      %p101 = scmp.eq.s32.totalorder %s35, 0
      %p102 = por %p100, %p101
      %s104 = sadd.s32 %s103, 1
      %p107 = scmp.eq.s32.totalorder %s29, 3
      %p108 = scmp.ne.s32.totalorder %s103, %s105
      %p109 = scmp.eq.s32.totalorder %s29, 0
      %p110 = por %p108, %p109
      %p111 = scmp.ne.s32.totalorder %s103, %s105
      %p112 = scmp.eq.s32.totalorder %s34, 3
      %p113 = por %p111, %p112
      %p114 = scmp.ne.s32.totalorder %s105, %s106
      %p115 = scmp.eq.s32.totalorder %s34, 0
      %p116 = por %p114, %p115
      %p117 = scmp.ne.s32.totalorder %s105, %s106
      %p118 = scmp.eq.s32.totalorder %s35, 3
      %p119 = por %p117, %p118
      %p121 = scmp.ne.s32.totalorder %s106, %s120
      %p122 = scmp.eq.s32.totalorder %s35, 0
      %p123 = por %p121, %p122
      %s125 = sadd.s32 %s124, 1
      %p128 = scmp.eq.s32.totalorder %s29, 3
      %p129 = scmp.ne.s32.totalorder %s124, %s126
      %p130 = scmp.eq.s32.totalorder %s29, 0
      %p131 = por %p129, %p130
      %p132 = scmp.ne.s32.totalorder %s124, %s126
      %p133 = scmp.eq.s32.totalorder %s34, 3
      %p134 = por %p132, %p133
      %p135 = scmp.ne.s32.totalorder %s126, %s127
      %p136 = scmp.eq.s32.totalorder %s34, 0
      %p137 = por %p135, %p136
      %p138 = scmp.ne.s32.totalorder %s126, %s127
      %p139 = scmp.eq.s32.totalorder %s35, 3
      %p140 = por %p138, %p139
      %p142 = scmp.ne.s32.totalorder %s127, %s141
      %p143 = scmp.eq.s32.totalorder %s35, 0
      %p144 = por %p142, %p143
      %s146 = sadd.s32 %s145, 1
      %p149 = scmp.eq.s32.totalorder %s29, 3
      %p150 = scmp.ne.s32.totalorder %s145, %s147
      %p151 = scmp.eq.s32.totalorder %s29, 0
      %p152 = por %p150, %p151
      %p153 = scmp.ne.s32.totalorder %s145, %s147
      %p154 = scmp.eq.s32.totalorder %s34, 3
      %p155 = por %p153, %p154
      %p156 = scmp.ne.s32.totalorder %s147, %s148
      %p157 = scmp.eq.s32.totalorder %s34, 0
      %p158 = por %p156, %p157
      %p159 = scmp.ne.s32.totalorder %s147, %s148
      %p160 = scmp.eq.s32.totalorder %s35, 3
      %p161 = por %p159, %p160
      %p163 = scmp.ne.s32.totalorder %s148, %s162
      %p164 = scmp.eq.s32.totalorder %s35, 0
      %p165 = por %p163, %p164
      %s167 = sadd.s32 %s166, 1
      %p170 = scmp.eq.s32.totalorder %s29, 3
      %p171 = scmp.ne.s32.totalorder %s166, %s168
      %p172 = scmp.eq.s32.totalorder %s29, 0
      %p173 = por %p171, %p172
      %p174 = scmp.ne.s32.totalorder %s166, %s168
      %p175 = scmp.eq.s32.totalorder %s34, 3
      %p176 = por %p174, %p175
      %p177 = scmp.ne.s32.totalorder %s168, %s169
      %p178 = scmp.eq.s32.totalorder %s34, 0
      %p179 = por %p177, %p178
      %p180 = scmp.ne.s32.totalorder %s168, %s169
      %p181 = scmp.eq.s32.totalorder %s35, 3
      %p182 = por %p180, %p181
      %p184 = scmp.ne.s32.totalorder %s169, %s183
      %p185 = scmp.eq.s32.totalorder %s35, 0
      %p186 = por %p184, %p185
      %s188 = sadd.s32 %s187, 1
      %p191 = scmp.eq.s32.totalorder %s29, 3
      %p192 = scmp.ne.s32.totalorder %s187, %s189
      %p193 = scmp.eq.s32.totalorder %s29, 0
      %p194 = por %p192, %p193
      %p195 = scmp.ne.s32.totalorder %s187, %s189
      %p196 = scmp.eq.s32.totalorder %s34, 3
      %p197 = por %p195, %p196
      %p198 = scmp.ne.s32.totalorder %s189, %s190
      %p199 = scmp.eq.s32.totalorder %s34, 0
      %p200 = por %p198, %p199
      %p201 = scmp.ne.s32.totalorder %s189, %s190
      %p202 = scmp.eq.s32.totalorder %s35, 3
      %p203 = por %p201, %p202
      %p205 = scmp.ne.s32.totalorder %s190, %s204
      %p206 = scmp.eq.s32.totalorder %s35, 0
      %p207 = por %p205, %p206
      %s209 = sadd.s32 %s208, 1
      %p212 = scmp.eq.s32.totalorder %s29, 3
      %p213 = scmp.ne.s32.totalorder %s208, %s210
      %p214 = scmp.eq.s32.totalorder %s29, 0
      %p215 = por %p213, %p214
      %p216 = scmp.ne.s32.totalorder %s208, %s210
      %p217 = scmp.eq.s32.totalorder %s34, 3
      %p218 = por %p216, %p217
      %p219 = scmp.ne.s32.totalorder %s210, %s211
      %p220 = scmp.eq.s32.totalorder %s34, 0
      %p221 = por %p219, %p220
      %p222 = scmp.ne.s32.totalorder %s210, %s211
      %p223 = scmp.eq.s32.totalorder %s35, 3
      %p224 = por %p222, %p223
      %p226 = scmp.ne.s32.totalorder %s211, %s225
      %p227 = scmp.eq.s32.totalorder %s35, 0
      %p228 = por %p226, %p227
      %s230 = sadd.s32 %s229, 1
      %p233 = scmp.eq.s32.totalorder %s29, 3
      %p234 = scmp.ne.s32.totalorder %s229, %s231
      %p235 = scmp.eq.s32.totalorder %s29, 0
      %p236 = por %p234, %p235
      %p237 = scmp.ne.s32.totalorder %s229, %s231
      %p238 = scmp.eq.s32.totalorder %s34, 3
      %p239 = por %p237, %p238
      %p240 = scmp.ne.s32.totalorder %s231, %s232
      %p241 = scmp.eq.s32.totalorder %s34, 0
      %p242 = por %p240, %p241
      %p243 = scmp.ne.s32.totalorder %s231, %s232
      %p244 = scmp.eq.s32.totalorder %s35, 3
      %p245 = por %p243, %p244
      %p247 = scmp.ne.s32.totalorder %s232, %s246
      %p248 = scmp.eq.s32.totalorder %s35, 0
      %p249 = por %p247, %p248
      %s251 = sadd.s32 %s250, 1
      %p254 = scmp.eq.s32.totalorder %s29, 3
      %p255 = scmp.ne.s32.totalorder %s250, %s252
      %p256 = scmp.eq.s32.totalorder %s29, 0
      %p257 = por %p255, %p256
      %p258 = scmp.ne.s32.totalorder %s250, %s252
      %p259 = scmp.eq.s32.totalorder %s34, 3
      %p260 = por %p258, %p259
      %p261 = scmp.ne.s32.totalorder %s252, %s253
      %p262 = scmp.eq.s32.totalorder %s34, 0
      %p263 = por %p261, %p262
      %p264 = scmp.ne.s32.totalorder %s252, %s253
      %p265 = scmp.eq.s32.totalorder %s35, 3
      %p266 = por %p264, %p265
      %p268 = scmp.ne.s32.totalorder %s253, %s267
      %p269 = scmp.eq.s32.totalorder %s35, 0
      %p270 = por %p268, %p269
      %s271 = ssub.s32 %s36, %s48
      %s272 = ssub.s32 %s37, %s44
      %s273 = sor.u32 %s271, %s272
      %p274 = scmp.eq.s32.totalorder %s273, 0
      %s276 = sadd.s32 %s275, 1
      %s277 = scalar_select %p274, %s275, %s276
      %p280 = pneg %p274
      %p281 = scmp.eq.s32.totalorder %s29, 3
      %p282 = por %p280, %p281
      %p283 = scmp.ne.s32.totalorder %s275, %s278
      %p284 = scmp.eq.s32.totalorder %s29, 0
      %p285 = por %p283, %p284
      %p286 = scmp.ne.s32.totalorder %s275, %s278
      %p287 = scmp.eq.s32.totalorder %s34, 3
      %p288 = por %p286, %p287
      %p289 = scmp.ne.s32.totalorder %s278, %s279
      %p290 = scmp.eq.s32.totalorder %s34, 0
      %p291 = por %p289, %p290
      %p292 = scmp.ne.s32.totalorder %s278, %s279
      %p293 = scmp.eq.s32.totalorder %s35, 3
      %p294 = por %p292, %p293
      %p296 = scmp.ne.s32.totalorder %s279, %s295
      %p297 = scmp.eq.s32.totalorder %s35, 0
      %p298 = por %p296, %p297
      %p299 = scmp.le.s32.totalorder 1, %s29
      %p300 = scmp.lt.s32.totalorder %s29, 5
      %p301 = pnand %p299, %p300
      %p302 = pneg %p301
      // Predicated region
      $region9: #{decoder_layer.4} parent=5 // pred_check
        _
      $region10: #{decoder_layer.4} parent=5 // pred_check_branch
        %304 = sbr.rel (%p301) target = $region12
      $region11: #{decoder_layer.4} parent=5 // pred_region
        %s305 = ssub.s32 %s29, 1
        // Predicated region
        $region13: #{decoder_layer.4} parent=11 // pred_check
          %p306 = pneg %p116
        $region14: #{decoder_layer.4} parent=11 // pred_check_branch
          %308 = sbr.rel (%p306) target = $region16
        $region15: #{decoder_layer.4} parent=11 // pred_region
          %s310 = ssub.s32 1024, 1024
          %311 = vsyncadd [#allocation6], %s310
          %s312 = sshll.u32 [#allocation7], 4
          %s313 = int_to_ptr.vmem [resolvable:$true] %s312
          %318 = dma.hbm_to_vmem [thread:$0]  %s2, 1024, %s313, [#allocation6], 128, 128, 8
        $region16: #{decoder_layer.4} parent=11 // pred_fallthru
          _
        // Predicated region
        $region17: #{decoder_layer.4} parent=11 // pred_check
          %p319 = pneg %p137
        $region18: #{decoder_layer.4} parent=11 // pred_check_branch
          %321 = sbr.rel (%p319) target = $region20
        $region19: #{decoder_layer.4} parent=11 // pred_region
          %s323 = ssub.s32 16, 16
          %324 = vsyncadd [#allocation9], %s323
          %s326 = sshll.u32 [#allocation8], 4
          %s327 = int_to_ptr.vmem [resolvable:$true] %s326
          %329 = dma.hbm_to_vmem [thread:$0]  %s3, 16, %s327, [#allocation9]
        $region20: #{decoder_layer.4} parent=11 // pred_fallthru
          _
        // Predicated region
        $region21: #{decoder_layer.4} parent=11 // pred_check
          %p330 = pneg %p158
        $region22: #{decoder_layer.4} parent=11 // pred_check_branch
          %332 = sbr.rel (%p330) target = $region24
        $region23: #{decoder_layer.4} parent=11 // pred_region
          %s334 = ssub.s32 1024, 1024
          %335 = vsyncadd [#allocation9], %s334
          %s336 = sshll.u32 [#allocation10], 4
          %s337 = int_to_ptr.vmem [resolvable:$true] %s336
          %342 = dma.hbm_to_vmem [thread:$0]  %s4, 1024, %s337, [#allocation9], 128, 128, 8
        $region24: #{decoder_layer.4} parent=11 // pred_fallthru
          _
        // Predicated region
        $region25: #{decoder_layer.4} parent=11 // pred_check
          %p343 = pneg %p179
        $region26: #{decoder_layer.4} parent=11 // pred_check_branch
          %345 = sbr.rel (%p343) target = $region28
        $region27: #{decoder_layer.4} parent=11 // pred_region
          %s347 = ssub.s32 16, 16
          %348 = vsyncadd [#allocation12], %s347
          %s350 = sshll.u32 [#allocation11], 4
          %s351 = int_to_ptr.vmem [resolvable:$true] %s350
          %353 = dma.hbm_to_vmem [thread:$0]  %s5, 16, %s351, [#allocation12]
        $region28: #{decoder_layer.4} parent=11 // pred_fallthru
          _
        // Predicated region
        $region29: #{decoder_layer.4} parent=11 // pred_check
          %p354 = pneg %p200
        $region30: #{decoder_layer.4} parent=11 // pred_check_branch
          %356 = sbr.rel (%p354) target = $region32
        $region31: #{decoder_layer.4} parent=11 // pred_region
          %s358 = ssub.s32 1024, 1024
          %359 = vsyncadd [#allocation12], %s358
          %s360 = sshll.u32 [#allocation13], 4
          %s361 = int_to_ptr.vmem [resolvable:$true] %s360
          %366 = dma.hbm_to_vmem [thread:$0]  %s6, 1024, %s361, [#allocation12], 128, 128, 8
        $region32: #{decoder_layer.4} parent=11 // pred_fallthru
          _
        // Predicated region
        $region33: #{decoder_layer.4} parent=11 // pred_check
          %p367 = pneg %p221
        $region34: #{decoder_layer.4} parent=11 // pred_check_branch
          %369 = sbr.rel (%p367) target = $region36
        $region35: #{decoder_layer.4} parent=11 // pred_region
          %s371 = ssub.s32 16, 16
          %372 = vsyncadd [#allocation15], %s371
          %s374 = sshll.u32 [#allocation14], 4
          %s375 = int_to_ptr.vmem [resolvable:$true] %s374
          %377 = dma.hbm_to_vmem [thread:$0]  %s7, 16, %s375, [#allocation15]
        $region36: #{decoder_layer.4} parent=11 // pred_fallthru
          _
        // Predicated region
        $region37: #{decoder_layer.4} parent=11 // pred_check
          %p378 = pneg %p242
        $region38: #{decoder_layer.4} parent=11 // pred_check_branch
          %380 = sbr.rel (%p378) target = $region40
        $region39: #{decoder_layer.4} parent=11 // pred_region
          %s382 = ssub.s32 16, 16
          %383 = vsyncadd [#allocation15], %s382
          %s385 = sshll.u32 [#allocation16], 4
          %s386 = int_to_ptr.vmem [resolvable:$true] %s385
          %388 = dma.hbm_to_vmem [thread:$0]  %s8, 16, %s386, [#allocation15]
        $region40: #{decoder_layer.4} parent=11 // pred_fallthru
          _
        // Predicated region
        $region41: #{decoder_layer.4} parent=11 // pred_check
          %p389 = pneg %p263
        $region42: #{decoder_layer.4} parent=11 // pred_check_branch
          %391 = sbr.rel (%p389) target = $region44
        $region43: #{decoder_layer.4} parent=11 // pred_region
          %s393 = ssub.s32 16, 16
          %394 = vsyncadd [#allocation18], %s393
          %s396 = sshll.u32 [#allocation17], 4
          %s397 = int_to_ptr.vmem [resolvable:$true] %s396
          %399 = dma.hbm_to_vmem [thread:$0]  %s9, 16, %s397, [#allocation18]
        $region44: #{decoder_layer.4} parent=11 // pred_fallthru
          _
      $region12: #{decoder_layer.4} parent=5 // pred_fallthru
        _
      %p400 = scmp.lt.s32.totalorder %s29, 4
      // Predicated region
      $region45: #{decoder_layer.4} parent=5 // pred_check
        %p401 = pneg %p400
      $region46: #{decoder_layer.4} parent=5 // pred_check_branch
        %403 = sbr.rel (%p401) target = $region48
      $region47: #{decoder_layer.4} parent=5 // pred_region
        // Predicated region
        $region49: #{decoder_layer.4} parent=47 // pred_check
          %p404 = pneg %p63
        $region50: #{decoder_layer.4} parent=47 // pred_check_branch
          %406 = sbr.rel (%p404) target = $region52
        $region51: #{decoder_layer.4} parent=47 // pred_region
          %s407 = sand.u32 %s53, 1
          %s408 = scalar_lea.sflag [#allocation3], %s407
          %s409 = sand.u32 %s53, 1
          %s410 = smul.addr %s409, 8
          %s411 = scalar_lea.vmem [#allocation2], %s410
          %s413 = ssub.s32 128, 128
          %414 = vsyncadd %s408, %s413
          %s415 = smul.addr %s36, 2
          %s416 = sadd.s32 %s37, %s415
          %s417 = smul.addr %s416, 128
          %s418 = scalar_lea.hbm %s0, %s417
          %s420 = sshll.u32 %s411, 4
          %s421 = int_to_ptr.vmem [resolvable:$true] %s420
          %423 = dma.hbm_to_vmem [thread:$0]  %s418, 128, %s421, %s408
        $region52: #{decoder_layer.4} parent=47 // pred_fallthru
          _
        // Predicated region
        $region53: #{decoder_layer.4} parent=47 // pred_check
          %p424 = pneg %p89
        $region54: #{decoder_layer.4} parent=47 // pred_check_branch
          %426 = sbr.rel (%p424) target = $region56
        $region55: #{decoder_layer.4} parent=47 // pred_region
          %s427 = sand.u32 %s29, 1
          %s428 = scalar_lea.sflag [#allocation6], %s427
          %s429 = sand.u32 %s79, 1
          %s430 = smul.addr %s429, 16
          %s431 = scalar_lea.vmem [#allocation5], %s430
          %s433 = ssub.s32 256, 256
          %434 = vsyncadd %s428, %s433
          %s435 = smul.addr %s36, 2
          %s436 = smul.addr %s435, 128
          %s437 = scalar_lea.hbm %s1, %s436
          %s438 = sshll.u32 %s431, 4
          %s439 = int_to_ptr.vmem [resolvable:$true] %s438
          %444 = dma.hbm_to_vmem [thread:$0]  %s437, 256, %s439, %s428, 128, 128, 8
        $region56: #{decoder_layer.4} parent=47 // pred_fallthru
          _
      $region48: #{decoder_layer.4} parent=5 // pred_fallthru
        _
      %p445 = scmp.le.s32.totalorder 1, %s29
      %p446 = scmp.lt.s32.totalorder %s29, 5
      %p447 = pnand %p445, %p446
      %p448 = pneg %p447
      // Predicated region
      $region57: #{decoder_layer.4} parent=5 // pred_check
        _
      $region58: #{decoder_layer.4} parent=5 // pred_check_branch
        %450 = sbr.rel (%p447) target = $region60
      $region59: #{decoder_layer.4} parent=5 // pred_region
        %s451 = ssub.s32 %s29, 1
        %s452 = sand.u32 %s56, 1
        %s453 = scalar_lea.sflag [#allocation3], %s452
        %s454 = sand.u32 %s56, 1
        %s455 = smul.addr %s454, 8
        %s456 = scalar_lea.vmem [#allocation2], %s455
        // Predicated region
        $region61: #{decoder_layer.4} parent=59 // pred_check
          %p457 = pneg %p69
        $region62: #{decoder_layer.4} parent=59 // pred_check_branch
          %459 = sbr.rel (%p457) target = $region64
        $region63: #{decoder_layer.4} parent=59 // pred_region
          %460 = dma.done %s453, 128
        $region64: #{decoder_layer.4} parent=59 // pred_fallthru
          _
        %s461 = sand.u32 %s34, 1
        %s462 = scalar_lea.sflag [#allocation6], %s461
        %s463 = sand.u32 %s82, 1
        %s464 = smul.addr %s463, 16
        %s465 = scalar_lea.vmem [#allocation5], %s464
        // Predicated region
        $region65: #{decoder_layer.4} parent=59 // pred_check
          %p466 = pneg %p95
        $region66: #{decoder_layer.4} parent=59 // pred_check_branch
          %468 = sbr.rel (%p466) target = $region68
        $region67: #{decoder_layer.4} parent=59 // pred_region
          %469 = dma.done %s462, 256
        $region68: #{decoder_layer.4} parent=59 // pred_fallthru
          _
        // Predicated region
        $region69: #{decoder_layer.4} parent=59 // pred_check
          %p470 = pneg %p116
        $region70: #{decoder_layer.4} parent=59 // pred_check_branch
          %472 = sbr.rel (%p470) target = $region72
        $region71: #{decoder_layer.4} parent=59 // pred_region
          %473 = dma.done [#allocation6], 1024
        $region72: #{decoder_layer.4} parent=59 // pred_fallthru
          _
        // Predicated region
        $region73: #{decoder_layer.4} parent=59 // pred_check
          %p474 = pneg %p137
        $region74: #{decoder_layer.4} parent=59 // pred_check_branch
          %476 = sbr.rel (%p474) target = $region76
        $region75: #{decoder_layer.4} parent=59 // pred_region
          %477 = dma.done [#allocation9], 16
        $region76: #{decoder_layer.4} parent=59 // pred_fallthru
          _
        // Predicated region
        $region77: #{decoder_layer.4} parent=59 // pred_check
          %p478 = pneg %p158
        $region78: #{decoder_layer.4} parent=59 // pred_check_branch
          %480 = sbr.rel (%p478) target = $region80
        $region79: #{decoder_layer.4} parent=59 // pred_region
          %481 = dma.done [#allocation9], 1024
        $region80: #{decoder_layer.4} parent=59 // pred_fallthru
          _
        // Predicated region
        $region81: #{decoder_layer.4} parent=59 // pred_check
          %p482 = pneg %p179
        $region82: #{decoder_layer.4} parent=59 // pred_check_branch
          %484 = sbr.rel (%p482) target = $region84
        $region83: #{decoder_layer.4} parent=59 // pred_region
          %485 = dma.done [#allocation12], 16
        $region84: #{decoder_layer.4} parent=59 // pred_fallthru
          _
        // Predicated region
        $region85: #{decoder_layer.4} parent=59 // pred_check
          %p486 = pneg %p200
        $region86: #{decoder_layer.4} parent=59 // pred_check_branch
          %488 = sbr.rel (%p486) target = $region88
        $region87: #{decoder_layer.4} parent=59 // pred_region
          %489 = dma.done [#allocation12], 1024
        $region88: #{decoder_layer.4} parent=59 // pred_fallthru
          _
        // Predicated region
        $region89: #{decoder_layer.4} parent=59 // pred_check
          %p490 = pneg %p221
        $region90: #{decoder_layer.4} parent=59 // pred_check_branch
          %492 = sbr.rel (%p490) target = $region92
        $region91: #{decoder_layer.4} parent=59 // pred_region
          %493 = dma.done [#allocation15], 16
        $region92: #{decoder_layer.4} parent=59 // pred_fallthru
          _
        // Predicated region
        $region93: #{decoder_layer.4} parent=59 // pred_check
          %p494 = pneg %p242
        $region94: #{decoder_layer.4} parent=59 // pred_check_branch
          %496 = sbr.rel (%p494) target = $region96
        $region95: #{decoder_layer.4} parent=59 // pred_region
          %497 = dma.done [#allocation15], 16
        $region96: #{decoder_layer.4} parent=59 // pred_fallthru
          _
        // Predicated region
        $region97: #{decoder_layer.4} parent=59 // pred_check
          %p498 = pneg %p263
        $region98: #{decoder_layer.4} parent=59 // pred_check_branch
          %500 = sbr.rel (%p498) target = $region100
        $region99: #{decoder_layer.4} parent=59 // pred_region
          %501 = dma.done [#allocation18], 16
        $region100: #{decoder_layer.4} parent=59 // pred_fallthru
          _
        %s502 = sand.u32 %s56, 1
        %s503 = scalar_lea.sflag [#allocation3], %s502
        %s504 = sand.u32 %s56, 1
        %s505 = smul.addr %s504, 8
        %s506 = scalar_lea.vmem [#allocation2], %s505
        %p507 = pneg %p69
        %p508 = pneg %p66
        %s509 = sand.u32 %s34, 1
        %s510 = scalar_lea.sflag [#allocation6], %s509
        %s511 = sand.u32 %s82, 1
        %s512 = smul.addr %s511, 16
        %s513 = scalar_lea.vmem [#allocation5], %s512
        %p514 = pneg %p95
        %p515 = pneg %p92
        %p516 = pneg %p116
        %p517 = pneg %p113
        %p518 = pneg %p137
        %p519 = pneg %p134
        %p520 = pneg %p158
        %p521 = pneg %p155
        %p522 = pneg %p179
        %p523 = pneg %p176
        %p524 = pneg %p200
        %p525 = pneg %p197
        %p526 = pneg %p221
        %p527 = pneg %p218
        %p528 = pneg %p242
        %p529 = pneg %p239
        %p530 = pneg %p263
        %p531 = pneg %p260
        %p532 = pneg %p291
        %p533 = pneg %p288
        %s534 = sand.u32 %s278, 1
        %s535 = scalar_lea.sflag [#allocation4], %s534
        %s536 = sand.u32 %s278, 1
        %s537 = smul.addr %s536, 8
        %s538 = scalar_lea.vmem [#allocation19], %s537
        %v539 = vld [vmem:[%s456] sm:$0xff]
        %v540 = vld [vmem:[%s465] sm:$0xff]
        %v541 = vld [vmem:[%s465 + $0x8] sm:$0xff]
        %v542 = vld [vmem:[#allocation7] sm:$0xff]
        %v543 = vld [vmem:[#allocation7 + $0x8] sm:$0xff]
        %v544 = vld [vmem:[#allocation7 + $0x10] sm:$0xff]
        %v545 = vld [vmem:[#allocation7 + $0x18] sm:$0xff]
        %v546 = vld [vmem:[#allocation7 + $0x20] sm:$0xff]
        %v547 = vld [vmem:[#allocation7 + $0x28] sm:$0xff]
        %v548 = vld [vmem:[#allocation7 + $0x30] sm:$0xff]
        %v549 = vld [vmem:[#allocation7 + $0x38] sm:$0xff]
        %v550 = vld [vmem:[#allocation8] sm:$0x1]
        %v552 = vlaneseq
        %v553 = vshrl.u32 %v552, 7
        %v554 = vsub.s32 0, %v553
        %v555 = vrot.slane %v550, %v554
        %vm557 = vcmask 523264
        %v559 = vsel %vm557, %v539, 0
        %561 = vmatprep.subr.mxu0 0.0
        %562 = vmatpush1.msra.mxu0 %v542
        %563 = vmatprep.subr.mxu0 0.0
        %564 = vmatpush1.msra.mxu0 %v543
        %565 = vmatprep.subr.mxu0 0.0
        %566 = vmatpush1.msra.mxu0 %v544
        %567 = vmatprep.subr.mxu0 0.0
        %568 = vmatpush1.msra.mxu0 %v545
        %569 = vmatprep.subr.mxu0 0.0
        %570 = vmatpush1.msra.mxu0 %v546
        %571 = vmatprep.subr.mxu0 0.0
        %572 = vmatpush1.msra.mxu0 %v547
        %573 = vmatprep.subr.mxu0 0.0
        %574 = vmatpush1.msra.mxu0 %v548
        %575 = vmatprep.subr.mxu0 0.0
        %576 = vmatpush1.msra.mxu0 %v549
        %577 = vmatprep.subr.mxu0 0.0
        %578 = vmatpush1.msra.mxu0 0.0
        %579 = vmatprep.subr.mxu0 0.0
        %580 = vmatpush1.msra.mxu0 0.0
        %581 = vmatprep.subr.mxu0 0.0
        %582 = vmatpush1.msra.mxu0 0.0
        %583 = vmatprep.subr.mxu0 0.0
        %584 = vmatpush1.msra.mxu0 0.0
        %585 = vmatprep.subr.mxu0 0.0
        %586 = vmatpush1.msra.mxu0 0.0
        %587 = vmatprep.subr.mxu0 0.0
        %588 = vmatpush1.msra.mxu0 0.0
        %589 = vmatprep.subr.mxu0 0.0
        %590 = vmatpush1.msra.mxu0 0.0
        %591 = vmatprep.subr.mxu0 0.0
        %592 = vmatpush1.msra.mxu0 0.0
        %593 = vmatprep.subr.mxu0 0.0
        %594 = vmatpush1.msra.mxu0 0.0
        %595 = vmatprep.subr.mxu0 0.0
        %596 = vmatpush1.msra.mxu0 0.0
        %597 = vmatprep.subr.mxu0 0.0
        %598 = vmatpush1.msra.mxu0 0.0
        %599 = vmatprep.subr.mxu0 0.0
        %600 = vmatpush1.msra.mxu0 0.0
        %601 = vmatprep.subr.mxu0 0.0
        %602 = vmatpush1.msra.mxu0 0.0
        %603 = vmatprep.subr.mxu0 0.0
        %604 = vmatpush1.msra.mxu0 0.0
        %605 = vmatprep.subr.mxu0 0.0
        %606 = vmatpush1.msra.mxu0 0.0
        %607 = vmatprep.subr.mxu0 0.0
        %608 = vmatpush1.msra.mxu0 0.0
        %609 = vmatprep.subr.mxu0 0.0
        %610 = vmatpush1.msra.mxu0 0.0
        %611 = vmatprep.subr.mxu0 0.0
        %612 = vmatpush1.msra.mxu0 0.0
        %613 = vmatprep.subr.mxu0 0.0
        %614 = vmatpush1.msra.mxu0 0.0
        %615 = vmatprep.subr.mxu0 0.0
        %616 = vmatpush1.msra.mxu0 0.0
        %617 = vmatprep.subr.mxu0 0.0
        %618 = vmatpush1.msra.mxu0 0.0
        %619 = vmatprep.subr.mxu0 0.0
        %620 = vmatpush1.msra.mxu0 0.0
        %621 = vmatprep.subr.mxu0 0.0
        %622 = vmatpush1.msra.mxu0 0.0
        %623 = vmatprep.subr.mxu0 0.0
        %624 = vmatpush1.msra.mxu0 0.0
        %625 = vmatprep.mubr.f32.mxu0 0.0
        %626 = vmatmul.mubr.f32.gmra.mrb[0].mxu0 %v559
        %v627 = vpop.f32.mrb[0].mxu0
        %v628 = vadd.f32 %v555, %v627
        %v629 = vpop.f32.mrb[0].mxu0
        %630 = vdwg.mxu0
        %v631 = vld [vmem:[#allocation10] sm:$0xff]
        %v632 = vld [vmem:[#allocation10 + $0x8] sm:$0xff]
        %v633 = vld [vmem:[#allocation10 + $0x10] sm:$0xff]
        %v634 = vld [vmem:[#allocation10 + $0x18] sm:$0xff]
        %v635 = vld [vmem:[#allocation10 + $0x20] sm:$0xff]
        %v636 = vld [vmem:[#allocation10 + $0x28] sm:$0xff]
        %v637 = vld [vmem:[#allocation10 + $0x30] sm:$0xff]
        %v638 = vld [vmem:[#allocation10 + $0x38] sm:$0xff]
        %v639 = vld [vmem:[#allocation11] sm:$0x1]
        %v641 = vlaneseq
        %v642 = vshrl.u32 %v641, 7
        %v643 = vsub.s32 0, %v642
        %v644 = vrot.slane %v639, %v643
        %v647 = vsel %vm557, %v540, 0
        %v650 = vsel %vm557, %v541, 0
        %652 = vmatprep.subr.mxu0 0.0
        %653 = vmatpush1.msra.mxu0 %v631
        %654 = vmatprep.subr.mxu0 0.0
        %655 = vmatpush1.msra.mxu0 %v632
        %656 = vmatprep.subr.mxu0 0.0
        %657 = vmatpush1.msra.mxu0 %v633
        %658 = vmatprep.subr.mxu0 0.0
        %659 = vmatpush1.msra.mxu0 %v634
        %660 = vmatprep.subr.mxu0 0.0
        %661 = vmatpush1.msra.mxu0 %v635
        %662 = vmatprep.subr.mxu0 0.0
        %663 = vmatpush1.msra.mxu0 %v636
        %664 = vmatprep.subr.mxu0 0.0
        %665 = vmatpush1.msra.mxu0 %v637
        %666 = vmatprep.subr.mxu0 0.0
        %667 = vmatpush1.msra.mxu0 %v638
        %668 = vmatprep.subr.mxu0 0.0
        %669 = vmatpush1.msra.mxu0 0.0
        %670 = vmatprep.subr.mxu0 0.0
        %671 = vmatpush1.msra.mxu0 0.0
        %672 = vmatprep.subr.mxu0 0.0
        %673 = vmatpush1.msra.mxu0 0.0
        %674 = vmatprep.subr.mxu0 0.0
        %675 = vmatpush1.msra.mxu0 0.0
        %676 = vmatprep.subr.mxu0 0.0
        %677 = vmatpush1.msra.mxu0 0.0
        %678 = vmatprep.subr.mxu0 0.0
        %679 = vmatpush1.msra.mxu0 0.0
        %680 = vmatprep.subr.mxu0 0.0
        %681 = vmatpush1.msra.mxu0 0.0
        %682 = vmatprep.subr.mxu0 0.0
        %683 = vmatpush1.msra.mxu0 0.0
        %684 = vmatprep.subr.mxu0 0.0
        %685 = vmatpush1.msra.mxu0 0.0
        %686 = vmatprep.subr.mxu0 0.0
        %687 = vmatpush1.msra.mxu0 0.0
        %688 = vmatprep.subr.mxu0 0.0
        %689 = vmatpush1.msra.mxu0 0.0
        %690 = vmatprep.subr.mxu0 0.0
        %691 = vmatpush1.msra.mxu0 0.0
        %692 = vmatprep.subr.mxu0 0.0
        %693 = vmatpush1.msra.mxu0 0.0
        %694 = vmatprep.subr.mxu0 0.0
        %695 = vmatpush1.msra.mxu0 0.0
        %696 = vmatprep.subr.mxu0 0.0
        %697 = vmatpush1.msra.mxu0 0.0
        %698 = vmatprep.subr.mxu0 0.0
        %699 = vmatpush1.msra.mxu0 0.0
        %700 = vmatprep.subr.mxu0 0.0
        %701 = vmatpush1.msra.mxu0 0.0
        %702 = vmatprep.subr.mxu0 0.0
        %703 = vmatpush1.msra.mxu0 0.0
        %704 = vmatprep.subr.mxu0 0.0
        %705 = vmatpush1.msra.mxu0 0.0
        %706 = vmatprep.subr.mxu0 0.0
        %707 = vmatpush1.msra.mxu0 0.0
        %708 = vmatprep.subr.mxu0 0.0
        %709 = vmatpush1.msra.mxu0 0.0
        %710 = vmatprep.subr.mxu0 0.0
        %711 = vmatpush1.msra.mxu0 0.0
        %712 = vmatprep.subr.mxu0 0.0
        %713 = vmatpush1.msra.mxu0 0.0
        %714 = vmatprep.subr.mxu0 0.0
        %715 = vmatpush1.msra.mxu0 0.0
        %716 = vmatprep.mubr.f32.mxu0 0.0
        %717 = vmatmul.mubr.f32.gmra.mrb[0].mxu0 %v647
        %v718 = vpop.f32.mrb[0].mxu0
        %v719 = vadd.f32 %v644, %v718
        %v720 = vpop.f32.mrb[0].mxu0
        %721 = vmatprep.mubr.f32.mxu0 0.0
        %722 = vmatmul.mubr.f32.gmra.mrb[0].mxu0 %v650
        %v723 = vpop.f32.mrb[0].mxu0
        %v724 = vadd.f32 %v644, %v723
        %v725 = vpop.f32.mrb[0].mxu0
        %726 = vdwg.mxu0
        %v727 = vmul.f32 %v628, 0.25
        %729 = vrot.lane.b32.xlu0 %v727, 112
        %v730 = vpop.permute.xlu0 %729
        %731 = vrot.lane.b32.xlu0 %v727, 96
        %v732 = vpop.permute.xlu0 %731
        %733 = vrot.lane.b32.xlu0 %v727, 80
        %v734 = vpop.permute.xlu0 %733
        %737 = vrot.lane.b32.xlu0 %v719, 112
        %v738 = vpop.permute.xlu0 %737
        %739 = vrot.lane.b32.xlu0 %v724, 112
        %v740 = vpop.permute.xlu0 %739
        %743 = vrot.lane.b32.xlu0 %v719, 96
        %v744 = vpop.permute.xlu0 %743
        %745 = vrot.lane.b32.xlu0 %v724, 96
        %v746 = vpop.permute.xlu0 %745
        %749 = vrot.lane.b32.xlu0 %v719, 80
        %v750 = vpop.permute.xlu0 %749
        %751 = vrot.lane.b32.xlu0 %v724, 80
        %v752 = vpop.permute.xlu0 %751
        %755 = vxpose.xlu0.b32.start [1/16] %v719, 128
        %756 = vxpose.xlu0.b32.cont [2/16] %v724, 128
        %757 = vxpose.xlu0.b32.cont [3/16] 0.0, 128
        %758 = vxpose.xlu0.b32.cont [4/16] 0.0, 128
        %759 = vxpose.xlu0.b32.cont [5/16] 0.0, 128
        %760 = vxpose.xlu0.b32.cont [6/16] 0.0, 128
        %761 = vxpose.xlu0.b32.cont [7/16] 0.0, 128
        %762 = vxpose.xlu0.b32.cont [8/16] 0.0, 128
        %763 = vxpose.xlu0.b32.cont [9/16] 0.0, 128
        %764 = vxpose.xlu0.b32.cont [10/16] 0.0, 128
        %765 = vxpose.xlu0.b32.cont [11/16] 0.0, 128
        %766 = vxpose.xlu0.b32.cont [12/16] 0.0, 128
        %767 = vxpose.xlu0.b32.cont [13/16] 0.0, 128
        %768 = vxpose.xlu0.b32.cont [14/16] 0.0, 128
        %769 = vxpose.xlu0.b32.cont [15/16] 0.0, 128
        %770 = vxpose.xlu0.b32.end [16/16] 0.0, 128
        %v771 = vpop.trf.xlu0
        %v772 = vpop.trf.xlu0
        %v773 = vpop.trf.xlu0
        %v774 = vpop.trf.xlu0
        %v775 = vpop.trf.xlu0
        %v776 = vpop.trf.xlu0
        %v777 = vpop.trf.xlu0
        %v778 = vpop.trf.xlu0
        %v779 = vpop.trf.xlu0
        %v780 = vpop.trf.xlu0
        %v781 = vpop.trf.xlu0
        %v782 = vpop.trf.xlu0
        %v783 = vpop.trf.xlu0
        %v784 = vpop.trf.xlu0
        %v785 = vpop.trf.xlu0
        %v786 = vpop.trf.xlu0
        %787 = vxpose.xlu0.b32.start [1/16] %v738, 128
        %788 = vxpose.xlu0.b32.cont [2/16] %v740, 128
        %789 = vxpose.xlu0.b32.cont [3/16] 0.0, 128
        %790 = vxpose.xlu0.b32.cont [4/16] 0.0, 128
        %791 = vxpose.xlu0.b32.cont [5/16] 0.0, 128
        %792 = vxpose.xlu0.b32.cont [6/16] 0.0, 128
        %793 = vxpose.xlu0.b32.cont [7/16] 0.0, 128
        %794 = vxpose.xlu0.b32.cont [8/16] 0.0, 128
        %795 = vxpose.xlu0.b32.cont [9/16] 0.0, 128
        %796 = vxpose.xlu0.b32.cont [10/16] 0.0, 128
        %797 = vxpose.xlu0.b32.cont [11/16] 0.0, 128
        %798 = vxpose.xlu0.b32.cont [12/16] 0.0, 128
        %799 = vxpose.xlu0.b32.cont [13/16] 0.0, 128
        %800 = vxpose.xlu0.b32.cont [14/16] 0.0, 128
        %801 = vxpose.xlu0.b32.cont [15/16] 0.0, 128
        %802 = vxpose.xlu0.b32.end [16/16] 0.0, 128
        %v803 = vpop.trf.xlu0
        %v804 = vpop.trf.xlu0
        %v805 = vpop.trf.xlu0
        %v806 = vpop.trf.xlu0
        %v807 = vpop.trf.xlu0
        %v808 = vpop.trf.xlu0
        %v809 = vpop.trf.xlu0
        %v810 = vpop.trf.xlu0
        %v811 = vpop.trf.xlu0
        %v812 = vpop.trf.xlu0
        %v813 = vpop.trf.xlu0
        %v814 = vpop.trf.xlu0
        %v815 = vpop.trf.xlu0
        %v816 = vpop.trf.xlu0
        %v817 = vpop.trf.xlu0
        %v818 = vpop.trf.xlu0
        %819 = vxpose.xlu0.b32.start [1/16] %v744, 128
        %820 = vxpose.xlu0.b32.cont [2/16] %v746, 128
        %821 = vxpose.xlu0.b32.cont [3/16] 0.0, 128
        %822 = vxpose.xlu0.b32.cont [4/16] 0.0, 128
        %823 = vxpose.xlu0.b32.cont [5/16] 0.0, 128
        %824 = vxpose.xlu0.b32.cont [6/16] 0.0, 128
        %825 = vxpose.xlu0.b32.cont [7/16] 0.0, 128
        %826 = vxpose.xlu0.b32.cont [8/16] 0.0, 128
        %827 = vxpose.xlu0.b32.cont [9/16] 0.0, 128
        %828 = vxpose.xlu0.b32.cont [10/16] 0.0, 128
        %829 = vxpose.xlu0.b32.cont [11/16] 0.0, 128
        %830 = vxpose.xlu0.b32.cont [12/16] 0.0, 128
        %831 = vxpose.xlu0.b32.cont [13/16] 0.0, 128
        %832 = vxpose.xlu0.b32.cont [14/16] 0.0, 128
        %833 = vxpose.xlu0.b32.cont [15/16] 0.0, 128
        %834 = vxpose.xlu0.b32.end [16/16] 0.0, 128
        %v835 = vpop.trf.xlu0
        %v836 = vpop.trf.xlu0
        %v837 = vpop.trf.xlu0
        %v838 = vpop.trf.xlu0
        %v839 = vpop.trf.xlu0
        %v840 = vpop.trf.xlu0
        %v841 = vpop.trf.xlu0
        %v842 = vpop.trf.xlu0
        %v843 = vpop.trf.xlu0
        %v844 = vpop.trf.xlu0
        %v845 = vpop.trf.xlu0
        %v846 = vpop.trf.xlu0
        %v847 = vpop.trf.xlu0
        %v848 = vpop.trf.xlu0
        %v849 = vpop.trf.xlu0
        %v850 = vpop.trf.xlu0
        %851 = vxpose.xlu0.b32.start [1/16] %v750, 128
        %852 = vxpose.xlu0.b32.cont [2/16] %v752, 128
        %853 = vxpose.xlu0.b32.cont [3/16] 0.0, 128
        %854 = vxpose.xlu0.b32.cont [4/16] 0.0, 128
        %855 = vxpose.xlu0.b32.cont [5/16] 0.0, 128
        %856 = vxpose.xlu0.b32.cont [6/16] 0.0, 128
        %857 = vxpose.xlu0.b32.cont [7/16] 0.0, 128
        %858 = vxpose.xlu0.b32.cont [8/16] 0.0, 128
        %859 = vxpose.xlu0.b32.cont [9/16] 0.0, 128
        %860 = vxpose.xlu0.b32.cont [10/16] 0.0, 128
        %861 = vxpose.xlu0.b32.cont [11/16] 0.0, 128
        %862 = vxpose.xlu0.b32.cont [12/16] 0.0, 128
        %863 = vxpose.xlu0.b32.cont [13/16] 0.0, 128
        %864 = vxpose.xlu0.b32.cont [14/16] 0.0, 128
        %865 = vxpose.xlu0.b32.cont [15/16] 0.0, 128
        %866 = vxpose.xlu0.b32.end [16/16] 0.0, 128
        %v867 = vpop.trf.xlu0
        %v868 = vpop.trf.xlu0
        %v869 = vpop.trf.xlu0
        %v870 = vpop.trf.xlu0
        %v871 = vpop.trf.xlu0
        %v872 = vpop.trf.xlu0
        %v873 = vpop.trf.xlu0
        %v874 = vpop.trf.xlu0
        %v875 = vpop.trf.xlu0
        %v876 = vpop.trf.xlu0
        %v877 = vpop.trf.xlu0
        %v878 = vpop.trf.xlu0
        %v879 = vpop.trf.xlu0
        %v880 = vpop.trf.xlu0
        %v881 = vpop.trf.xlu0
        %v882 = vpop.trf.xlu0
        %vm883 = vcmask 130048
        %v884 = vsel %vm883, %v727, 0
        %886 = vmatprep.subr.mxu0 0.0
        %887 = vmatpush1.msra.mxu0 %v771
        %888 = vmatprep.subr.mxu0 0.0
        %889 = vmatpush1.msra.mxu0 %v772
        %890 = vmatprep.subr.mxu0 0.0
        %891 = vmatpush1.msra.mxu0 0.0
        %892 = vmatprep.subr.mxu0 0.0
        %893 = vmatpush1.msra.mxu0 0.0
        %894 = vmatprep.subr.mxu0 0.0
        %895 = vmatpush1.msra.mxu0 0.0
        %896 = vmatprep.subr.mxu0 0.0
        %897 = vmatpush1.msra.mxu0 0.0
        %898 = vmatprep.subr.mxu0 0.0
        %899 = vmatpush1.msra.mxu0 0.0
        %900 = vmatprep.subr.mxu0 0.0
        %901 = vmatpush1.msra.mxu0 0.0
        %902 = vmatprep.subr.mxu0 0.0
        %903 = vmatpush1.msra.mxu0 0.0
        %904 = vmatprep.subr.mxu0 0.0
        %905 = vmatpush1.msra.mxu0 0.0
        %906 = vmatprep.subr.mxu0 0.0
        %907 = vmatpush1.msra.mxu0 0.0
        %908 = vmatprep.subr.mxu0 0.0
        %909 = vmatpush1.msra.mxu0 0.0
        %910 = vmatprep.subr.mxu0 0.0
        %911 = vmatpush1.msra.mxu0 0.0
        %912 = vmatprep.subr.mxu0 0.0
        %913 = vmatpush1.msra.mxu0 0.0
        %914 = vmatprep.subr.mxu0 0.0
        %915 = vmatpush1.msra.mxu0 0.0
        %916 = vmatprep.subr.mxu0 0.0
        %917 = vmatpush1.msra.mxu0 0.0
        %918 = vmatprep.subr.mxu0 0.0
        %919 = vmatpush1.msra.mxu0 0.0
        %920 = vmatprep.subr.mxu0 0.0
        %921 = vmatpush1.msra.mxu0 0.0
        %922 = vmatprep.subr.mxu0 0.0
        %923 = vmatpush1.msra.mxu0 0.0
        %924 = vmatprep.subr.mxu0 0.0
        %925 = vmatpush1.msra.mxu0 0.0
        %926 = vmatprep.subr.mxu0 0.0
        %927 = vmatpush1.msra.mxu0 0.0
        %928 = vmatprep.subr.mxu0 0.0
        %929 = vmatpush1.msra.mxu0 0.0
        %930 = vmatprep.subr.mxu0 0.0
        %931 = vmatpush1.msra.mxu0 0.0
        %932 = vmatprep.subr.mxu0 0.0
        %933 = vmatpush1.msra.mxu0 0.0
        %934 = vmatprep.subr.mxu0 0.0
        %935 = vmatpush1.msra.mxu0 0.0
        %936 = vmatprep.subr.mxu0 0.0
        %937 = vmatpush1.msra.mxu0 0.0
        %938 = vmatprep.subr.mxu0 0.0
        %939 = vmatpush1.msra.mxu0 0.0
        %940 = vmatprep.subr.mxu0 0.0
        %941 = vmatpush1.msra.mxu0 0.0
        %942 = vmatprep.subr.mxu0 0.0
        %943 = vmatpush1.msra.mxu0 0.0
        %944 = vmatprep.subr.mxu0 0.0
        %945 = vmatpush1.msra.mxu0 0.0
        %946 = vmatprep.subr.mxu0 0.0
        %947 = vmatpush1.msra.mxu0 0.0
        %948 = vmatprep.subr.mxu0 0.0
        %949 = vmatpush1.msra.mxu0 0.0
        %950 = vmatprep.mubr.f32.mxu0 0.0
        %951 = vmatmul.mubr.f32.gmra.mrb[0].mxu0 %v884
        %v952 = vpop.f32.mrb[0].mxu0
        %v953 = vadd.f32 0.0, %v952
        %v954 = vpop.f32.mrb[0].mxu0
        %955 = vdwg.mxu0
        %v956 = vsel %vm883, %v730, 0
        %958 = vmatprep.subr.mxu0 0.0
        %959 = vmatpush1.msra.mxu0 %v803
        %960 = vmatprep.subr.mxu0 0.0
        %961 = vmatpush1.msra.mxu0 %v804
        %962 = vmatprep.subr.mxu0 0.0
        %963 = vmatpush1.msra.mxu0 0.0
        %964 = vmatprep.subr.mxu0 0.0
        %965 = vmatpush1.msra.mxu0 0.0
        %966 = vmatprep.subr.mxu0 0.0
        %967 = vmatpush1.msra.mxu0 0.0
        %968 = vmatprep.subr.mxu0 0.0
        %969 = vmatpush1.msra.mxu0 0.0
        %970 = vmatprep.subr.mxu0 0.0
        %971 = vmatpush1.msra.mxu0 0.0
        %972 = vmatprep.subr.mxu0 0.0
        %973 = vmatpush1.msra.mxu0 0.0
        %974 = vmatprep.subr.mxu0 0.0
        %975 = vmatpush1.msra.mxu0 0.0
        %976 = vmatprep.subr.mxu0 0.0
        %977 = vmatpush1.msra.mxu0 0.0
        %978 = vmatprep.subr.mxu0 0.0
        %979 = vmatpush1.msra.mxu0 0.0
        %980 = vmatprep.subr.mxu0 0.0
        %981 = vmatpush1.msra.mxu0 0.0
        %982 = vmatprep.subr.mxu0 0.0
        %983 = vmatpush1.msra.mxu0 0.0
        %984 = vmatprep.subr.mxu0 0.0
        %985 = vmatpush1.msra.mxu0 0.0
        %986 = vmatprep.subr.mxu0 0.0
        %987 = vmatpush1.msra.mxu0 0.0
        %988 = vmatprep.subr.mxu0 0.0
        %989 = vmatpush1.msra.mxu0 0.0
        %990 = vmatprep.subr.mxu0 0.0
        %991 = vmatpush1.msra.mxu0 0.0
        %992 = vmatprep.subr.mxu0 0.0
        %993 = vmatpush1.msra.mxu0 0.0
        %994 = vmatprep.subr.mxu0 0.0
        %995 = vmatpush1.msra.mxu0 0.0
        %996 = vmatprep.subr.mxu0 0.0
        %997 = vmatpush1.msra.mxu0 0.0
        %998 = vmatprep.subr.mxu0 0.0
        %999 = vmatpush1.msra.mxu0 0.0
        %1000 = vmatprep.subr.mxu0 0.0
        %1001 = vmatpush1.msra.mxu0 0.0
        %1002 = vmatprep.subr.mxu0 0.0
        %1003 = vmatpush1.msra.mxu0 0.0
        %1004 = vmatprep.subr.mxu0 0.0
        %1005 = vmatpush1.msra.mxu0 0.0
        %1006 = vmatprep.subr.mxu0 0.0
        %1007 = vmatpush1.msra.mxu0 0.0
        %1008 = vmatprep.subr.mxu0 0.0
        %1009 = vmatpush1.msra.mxu0 0.0
        %1010 = vmatprep.subr.mxu0 0.0
        %1011 = vmatpush1.msra.mxu0 0.0
        %1012 = vmatprep.subr.mxu0 0.0
        %1013 = vmatpush1.msra.mxu0 0.0
        %1014 = vmatprep.subr.mxu0 0.0
        %1015 = vmatpush1.msra.mxu0 0.0
        %1016 = vmatprep.subr.mxu0 0.0
        %1017 = vmatpush1.msra.mxu0 0.0
        %1018 = vmatprep.subr.mxu0 0.0
        %1019 = vmatpush1.msra.mxu0 0.0
        %1020 = vmatprep.subr.mxu0 0.0
        %1021 = vmatpush1.msra.mxu0 0.0
        %1022 = vmatprep.mubr.f32.mxu0 0.0
        %1023 = vmatmul.mubr.f32.gmra.mrb[0].mxu0 %v956
        %v1024 = vpop.f32.mrb[0].mxu0
        %v1025 = vadd.f32 0.0, %v1024
        %v1026 = vpop.f32.mrb[0].mxu0
        %1027 = vdwg.mxu0
        %v1028 = vsel %vm883, %v732, 0
        %1030 = vmatprep.subr.mxu0 0.0
        %1031 = vmatpush1.msra.mxu0 %v835
        %1032 = vmatprep.subr.mxu0 0.0
        %1033 = vmatpush1.msra.mxu0 %v836
        %1034 = vmatprep.subr.mxu0 0.0
        %1035 = vmatpush1.msra.mxu0 0.0
        %1036 = vmatprep.subr.mxu0 0.0
        %1037 = vmatpush1.msra.mxu0 0.0
        %1038 = vmatprep.subr.mxu0 0.0
        %1039 = vmatpush1.msra.mxu0 0.0
        %1040 = vmatprep.subr.mxu0 0.0
        %1041 = vmatpush1.msra.mxu0 0.0
        %1042 = vmatprep.subr.mxu0 0.0
        %1043 = vmatpush1.msra.mxu0 0.0
        %1044 = vmatprep.subr.mxu0 0.0
        %1045 = vmatpush1.msra.mxu0 0.0
        %1046 = vmatprep.subr.mxu0 0.0
        %1047 = vmatpush1.msra.mxu0 0.0
        %1048 = vmatprep.subr.mxu0 0.0
        %1049 = vmatpush1.msra.mxu0 0.0
        %1050 = vmatprep.subr.mxu0 0.0
        %1051 = vmatpush1.msra.mxu0 0.0
        %1052 = vmatprep.subr.mxu0 0.0
        %1053 = vmatpush1.msra.mxu0 0.0
        %1054 = vmatprep.subr.mxu0 0.0
        %1055 = vmatpush1.msra.mxu0 0.0
        %1056 = vmatprep.subr.mxu0 0.0
        %1057 = vmatpush1.msra.mxu0 0.0
        %1058 = vmatprep.subr.mxu0 0.0
        %1059 = vmatpush1.msra.mxu0 0.0
        %1060 = vmatprep.subr.mxu0 0.0
        %1061 = vmatpush1.msra.mxu0 0.0
        %1062 = vmatprep.subr.mxu0 0.0
        %1063 = vmatpush1.msra.mxu0 0.0
        %1064 = vmatprep.subr.mxu0 0.0
        %1065 = vmatpush1.msra.mxu0 0.0
        %1066 = vmatprep.subr.mxu0 0.0
        %1067 = vmatpush1.msra.mxu0 0.0
        %1068 = vmatprep.subr.mxu0 0.0
        %1069 = vmatpush1.msra.mxu0 0.0
        %1070 = vmatprep.subr.mxu0 0.0
        %1071 = vmatpush1.msra.mxu0 0.0
        %1072 = vmatprep.subr.mxu0 0.0
        %1073 = vmatpush1.msra.mxu0 0.0
        %1074 = vmatprep.subr.mxu0 0.0
        %1075 = vmatpush1.msra.mxu0 0.0
        %1076 = vmatprep.subr.mxu0 0.0
        %1077 = vmatpush1.msra.mxu0 0.0
        %1078 = vmatprep.subr.mxu0 0.0
        %1079 = vmatpush1.msra.mxu0 0.0
        %1080 = vmatprep.subr.mxu0 0.0
        %1081 = vmatpush1.msra.mxu0 0.0
        %1082 = vmatprep.subr.mxu0 0.0
        %1083 = vmatpush1.msra.mxu0 0.0
        %1084 = vmatprep.subr.mxu0 0.0
        %1085 = vmatpush1.msra.mxu0 0.0
        %1086 = vmatprep.subr.mxu0 0.0
        %1087 = vmatpush1.msra.mxu0 0.0
        %1088 = vmatprep.subr.mxu0 0.0
        %1089 = vmatpush1.msra.mxu0 0.0
        %1090 = vmatprep.subr.mxu0 0.0
        %1091 = vmatpush1.msra.mxu0 0.0
        %1092 = vmatprep.subr.mxu0 0.0
        %1093 = vmatpush1.msra.mxu0 0.0
        %1094 = vmatprep.mubr.f32.mxu0 0.0
        %1095 = vmatmul.mubr.f32.gmra.mrb[0].mxu0 %v1028
        %v1096 = vpop.f32.mrb[0].mxu0
        %v1097 = vadd.f32 0.0, %v1096
        %v1098 = vpop.f32.mrb[0].mxu0
        %1099 = vdwg.mxu0
        %v1100 = vsel %vm883, %v734, 0
        %1102 = vmatprep.subr.mxu0 0.0
        %1103 = vmatpush1.msra.mxu0 %v867
        %1104 = vmatprep.subr.mxu0 0.0
        %1105 = vmatpush1.msra.mxu0 %v868
        %1106 = vmatprep.subr.mxu0 0.0
        %1107 = vmatpush1.msra.mxu0 0.0
        %1108 = vmatprep.subr.mxu0 0.0
        %1109 = vmatpush1.msra.mxu0 0.0
        %1110 = vmatprep.subr.mxu0 0.0
        %1111 = vmatpush1.msra.mxu0 0.0
        %1112 = vmatprep.subr.mxu0 0.0
        %1113 = vmatpush1.msra.mxu0 0.0
        %1114 = vmatprep.subr.mxu0 0.0
        %1115 = vmatpush1.msra.mxu0 0.0
        %1116 = vmatprep.subr.mxu0 0.0
        %1117 = vmatpush1.msra.mxu0 0.0
        %1118 = vmatprep.subr.mxu0 0.0
        %1119 = vmatpush1.msra.mxu0 0.0
        %1120 = vmatprep.subr.mxu0 0.0
        %1121 = vmatpush1.msra.mxu0 0.0
        %1122 = vmatprep.subr.mxu0 0.0
        %1123 = vmatpush1.msra.mxu0 0.0
        %1124 = vmatprep.subr.mxu0 0.0
        %1125 = vmatpush1.msra.mxu0 0.0
        %1126 = vmatprep.subr.mxu0 0.0
        %1127 = vmatpush1.msra.mxu0 0.0
        %1128 = vmatprep.subr.mxu0 0.0
        %1129 = vmatpush1.msra.mxu0 0.0
        %1130 = vmatprep.subr.mxu0 0.0
        %1131 = vmatpush1.msra.mxu0 0.0
        %1132 = vmatprep.subr.mxu0 0.0
        %1133 = vmatpush1.msra.mxu0 0.0
        %1134 = vmatprep.subr.mxu0 0.0
        %1135 = vmatpush1.msra.mxu0 0.0
        %1136 = vmatprep.subr.mxu0 0.0
        %1137 = vmatpush1.msra.mxu0 0.0
        %1138 = vmatprep.subr.mxu0 0.0
        %1139 = vmatpush1.msra.mxu0 0.0
        %1140 = vmatprep.subr.mxu0 0.0
        %1141 = vmatpush1.msra.mxu0 0.0
        %1142 = vmatprep.subr.mxu0 0.0
        %1143 = vmatpush1.msra.mxu0 0.0
        %1144 = vmatprep.subr.mxu0 0.0
        %1145 = vmatpush1.msra.mxu0 0.0
        %1146 = vmatprep.subr.mxu0 0.0
        %1147 = vmatpush1.msra.mxu0 0.0
        %1148 = vmatprep.subr.mxu0 0.0
        %1149 = vmatpush1.msra.mxu0 0.0
        %1150 = vmatprep.subr.mxu0 0.0
        %1151 = vmatpush1.msra.mxu0 0.0
        %1152 = vmatprep.subr.mxu0 0.0
        %1153 = vmatpush1.msra.mxu0 0.0
        %1154 = vmatprep.subr.mxu0 0.0
        %1155 = vmatpush1.msra.mxu0 0.0
        %1156 = vmatprep.subr.mxu0 0.0
        %1157 = vmatpush1.msra.mxu0 0.0
        %1158 = vmatprep.subr.mxu0 0.0
        %1159 = vmatpush1.msra.mxu0 0.0
        %1160 = vmatprep.subr.mxu0 0.0
        %1161 = vmatpush1.msra.mxu0 0.0
        %1162 = vmatprep.subr.mxu0 0.0
        %1163 = vmatpush1.msra.mxu0 0.0
        %1164 = vmatprep.subr.mxu0 0.0
        %1165 = vmatpush1.msra.mxu0 0.0
        %1166 = vmatprep.mubr.f32.mxu0 0.0
        %1167 = vmatmul.mubr.f32.gmra.mrb[0].mxu0 %v1100
        %v1168 = vpop.f32.mrb[0].mxu0
        %v1169 = vadd.f32 0.0, %v1168
        %v1170 = vpop.f32.mrb[0].mxu0
        %1171 = vdwg.mxu0
        %v1172 = vsel %vm883, %v953, -inf
        %1173 = vmax.xlane.f32.xlu0 %v1172
        %v1174 = vpop.xlane.xlu0 %1173
        %v1175 = vsel %vm883, %v1025, -inf
        %1176 = vmax.xlane.f32.xlu0 %v1175
        %v1177 = vpop.xlane.xlu0 %1176
        %v1178 = vsel %vm883, %v1097, -inf
        %1179 = vmax.xlane.f32.xlu0 %v1178
        %v1180 = vpop.xlane.xlu0 %1179
        %v1181 = vsel %vm883, %v1169, -inf
        %1182 = vmax.xlane.f32.xlu0 %v1181
        %v1183 = vpop.xlane.xlu0 %1182
        %v1184 = vsub.f32 %v953, %v1174
        %v1185 = vsub.f32 %v1025, %v1177
        %v1186 = vsub.f32 %v1097, %v1180
        %v1187 = vsub.f32 %v1169, %v1183
        %v1188 = vmul.f32 %v1184, 1.442695
        %v1189 = vpow.pop %v1188
        %v1190 = vmul.f32 %v1185, 1.442695
        %v1191 = vpow.pop %v1190
        %v1192 = vmul.f32 %v1186, 1.442695
        %v1193 = vpow.pop %v1192
        %v1194 = vmul.f32 %v1187, 1.442695
        %v1195 = vpow.pop %v1194
        %v1196 = vsel %vm883, %v1189, 0.0
        %1197 = vadd.xlane.f32.xlu0 %v1196
        %v1198 = vpop.xlane.xlu0 %1197
        %v1199 = vsel %vm883, %v1191, 0.0
        %1200 = vadd.xlane.f32.xlu0 %v1199
        %v1201 = vpop.xlane.xlu0 %1200
        %v1202 = vsel %vm883, %v1193, 0.0
        %1203 = vadd.xlane.f32.xlu0 %v1202
        %v1204 = vpop.xlane.xlu0 %1203
        %v1205 = vsel %vm883, %v1195, 0.0
        %1206 = vadd.xlane.f32.xlu0 %v1205
        %v1207 = vpop.xlane.xlu0 %1206
        %v1208 = vrcp.pop %v1198
        %v1209 = vrcp.pop %v1201
        %v1210 = vrcp.pop %v1204
        %v1211 = vrcp.pop %v1207
        %v1212 = vmul.f32 %v1189, %v1208
        %v1213 = vmul.f32 %v1191, %v1209
        %v1214 = vmul.f32 %v1193, %v1210
        %v1215 = vmul.f32 %v1195, %v1211
        %1216 = vrot.lane.b32.xlu0 %v719, 64
        %v1217 = vpop.permute.xlu0 %1216
        %1218 = vrot.lane.b32.xlu0 %v724, 64
        %v1219 = vpop.permute.xlu0 %1218
        %1220 = vrot.lane.b32.xlu0 %v738, 64
        %v1221 = vpop.permute.xlu0 %1220
        %1222 = vrot.lane.b32.xlu0 %v740, 64
        %v1223 = vpop.permute.xlu0 %1222
        %1224 = vrot.lane.b32.xlu0 %v744, 64
        %v1225 = vpop.permute.xlu0 %1224
        %1226 = vrot.lane.b32.xlu0 %v746, 64
        %v1227 = vpop.permute.xlu0 %1226
        %1228 = vrot.lane.b32.xlu0 %v750, 64
        %v1229 = vpop.permute.xlu0 %1228
        %1230 = vrot.lane.b32.xlu0 %v752, 64
        %v1231 = vpop.permute.xlu0 %1230
        %1240 = vxpose.xlu0.b32.start [1/16] %v1217, 128
        %1241 = vxpose.xlu0.b32.cont [2/16] %v1219, 128
        %1242 = vxpose.xlu0.b32.cont [3/16] 0.0, 128
        %1243 = vxpose.xlu0.b32.cont [4/16] 0.0, 128
        %1244 = vxpose.xlu0.b32.cont [5/16] 0.0, 128
        %1245 = vxpose.xlu0.b32.cont [6/16] 0.0, 128
        %1246 = vxpose.xlu0.b32.cont [7/16] 0.0, 128
        %1247 = vxpose.xlu0.b32.cont [8/16] 0.0, 128
        %1248 = vxpose.xlu0.b32.cont [9/16] 0.0, 128
        %1249 = vxpose.xlu0.b32.cont [10/16] 0.0, 128
        %1250 = vxpose.xlu0.b32.cont [11/16] 0.0, 128
        %1251 = vxpose.xlu0.b32.cont [12/16] 0.0, 128
        %1252 = vxpose.xlu0.b32.cont [13/16] 0.0, 128
        %1253 = vxpose.xlu0.b32.cont [14/16] 0.0, 128
        %1254 = vxpose.xlu0.b32.cont [15/16] 0.0, 128
        %1255 = vxpose.xlu0.b32.end [16/16] 0.0, 128
        %v1256 = vpop.trf.xlu0
        %v1257 = vpop.trf.xlu0
        %v1258 = vpop.trf.xlu0
        %v1259 = vpop.trf.xlu0
        %v1260 = vpop.trf.xlu0
        %v1261 = vpop.trf.xlu0
        %v1262 = vpop.trf.xlu0
        %v1263 = vpop.trf.xlu0
        %v1264 = vpop.trf.xlu0
        %v1265 = vpop.trf.xlu0
        %v1266 = vpop.trf.xlu0
        %v1267 = vpop.trf.xlu0
        %v1268 = vpop.trf.xlu0
        %v1269 = vpop.trf.xlu0
        %v1270 = vpop.trf.xlu0
        %v1271 = vpop.trf.xlu0
        %1272 = vxpose.xlu0.b32.start [1/16] %v1221, 128
        %1273 = vxpose.xlu0.b32.cont [2/16] %v1223, 128
        %1274 = vxpose.xlu0.b32.cont [3/16] 0.0, 128
        %1275 = vxpose.xlu0.b32.cont [4/16] 0.0, 128
        %1276 = vxpose.xlu0.b32.cont [5/16] 0.0, 128
        %1277 = vxpose.xlu0.b32.cont [6/16] 0.0, 128
        %1278 = vxpose.xlu0.b32.cont [7/16] 0.0, 128
        %1279 = vxpose.xlu0.b32.cont [8/16] 0.0, 128
        %1280 = vxpose.xlu0.b32.cont [9/16] 0.0, 128
        %1281 = vxpose.xlu0.b32.cont [10/16] 0.0, 128
        %1282 = vxpose.xlu0.b32.cont [11/16] 0.0, 128
        %1283 = vxpose.xlu0.b32.cont [12/16] 0.0, 128
        %1284 = vxpose.xlu0.b32.cont [13/16] 0.0, 128
        %1285 = vxpose.xlu0.b32.cont [14/16] 0.0, 128
        %1286 = vxpose.xlu0.b32.cont [15/16] 0.0, 128
        %1287 = vxpose.xlu0.b32.end [16/16] 0.0, 128
        %v1288 = vpop.trf.xlu0
        %v1289 = vpop.trf.xlu0
        %v1290 = vpop.trf.xlu0
        %v1291 = vpop.trf.xlu0
        %v1292 = vpop.trf.xlu0
        %v1293 = vpop.trf.xlu0
        %v1294 = vpop.trf.xlu0
        %v1295 = vpop.trf.xlu0
        %v1296 = vpop.trf.xlu0
        %v1297 = vpop.trf.xlu0
        %v1298 = vpop.trf.xlu0
        %v1299 = vpop.trf.xlu0
        %v1300 = vpop.trf.xlu0
        %v1301 = vpop.trf.xlu0
        %v1302 = vpop.trf.xlu0
        %v1303 = vpop.trf.xlu0
        %1304 = vxpose.xlu0.b32.start [1/16] %v1225, 128
        %1305 = vxpose.xlu0.b32.cont [2/16] %v1227, 128
        %1306 = vxpose.xlu0.b32.cont [3/16] 0.0, 128
        %1307 = vxpose.xlu0.b32.cont [4/16] 0.0, 128
        %1308 = vxpose.xlu0.b32.cont [5/16] 0.0, 128
        %1309 = vxpose.xlu0.b32.cont [6/16] 0.0, 128
        %1310 = vxpose.xlu0.b32.cont [7/16] 0.0, 128
        %1311 = vxpose.xlu0.b32.cont [8/16] 0.0, 128
        %1312 = vxpose.xlu0.b32.cont [9/16] 0.0, 128
        %1313 = vxpose.xlu0.b32.cont [10/16] 0.0, 128
        %1314 = vxpose.xlu0.b32.cont [11/16] 0.0, 128
        %1315 = vxpose.xlu0.b32.cont [12/16] 0.0, 128
        %1316 = vxpose.xlu0.b32.cont [13/16] 0.0, 128
        %1317 = vxpose.xlu0.b32.cont [14/16] 0.0, 128
        %1318 = vxpose.xlu0.b32.cont [15/16] 0.0, 128
        %1319 = vxpose.xlu0.b32.end [16/16] 0.0, 128
        %v1320 = vpop.trf.xlu0
        %v1321 = vpop.trf.xlu0
        %v1322 = vpop.trf.xlu0
        %v1323 = vpop.trf.xlu0
        %v1324 = vpop.trf.xlu0
        %v1325 = vpop.trf.xlu0
        %v1326 = vpop.trf.xlu0
        %v1327 = vpop.trf.xlu0
        %v1328 = vpop.trf.xlu0
        %v1329 = vpop.trf.xlu0
        %v1330 = vpop.trf.xlu0
        %v1331 = vpop.trf.xlu0
        %v1332 = vpop.trf.xlu0
        %v1333 = vpop.trf.xlu0
        %v1334 = vpop.trf.xlu0
        %v1335 = vpop.trf.xlu0
        %1336 = vxpose.xlu0.b32.start [1/16] %v1229, 128
        %1337 = vxpose.xlu0.b32.cont [2/16] %v1231, 128
        %1338 = vxpose.xlu0.b32.cont [3/16] 0.0, 128
        %1339 = vxpose.xlu0.b32.cont [4/16] 0.0, 128
        %1340 = vxpose.xlu0.b32.cont [5/16] 0.0, 128
        %1341 = vxpose.xlu0.b32.cont [6/16] 0.0, 128
        %1342 = vxpose.xlu0.b32.cont [7/16] 0.0, 128
        %1343 = vxpose.xlu0.b32.cont [8/16] 0.0, 128
        %1344 = vxpose.xlu0.b32.cont [9/16] 0.0, 128
        %1345 = vxpose.xlu0.b32.cont [10/16] 0.0, 128
        %1346 = vxpose.xlu0.b32.cont [11/16] 0.0, 128
        %1347 = vxpose.xlu0.b32.cont [12/16] 0.0, 128
        %1348 = vxpose.xlu0.b32.cont [13/16] 0.0, 128
        %1349 = vxpose.xlu0.b32.cont [14/16] 0.0, 128
        %1350 = vxpose.xlu0.b32.cont [15/16] 0.0, 128
        %1351 = vxpose.xlu0.b32.end [16/16] 0.0, 128
        %v1352 = vpop.trf.xlu0
        %v1353 = vpop.trf.xlu0
        %v1354 = vpop.trf.xlu0
        %v1355 = vpop.trf.xlu0
        %v1356 = vpop.trf.xlu0
        %v1357 = vpop.trf.xlu0
        %v1358 = vpop.trf.xlu0
        %v1359 = vpop.trf.xlu0
        %v1360 = vpop.trf.xlu0
        %v1361 = vpop.trf.xlu0
        %v1362 = vpop.trf.xlu0
        %v1363 = vpop.trf.xlu0
        %v1364 = vpop.trf.xlu0
        %v1365 = vpop.trf.xlu0
        %v1366 = vpop.trf.xlu0
        %v1367 = vpop.trf.xlu0
        %v1369 = vsel %vm883, %v1256, 0
        %v1372 = vsel %vm883, %v1257, 0
        %v1375 = vsel %vm883, %v1212, 0
        %1377 = vmatprep.subr.mxu0 0.0
        %1378 = vmatpush1.xpose.msra.mxu0 %v1375
        %1379 = vmatprep.subr.mxu0 0.0
        %1380 = vmatpush1.xpose.msra.mxu0 0.0
        %1381 = vmatprep.subr.mxu0 0.0
        %1382 = vmatpush1.xpose.msra.mxu0 0.0
        %1383 = vmatprep.subr.mxu0 0.0
        %1384 = vmatpush1.xpose.msra.mxu0 0.0
        %1385 = vmatprep.subr.mxu0 0.0
        %1386 = vmatpush1.xpose.msra.mxu0 0.0
        %1387 = vmatprep.subr.mxu0 0.0
        %1388 = vmatpush1.xpose.msra.mxu0 0.0
        %1389 = vmatprep.subr.mxu0 0.0
        %1390 = vmatpush1.xpose.msra.mxu0 0.0
        %1391 = vmatprep.subr.mxu0 0.0
        %1392 = vmatpush1.xpose.msra.mxu0 0.0
        %1393 = vmatprep.subr.mxu0 0.0
        %1394 = vmatpush1.xpose.msra.mxu0 0.0
        %1395 = vmatprep.subr.mxu0 0.0
        %1396 = vmatpush1.xpose.msra.mxu0 0.0
        %1397 = vmatprep.subr.mxu0 0.0
        %1398 = vmatpush1.xpose.msra.mxu0 0.0
        %1399 = vmatprep.subr.mxu0 0.0
        %1400 = vmatpush1.xpose.msra.mxu0 0.0
        %1401 = vmatprep.subr.mxu0 0.0
        %1402 = vmatpush1.xpose.msra.mxu0 0.0
        %1403 = vmatprep.subr.mxu0 0.0
        %1404 = vmatpush1.xpose.msra.mxu0 0.0
        %1405 = vmatprep.subr.mxu0 0.0
        %1406 = vmatpush1.xpose.msra.mxu0 0.0
        %1407 = vmatprep.subr.mxu0 0.0
        %1408 = vmatpush1.xpose.msra.mxu0 0.0
        %1409 = vmatprep.subr.mxu0 0.0
        %1410 = vmatpush1.xpose.msra.mxu0 0.0
        %1411 = vmatprep.subr.mxu0 0.0
        %1412 = vmatpush1.xpose.msra.mxu0 0.0
        %1413 = vmatprep.subr.mxu0 0.0
        %1414 = vmatpush1.xpose.msra.mxu0 0.0
        %1415 = vmatprep.subr.mxu0 0.0
        %1416 = vmatpush1.xpose.msra.mxu0 0.0
        %1417 = vmatprep.subr.mxu0 0.0
        %1418 = vmatpush1.xpose.msra.mxu0 0.0
        %1419 = vmatprep.subr.mxu0 0.0
        %1420 = vmatpush1.xpose.msra.mxu0 0.0
        %1421 = vmatprep.subr.mxu0 0.0
        %1422 = vmatpush1.xpose.msra.mxu0 0.0
        %1423 = vmatprep.subr.mxu0 0.0
        %1424 = vmatpush1.xpose.msra.mxu0 0.0
        %1425 = vmatprep.subr.mxu0 0.0
        %1426 = vmatpush1.xpose.msra.mxu0 0.0
        %1427 = vmatprep.subr.mxu0 0.0
        %1428 = vmatpush1.xpose.msra.mxu0 0.0
        %1429 = vmatprep.subr.mxu0 0.0
        %1430 = vmatpush1.xpose.msra.mxu0 0.0
        %1431 = vmatprep.subr.mxu0 0.0
        %1432 = vmatpush1.xpose.msra.mxu0 0.0
        %1433 = vmatprep.subr.mxu0 0.0
        %1434 = vmatpush1.xpose.msra.mxu0 0.0
        %1435 = vmatprep.subr.mxu0 0.0
        %1436 = vmatpush1.xpose.msra.mxu0 0.0
        %1437 = vmatprep.subr.mxu0 0.0
        %1438 = vmatpush1.xpose.msra.mxu0 0.0
        %1439 = vmatprep.subr.mxu0 0.0
        %1440 = vmatpush1.xpose.msra.mxu0 0.0
        %1441 = vmatprep.mubr.f32.mxu0 0.0
        %1442 = vmatmul.mubr.f32.gmra.mrb[0].mxu0 %v1369
        %v1443 = vpop.f32.mrb[0].mxu0
        %v1444 = vadd.f32 0.0, %v1443
        %v1445 = vpop.f32.mrb[0].mxu0
        %1446 = vmatprep.mubr.f32.mxu0 0.0
        %1447 = vmatmul.mubr.f32.gmra.mrb[0].mxu0 %v1372
        %v1448 = vpop.f32.mrb[0].mxu0
        %v1449 = vadd.f32 0.0, %v1448
        %v1450 = vpop.f32.mrb[0].mxu0
        %1451 = vdwg.mxu0
        %v1453 = vsel %vm883, %v1288, 0
        %v1456 = vsel %vm883, %v1289, 0
        %v1459 = vsel %vm883, %v1213, 0
        %1461 = vmatprep.subr.mxu0 0.0
        %1462 = vmatpush1.xpose.msra.mxu0 %v1459
        %1463 = vmatprep.subr.mxu0 0.0
        %1464 = vmatpush1.xpose.msra.mxu0 0.0
        %1465 = vmatprep.subr.mxu0 0.0
        %1466 = vmatpush1.xpose.msra.mxu0 0.0
        %1467 = vmatprep.subr.mxu0 0.0
        %1468 = vmatpush1.xpose.msra.mxu0 0.0
        %1469 = vmatprep.subr.mxu0 0.0
        %1470 = vmatpush1.xpose.msra.mxu0 0.0
        %1471 = vmatprep.subr.mxu0 0.0
        %1472 = vmatpush1.xpose.msra.mxu0 0.0
        %1473 = vmatprep.subr.mxu0 0.0
        %1474 = vmatpush1.xpose.msra.mxu0 0.0
        %1475 = vmatprep.subr.mxu0 0.0
        %1476 = vmatpush1.xpose.msra.mxu0 0.0
        %1477 = vmatprep.subr.mxu0 0.0
        %1478 = vmatpush1.xpose.msra.mxu0 0.0
        %1479 = vmatprep.subr.mxu0 0.0
        %1480 = vmatpush1.xpose.msra.mxu0 0.0
        %1481 = vmatprep.subr.mxu0 0.0
        %1482 = vmatpush1.xpose.msra.mxu0 0.0
        %1483 = vmatprep.subr.mxu0 0.0
        %1484 = vmatpush1.xpose.msra.mxu0 0.0
        %1485 = vmatprep.subr.mxu0 0.0
        %1486 = vmatpush1.xpose.msra.mxu0 0.0
        %1487 = vmatprep.subr.mxu0 0.0
        %1488 = vmatpush1.xpose.msra.mxu0 0.0
        %1489 = vmatprep.subr.mxu0 0.0
        %1490 = vmatpush1.xpose.msra.mxu0 0.0
        %1491 = vmatprep.subr.mxu0 0.0
        %1492 = vmatpush1.xpose.msra.mxu0 0.0
        %1493 = vmatprep.subr.mxu0 0.0
        %1494 = vmatpush1.xpose.msra.mxu0 0.0
        %1495 = vmatprep.subr.mxu0 0.0
        %1496 = vmatpush1.xpose.msra.mxu0 0.0
        %1497 = vmatprep.subr.mxu0 0.0
        %1498 = vmatpush1.xpose.msra.mxu0 0.0
        %1499 = vmatprep.subr.mxu0 0.0
        %1500 = vmatpush1.xpose.msra.mxu0 0.0
        %1501 = vmatprep.subr.mxu0 0.0
        %1502 = vmatpush1.xpose.msra.mxu0 0.0
        %1503 = vmatprep.subr.mxu0 0.0
        %1504 = vmatpush1.xpose.msra.mxu0 0.0
        %1505 = vmatprep.subr.mxu0 0.0
        %1506 = vmatpush1.xpose.msra.mxu0 0.0
        %1507 = vmatprep.subr.mxu0 0.0
        %1508 = vmatpush1.xpose.msra.mxu0 0.0
        %1509 = vmatprep.subr.mxu0 0.0
        %1510 = vmatpush1.xpose.msra.mxu0 0.0
        %1511 = vmatprep.subr.mxu0 0.0
        %1512 = vmatpush1.xpose.msra.mxu0 0.0
        %1513 = vmatprep.subr.mxu0 0.0
        %1514 = vmatpush1.xpose.msra.mxu0 0.0
        %1515 = vmatprep.subr.mxu0 0.0
        %1516 = vmatpush1.xpose.msra.mxu0 0.0
        %1517 = vmatprep.subr.mxu0 0.0
        %1518 = vmatpush1.xpose.msra.mxu0 0.0
        %1519 = vmatprep.subr.mxu0 0.0
        %1520 = vmatpush1.xpose.msra.mxu0 0.0
        %1521 = vmatprep.subr.mxu0 0.0
        %1522 = vmatpush1.xpose.msra.mxu0 0.0
        %1523 = vmatprep.subr.mxu0 0.0
        %1524 = vmatpush1.xpose.msra.mxu0 0.0
        %1525 = vmatprep.mubr.f32.mxu0 0.0
        %1526 = vmatmul.mubr.f32.gmra.mrb[0].mxu0 %v1453
        %v1527 = vpop.f32.mrb[0].mxu0
        %v1528 = vadd.f32 0.0, %v1527
        %v1529 = vpop.f32.mrb[0].mxu0
        %1530 = vmatprep.mubr.f32.mxu0 0.0
        %1531 = vmatmul.mubr.f32.gmra.mrb[0].mxu0 %v1456
        %v1532 = vpop.f32.mrb[0].mxu0
        %v1533 = vadd.f32 0.0, %v1532
        %v1534 = vpop.f32.mrb[0].mxu0
        %1535 = vdwg.mxu0
        %v1537 = vsel %vm883, %v1320, 0
        %v1540 = vsel %vm883, %v1321, 0
        %v1543 = vsel %vm883, %v1214, 0
        %1545 = vmatprep.subr.mxu0 0.0
        %1546 = vmatpush1.xpose.msra.mxu0 %v1543
        %1547 = vmatprep.subr.mxu0 0.0
        %1548 = vmatpush1.xpose.msra.mxu0 0.0
        %1549 = vmatprep.subr.mxu0 0.0
        %1550 = vmatpush1.xpose.msra.mxu0 0.0
        %1551 = vmatprep.subr.mxu0 0.0
        %1552 = vmatpush1.xpose.msra.mxu0 0.0
        %1553 = vmatprep.subr.mxu0 0.0
        %1554 = vmatpush1.xpose.msra.mxu0 0.0
        %1555 = vmatprep.subr.mxu0 0.0
        %1556 = vmatpush1.xpose.msra.mxu0 0.0
        %1557 = vmatprep.subr.mxu0 0.0
        %1558 = vmatpush1.xpose.msra.mxu0 0.0
        %1559 = vmatprep.subr.mxu0 0.0
        %1560 = vmatpush1.xpose.msra.mxu0 0.0
        %1561 = vmatprep.subr.mxu0 0.0
        %1562 = vmatpush1.xpose.msra.mxu0 0.0
        %1563 = vmatprep.subr.mxu0 0.0
        %1564 = vmatpush1.xpose.msra.mxu0 0.0
        %1565 = vmatprep.subr.mxu0 0.0
        %1566 = vmatpush1.xpose.msra.mxu0 0.0
        %1567 = vmatprep.subr.mxu0 0.0
        %1568 = vmatpush1.xpose.msra.mxu0 0.0
        %1569 = vmatprep.subr.mxu0 0.0
        %1570 = vmatpush1.xpose.msra.mxu0 0.0
        %1571 = vmatprep.subr.mxu0 0.0
        %1572 = vmatpush1.xpose.msra.mxu0 0.0
        %1573 = vmatprep.subr.mxu0 0.0
        %1574 = vmatpush1.xpose.msra.mxu0 0.0
        %1575 = vmatprep.subr.mxu0 0.0
        %1576 = vmatpush1.xpose.msra.mxu0 0.0
        %1577 = vmatprep.subr.mxu0 0.0
        %1578 = vmatpush1.xpose.msra.mxu0 0.0
        %1579 = vmatprep.subr.mxu0 0.0
        %1580 = vmatpush1.xpose.msra.mxu0 0.0
        %1581 = vmatprep.subr.mxu0 0.0
        %1582 = vmatpush1.xpose.msra.mxu0 0.0
        %1583 = vmatprep.subr.mxu0 0.0
        %1584 = vmatpush1.xpose.msra.mxu0 0.0
        %1585 = vmatprep.subr.mxu0 0.0
        %1586 = vmatpush1.xpose.msra.mxu0 0.0
        %1587 = vmatprep.subr.mxu0 0.0
        %1588 = vmatpush1.xpose.msra.mxu0 0.0
        %1589 = vmatprep.subr.mxu0 0.0
        %1590 = vmatpush1.xpose.msra.mxu0 0.0
        %1591 = vmatprep.subr.mxu0 0.0
        %1592 = vmatpush1.xpose.msra.mxu0 0.0
        %1593 = vmatprep.subr.mxu0 0.0
        %1594 = vmatpush1.xpose.msra.mxu0 0.0
        %1595 = vmatprep.subr.mxu0 0.0
        %1596 = vmatpush1.xpose.msra.mxu0 0.0
        %1597 = vmatprep.subr.mxu0 0.0
        %1598 = vmatpush1.xpose.msra.mxu0 0.0
        %1599 = vmatprep.subr.mxu0 0.0
        %1600 = vmatpush1.xpose.msra.mxu0 0.0
        %1601 = vmatprep.subr.mxu0 0.0
        %1602 = vmatpush1.xpose.msra.mxu0 0.0
        %1603 = vmatprep.subr.mxu0 0.0
        %1604 = vmatpush1.xpose.msra.mxu0 0.0
        %1605 = vmatprep.subr.mxu0 0.0
        %1606 = vmatpush1.xpose.msra.mxu0 0.0
        %1607 = vmatprep.subr.mxu0 0.0
        %1608 = vmatpush1.xpose.msra.mxu0 0.0
        %1609 = vmatprep.mubr.f32.mxu0 0.0
        %1610 = vmatmul.mubr.f32.gmra.mrb[0].mxu0 %v1537
        %v1611 = vpop.f32.mrb[0].mxu0
        %v1612 = vadd.f32 0.0, %v1611
        %v1613 = vpop.f32.mrb[0].mxu0
        %1614 = vmatprep.mubr.f32.mxu0 0.0
        %1615 = vmatmul.mubr.f32.gmra.mrb[0].mxu0 %v1540
        %v1616 = vpop.f32.mrb[0].mxu0
        %v1617 = vadd.f32 0.0, %v1616
        %v1618 = vpop.f32.mrb[0].mxu0
        %1619 = vdwg.mxu0
        %v1621 = vsel %vm883, %v1352, 0
        %v1624 = vsel %vm883, %v1353, 0
        %v1627 = vsel %vm883, %v1215, 0
        %1629 = vmatprep.subr.mxu0 0.0
        %1630 = vmatpush1.xpose.msra.mxu0 %v1627
        %1631 = vmatprep.subr.mxu0 0.0
        %1632 = vmatpush1.xpose.msra.mxu0 0.0
        %1633 = vmatprep.subr.mxu0 0.0
        %1634 = vmatpush1.xpose.msra.mxu0 0.0
        %1635 = vmatprep.subr.mxu0 0.0
        %1636 = vmatpush1.xpose.msra.mxu0 0.0
        %1637 = vmatprep.subr.mxu0 0.0
        %1638 = vmatpush1.xpose.msra.mxu0 0.0
        %1639 = vmatprep.subr.mxu0 0.0
        %1640 = vmatpush1.xpose.msra.mxu0 0.0
        %1641 = vmatprep.subr.mxu0 0.0
        %1642 = vmatpush1.xpose.msra.mxu0 0.0
        %1643 = vmatprep.subr.mxu0 0.0
        %1644 = vmatpush1.xpose.msra.mxu0 0.0
        %1645 = vmatprep.subr.mxu0 0.0
        %1646 = vmatpush1.xpose.msra.mxu0 0.0
        %1647 = vmatprep.subr.mxu0 0.0
        %1648 = vmatpush1.xpose.msra.mxu0 0.0
        %1649 = vmatprep.subr.mxu0 0.0
        %1650 = vmatpush1.xpose.msra.mxu0 0.0
        %1651 = vmatprep.subr.mxu0 0.0
        %1652 = vmatpush1.xpose.msra.mxu0 0.0
        %1653 = vmatprep.subr.mxu0 0.0
        %1654 = vmatpush1.xpose.msra.mxu0 0.0
        %1655 = vmatprep.subr.mxu0 0.0
        %1656 = vmatpush1.xpose.msra.mxu0 0.0
        %1657 = vmatprep.subr.mxu0 0.0
        %1658 = vmatpush1.xpose.msra.mxu0 0.0
        %1659 = vmatprep.subr.mxu0 0.0
        %1660 = vmatpush1.xpose.msra.mxu0 0.0
        %1661 = vmatprep.subr.mxu0 0.0
        %1662 = vmatpush1.xpose.msra.mxu0 0.0
        %1663 = vmatprep.subr.mxu0 0.0
        %1664 = vmatpush1.xpose.msra.mxu0 0.0
        %1665 = vmatprep.subr.mxu0 0.0
        %1666 = vmatpush1.xpose.msra.mxu0 0.0
        %1667 = vmatprep.subr.mxu0 0.0
        %1668 = vmatpush1.xpose.msra.mxu0 0.0
        %1669 = vmatprep.subr.mxu0 0.0
        %1670 = vmatpush1.xpose.msra.mxu0 0.0
        %1671 = vmatprep.subr.mxu0 0.0
        %1672 = vmatpush1.xpose.msra.mxu0 0.0
        %1673 = vmatprep.subr.mxu0 0.0
        %1674 = vmatpush1.xpose.msra.mxu0 0.0
        %1675 = vmatprep.subr.mxu0 0.0
        %1676 = vmatpush1.xpose.msra.mxu0 0.0
        %1677 = vmatprep.subr.mxu0 0.0
        %1678 = vmatpush1.xpose.msra.mxu0 0.0
        %1679 = vmatprep.subr.mxu0 0.0
        %1680 = vmatpush1.xpose.msra.mxu0 0.0
        %1681 = vmatprep.subr.mxu0 0.0
        %1682 = vmatpush1.xpose.msra.mxu0 0.0
        %1683 = vmatprep.subr.mxu0 0.0
        %1684 = vmatpush1.xpose.msra.mxu0 0.0
        %1685 = vmatprep.subr.mxu0 0.0
        %1686 = vmatpush1.xpose.msra.mxu0 0.0
        %1687 = vmatprep.subr.mxu0 0.0
        %1688 = vmatpush1.xpose.msra.mxu0 0.0
        %1689 = vmatprep.subr.mxu0 0.0
        %1690 = vmatpush1.xpose.msra.mxu0 0.0
        %1691 = vmatprep.subr.mxu0 0.0
        %1692 = vmatpush1.xpose.msra.mxu0 0.0
        %1693 = vmatprep.mubr.f32.mxu0 0.0
        %1694 = vmatmul.mubr.f32.gmra.mrb[0].mxu0 %v1621
        %v1695 = vpop.f32.mrb[0].mxu0
        %v1696 = vadd.f32 0.0, %v1695
        %v1697 = vpop.f32.mrb[0].mxu0
        %1698 = vmatprep.mubr.f32.mxu0 0.0
        %1699 = vmatmul.mubr.f32.gmra.mrb[0].mxu0 %v1624
        %v1700 = vpop.f32.mrb[0].mxu0
        %v1701 = vadd.f32 0.0, %v1700
        %v1702 = vpop.f32.mrb[0].mxu0
        %1703 = vdwg.mxu0
        %1704 = vxpose.xlu0.b32.start [1/16] %v1444, 128
        %1705 = vxpose.xlu0.b32.cont [2/16] %v1449, 128
        %1706 = vxpose.xlu0.b32.cont [3/16] 0.0, 128
        %1707 = vxpose.xlu0.b32.cont [4/16] 0.0, 128
        %1708 = vxpose.xlu0.b32.cont [5/16] 0.0, 128
        %1709 = vxpose.xlu0.b32.cont [6/16] 0.0, 128
        %1710 = vxpose.xlu0.b32.cont [7/16] 0.0, 128
        %1711 = vxpose.xlu0.b32.cont [8/16] 0.0, 128
        %1712 = vxpose.xlu0.b32.cont [9/16] 0.0, 128
        %1713 = vxpose.xlu0.b32.cont [10/16] 0.0, 128
        %1714 = vxpose.xlu0.b32.cont [11/16] 0.0, 128
        %1715 = vxpose.xlu0.b32.cont [12/16] 0.0, 128
        %1716 = vxpose.xlu0.b32.cont [13/16] 0.0, 128
        %1717 = vxpose.xlu0.b32.cont [14/16] 0.0, 128
        %1718 = vxpose.xlu0.b32.cont [15/16] 0.0, 128
        %1719 = vxpose.xlu0.b32.end [16/16] 0.0, 128
        %v1720 = vpop.trf.xlu0
        %v1721 = vpop.trf.xlu0
        %v1722 = vpop.trf.xlu0
        %v1723 = vpop.trf.xlu0
        %v1724 = vpop.trf.xlu0
        %v1725 = vpop.trf.xlu0
        %v1726 = vpop.trf.xlu0
        %v1727 = vpop.trf.xlu0
        %v1728 = vpop.trf.xlu0
        %v1729 = vpop.trf.xlu0
        %v1730 = vpop.trf.xlu0
        %v1731 = vpop.trf.xlu0
        %v1732 = vpop.trf.xlu0
        %v1733 = vpop.trf.xlu0
        %v1734 = vpop.trf.xlu0
        %v1735 = vpop.trf.xlu0
        %1736 = vxpose.xlu0.b32.start [1/16] %v1528, 128
        %1737 = vxpose.xlu0.b32.cont [2/16] %v1533, 128
        %1738 = vxpose.xlu0.b32.cont [3/16] 0.0, 128
        %1739 = vxpose.xlu0.b32.cont [4/16] 0.0, 128
        %1740 = vxpose.xlu0.b32.cont [5/16] 0.0, 128
        %1741 = vxpose.xlu0.b32.cont [6/16] 0.0, 128
        %1742 = vxpose.xlu0.b32.cont [7/16] 0.0, 128
        %1743 = vxpose.xlu0.b32.cont [8/16] 0.0, 128
        %1744 = vxpose.xlu0.b32.cont [9/16] 0.0, 128
        %1745 = vxpose.xlu0.b32.cont [10/16] 0.0, 128
        %1746 = vxpose.xlu0.b32.cont [11/16] 0.0, 128
        %1747 = vxpose.xlu0.b32.cont [12/16] 0.0, 128
        %1748 = vxpose.xlu0.b32.cont [13/16] 0.0, 128
        %1749 = vxpose.xlu0.b32.cont [14/16] 0.0, 128
        %1750 = vxpose.xlu0.b32.cont [15/16] 0.0, 128
        %1751 = vxpose.xlu0.b32.end [16/16] 0.0, 128
        %v1752 = vpop.trf.xlu0
        %v1753 = vpop.trf.xlu0
        %v1754 = vpop.trf.xlu0
        %v1755 = vpop.trf.xlu0
        %v1756 = vpop.trf.xlu0
        %v1757 = vpop.trf.xlu0
        %v1758 = vpop.trf.xlu0
        %v1759 = vpop.trf.xlu0
        %v1760 = vpop.trf.xlu0
        %v1761 = vpop.trf.xlu0
        %v1762 = vpop.trf.xlu0
        %v1763 = vpop.trf.xlu0
        %v1764 = vpop.trf.xlu0
        %v1765 = vpop.trf.xlu0
        %v1766 = vpop.trf.xlu0
        %v1767 = vpop.trf.xlu0
        %1768 = vxpose.xlu0.b32.start [1/16] %v1612, 128
        %1769 = vxpose.xlu0.b32.cont [2/16] %v1617, 128
        %1770 = vxpose.xlu0.b32.cont [3/16] 0.0, 128
        %1771 = vxpose.xlu0.b32.cont [4/16] 0.0, 128
        %1772 = vxpose.xlu0.b32.cont [5/16] 0.0, 128
        %1773 = vxpose.xlu0.b32.cont [6/16] 0.0, 128
        %1774 = vxpose.xlu0.b32.cont [7/16] 0.0, 128
        %1775 = vxpose.xlu0.b32.cont [8/16] 0.0, 128
        %1776 = vxpose.xlu0.b32.cont [9/16] 0.0, 128
        %1777 = vxpose.xlu0.b32.cont [10/16] 0.0, 128
        %1778 = vxpose.xlu0.b32.cont [11/16] 0.0, 128
        %1779 = vxpose.xlu0.b32.cont [12/16] 0.0, 128
        %1780 = vxpose.xlu0.b32.cont [13/16] 0.0, 128
        %1781 = vxpose.xlu0.b32.cont [14/16] 0.0, 128
        %1782 = vxpose.xlu0.b32.cont [15/16] 0.0, 128
        %1783 = vxpose.xlu0.b32.end [16/16] 0.0, 128
        %v1784 = vpop.trf.xlu0
        %v1785 = vpop.trf.xlu0
        %v1786 = vpop.trf.xlu0
        %v1787 = vpop.trf.xlu0
        %v1788 = vpop.trf.xlu0
        %v1789 = vpop.trf.xlu0
        %v1790 = vpop.trf.xlu0
        %v1791 = vpop.trf.xlu0
        %v1792 = vpop.trf.xlu0
        %v1793 = vpop.trf.xlu0
        %v1794 = vpop.trf.xlu0
        %v1795 = vpop.trf.xlu0
        %v1796 = vpop.trf.xlu0
        %v1797 = vpop.trf.xlu0
        %v1798 = vpop.trf.xlu0
        %v1799 = vpop.trf.xlu0
        %1800 = vxpose.xlu0.b32.start [1/16] %v1696, 128
        %1801 = vxpose.xlu0.b32.cont [2/16] %v1701, 128
        %1802 = vxpose.xlu0.b32.cont [3/16] 0.0, 128
        %1803 = vxpose.xlu0.b32.cont [4/16] 0.0, 128
        %1804 = vxpose.xlu0.b32.cont [5/16] 0.0, 128
        %1805 = vxpose.xlu0.b32.cont [6/16] 0.0, 128
        %1806 = vxpose.xlu0.b32.cont [7/16] 0.0, 128
        %1807 = vxpose.xlu0.b32.cont [8/16] 0.0, 128
        %1808 = vxpose.xlu0.b32.cont [9/16] 0.0, 128
        %1809 = vxpose.xlu0.b32.cont [10/16] 0.0, 128
        %1810 = vxpose.xlu0.b32.cont [11/16] 0.0, 128
        %1811 = vxpose.xlu0.b32.cont [12/16] 0.0, 128
        %1812 = vxpose.xlu0.b32.cont [13/16] 0.0, 128
        %1813 = vxpose.xlu0.b32.cont [14/16] 0.0, 128
        %1814 = vxpose.xlu0.b32.cont [15/16] 0.0, 128
        %1815 = vxpose.xlu0.b32.end [16/16] 0.0, 128
        %v1816 = vpop.trf.xlu0
        %v1817 = vpop.trf.xlu0
        %v1818 = vpop.trf.xlu0
        %v1819 = vpop.trf.xlu0
        %v1820 = vpop.trf.xlu0
        %v1821 = vpop.trf.xlu0
        %v1822 = vpop.trf.xlu0
        %v1823 = vpop.trf.xlu0
        %v1824 = vpop.trf.xlu0
        %v1825 = vpop.trf.xlu0
        %v1826 = vpop.trf.xlu0
        %v1827 = vpop.trf.xlu0
        %v1828 = vpop.trf.xlu0
        %v1829 = vpop.trf.xlu0
        %v1830 = vpop.trf.xlu0
        %v1831 = vpop.trf.xlu0
        %v1832 = vcombine.low %v1720, %v1784
        %v1833 = vcombine.high %v1720, %v1784
        %v1835 = vunpack.c.l.s4 1983009808
        %v1836 = vunpack.c.0.s8 %v1835
        %v1837 = vlaneseq
        %v1838 = vshrl.u32 %v1837, 7
        %v1839 = vsub.s32 %v1836, %v1838
        %v1840 = vrot.slane %v1832, %v1839
        %v1842 = vunpack.c.l.s4 1983009808
        %v1843 = vunpack.c.0.s8 %v1842
        %v1844 = vlaneseq
        %v1845 = vshrl.u32 %v1844, 7
        %v1846 = vsub.s32 %v1843, %v1845
        %v1847 = vrot.slane %v1833, %v1846
        %v1848 = vcombine.low %v1752, %v1816
        %v1849 = vcombine.high %v1752, %v1816
        %v1851 = vunpack.c.l.s4 1983009808
        %v1852 = vunpack.c.0.s8 %v1851
        %v1853 = vlaneseq
        %v1854 = vshrl.u32 %v1853, 7
        %v1855 = vsub.s32 %v1852, %v1854
        %v1856 = vrot.slane %v1848, %v1855
        %v1858 = vunpack.c.l.s4 1983009808
        %v1859 = vunpack.c.0.s8 %v1858
        %v1860 = vlaneseq
        %v1861 = vshrl.u32 %v1860, 7
        %v1862 = vsub.s32 %v1859, %v1861
        %v1863 = vrot.slane %v1849, %v1862
        %v1864 = vcombine.low %v1840, %v1856
        %v1865 = vcombine.high %v1840, %v1856
        %v1867 = vunpack.c.l.s4 1934713408
        %v1868 = vunpack.c.0.s8 %v1867
        %v1869 = vlaneseq
        %v1870 = vshrl.u32 %v1869, 7
        %v1871 = vsub.s32 %v1868, %v1870
        %v1872 = vrot.slane %v1864, %v1871
        %v1874 = vunpack.c.l.s4 1934713408
        %v1875 = vunpack.c.0.s8 %v1874
        %v1876 = vlaneseq
        %v1877 = vshrl.u32 %v1876, 7
        %v1878 = vsub.s32 %v1875, %v1877
        %v1879 = vrot.slane %v1865, %v1878
        %v1880 = vcombine.low %v1847, %v1863
        %v1881 = vcombine.high %v1847, %v1863
        %v1883 = vunpack.c.l.s4 1934713408
        %v1884 = vunpack.c.0.s8 %v1883
        %v1885 = vlaneseq
        %v1886 = vshrl.u32 %v1885, 7
        %v1887 = vsub.s32 %v1884, %v1886
        %v1888 = vrot.slane %v1880, %v1887
        %v1890 = vunpack.c.l.s4 1934713408
        %v1891 = vunpack.c.0.s8 %v1890
        %v1892 = vlaneseq
        %v1893 = vshrl.u32 %v1892, 7
        %v1894 = vsub.s32 %v1891, %v1893
        %v1895 = vrot.slane %v1881, %v1894
        %v1896 = vcombine.high %v1872, 0.0
        %v1897 = vcombine.high %v1879, 0.0
        %v1898 = vcombine.high %v1888, 0.0
        %v1899 = vcombine.high %v1895, 0.0
        %v1900 = vcombine.low %v1872, %v1879
        %v1902 = vunpack.c.l.s4 1983009808
        %v1903 = vunpack.c.0.s8 %v1902
        %v1904 = vlaneseq
        %v1905 = vshrl.u32 %v1904, 7
        %v1906 = vsub.s32 %v1903, %v1905
        %v1907 = vrot.slane %v1900, %v1906
        %v1908 = vcombine.low %v1896, %v1897
        %v1910 = vunpack.c.l.s4 1983009808
        %v1911 = vunpack.c.0.s8 %v1910
        %v1912 = vlaneseq
        %v1913 = vshrl.u32 %v1912, 7
        %v1914 = vsub.s32 %v1911, %v1913
        %v1915 = vrot.slane %v1908, %v1914
        %v1916 = vcombine.low %v1888, %v1895
        %v1918 = vunpack.c.l.s4 1983009808
        %v1919 = vunpack.c.0.s8 %v1918
        %v1920 = vlaneseq
        %v1921 = vshrl.u32 %v1920, 7
        %v1922 = vsub.s32 %v1919, %v1921
        %v1923 = vrot.slane %v1916, %v1922
        %v1924 = vcombine.low %v1898, %v1899
        %v1926 = vunpack.c.l.s4 1983009808
        %v1927 = vunpack.c.0.s8 %v1926
        %v1928 = vlaneseq
        %v1929 = vshrl.u32 %v1928, 7
        %v1930 = vsub.s32 %v1927, %v1929
        %v1931 = vrot.slane %v1924, %v1930
        %v1932 = vcombine.low %v1907, %v1915
        %v1933 = vcombine.high %v1907, %v1915
        %v1935 = vunpack.c.l.s4 1934713408
        %v1936 = vunpack.c.0.s8 %v1935
        %v1937 = vlaneseq
        %v1938 = vshrl.u32 %v1937, 7
        %v1939 = vsub.s32 %v1936, %v1938
        %v1940 = vrot.slane %v1932, %v1939
        %v1942 = vunpack.c.l.s4 1934713408
        %v1943 = vunpack.c.0.s8 %v1942
        %v1944 = vlaneseq
        %v1945 = vshrl.u32 %v1944, 7
        %v1946 = vsub.s32 %v1943, %v1945
        %v1947 = vrot.slane %v1933, %v1946
        %v1948 = vcombine.low %v1923, %v1931
        %v1949 = vcombine.high %v1923, %v1931
        %v1951 = vunpack.c.l.s4 1934713408
        %v1952 = vunpack.c.0.s8 %v1951
        %v1953 = vlaneseq
        %v1954 = vshrl.u32 %v1953, 7
        %v1955 = vsub.s32 %v1952, %v1954
        %v1956 = vrot.slane %v1948, %v1955
        %v1958 = vunpack.c.l.s4 1934713408
        %v1959 = vunpack.c.0.s8 %v1958
        %v1960 = vlaneseq
        %v1961 = vshrl.u32 %v1960, 7
        %v1962 = vsub.s32 %v1959, %v1961
        %v1963 = vrot.slane %v1949, %v1962
        %v1964 = vcombine.low %v1940, %v1956
        %v1965 = vcombine.high %v1940, %v1956
        %v1966 = vcombine.low %v1947, %v1963
        %v1967 = vcombine.high %v1947, %v1963
        %1969 = vrot.lane.b32.xlu0 %v1965, 16
        %v1970 = vpop.permute.xlu0 %1969
        %1973 = vrot.lane.b32.xlu0 %v1966, 32
        %v1974 = vpop.permute.xlu0 %1973
        %1977 = vrot.lane.b32.xlu0 %v1967, 48
        %v1978 = vpop.permute.xlu0 %1977
        %v1980 = vsel %vm883, %v1964, %v1970
        %vm1981 = vcmask 261120
        %v1982 = vsel %vm1981, %v1980, %v1974
        %vm1983 = vcmask 392192
        %v1984 = vsel %vm1983, %v1982, %v1978
        %v1985 = vld [vmem:[#allocation13] sm:$0xff]
        %v1986 = vld [vmem:[#allocation13 + $0x8] sm:$0xff]
        %v1987 = vld [vmem:[#allocation13 + $0x10] sm:$0xff]
        %v1988 = vld [vmem:[#allocation13 + $0x18] sm:$0xff]
        %v1989 = vld [vmem:[#allocation13 + $0x20] sm:$0xff]
        %v1990 = vld [vmem:[#allocation13 + $0x28] sm:$0xff]
        %v1991 = vld [vmem:[#allocation13 + $0x30] sm:$0xff]
        %v1992 = vld [vmem:[#allocation13 + $0x38] sm:$0xff]
        %v1993 = vld [vmem:[#allocation14] sm:$0x1]
        %v1995 = vlaneseq
        %v1996 = vshrl.u32 %v1995, 7
        %v1997 = vsub.s32 0, %v1996
        %v1998 = vrot.slane %v1993, %v1997
        %v2001 = vsel %vm557, %v1984, 0
        %2003 = vmatprep.subr.mxu0 0.0
        %2004 = vmatpush1.msra.mxu0 %v1985
        %2005 = vmatprep.subr.mxu0 0.0
        %2006 = vmatpush1.msra.mxu0 %v1986
        %2007 = vmatprep.subr.mxu0 0.0
        %2008 = vmatpush1.msra.mxu0 %v1987
        %2009 = vmatprep.subr.mxu0 0.0
        %2010 = vmatpush1.msra.mxu0 %v1988
        %2011 = vmatprep.subr.mxu0 0.0
        %2012 = vmatpush1.msra.mxu0 %v1989
        %2013 = vmatprep.subr.mxu0 0.0
        %2014 = vmatpush1.msra.mxu0 %v1990
        %2015 = vmatprep.subr.mxu0 0.0
        %2016 = vmatpush1.msra.mxu0 %v1991
        %2017 = vmatprep.subr.mxu0 0.0
        %2018 = vmatpush1.msra.mxu0 %v1992
        %2019 = vmatprep.subr.mxu0 0.0
        %2020 = vmatpush1.msra.mxu0 0.0
        %2021 = vmatprep.subr.mxu0 0.0
        %2022 = vmatpush1.msra.mxu0 0.0
        %2023 = vmatprep.subr.mxu0 0.0
        %2024 = vmatpush1.msra.mxu0 0.0
        %2025 = vmatprep.subr.mxu0 0.0
        %2026 = vmatpush1.msra.mxu0 0.0
        %2027 = vmatprep.subr.mxu0 0.0
        %2028 = vmatpush1.msra.mxu0 0.0
        %2029 = vmatprep.subr.mxu0 0.0
        %2030 = vmatpush1.msra.mxu0 0.0
        %2031 = vmatprep.subr.mxu0 0.0
        %2032 = vmatpush1.msra.mxu0 0.0
        %2033 = vmatprep.subr.mxu0 0.0
        %2034 = vmatpush1.msra.mxu0 0.0
        %2035 = vmatprep.subr.mxu0 0.0
        %2036 = vmatpush1.msra.mxu0 0.0
        %2037 = vmatprep.subr.mxu0 0.0
        %2038 = vmatpush1.msra.mxu0 0.0
        %2039 = vmatprep.subr.mxu0 0.0
        %2040 = vmatpush1.msra.mxu0 0.0
        %2041 = vmatprep.subr.mxu0 0.0
        %2042 = vmatpush1.msra.mxu0 0.0
        %2043 = vmatprep.subr.mxu0 0.0
        %2044 = vmatpush1.msra.mxu0 0.0
        %2045 = vmatprep.subr.mxu0 0.0
        %2046 = vmatpush1.msra.mxu0 0.0
        %2047 = vmatprep.subr.mxu0 0.0
        %2048 = vmatpush1.msra.mxu0 0.0
        %2049 = vmatprep.subr.mxu0 0.0
        %2050 = vmatpush1.msra.mxu0 0.0
        %2051 = vmatprep.subr.mxu0 0.0
        %2052 = vmatpush1.msra.mxu0 0.0
        %2053 = vmatprep.subr.mxu0 0.0
        %2054 = vmatpush1.msra.mxu0 0.0
        %2055 = vmatprep.subr.mxu0 0.0
        %2056 = vmatpush1.msra.mxu0 0.0
        %2057 = vmatprep.subr.mxu0 0.0
        %2058 = vmatpush1.msra.mxu0 0.0
        %2059 = vmatprep.subr.mxu0 0.0
        %2060 = vmatpush1.msra.mxu0 0.0
        %2061 = vmatprep.subr.mxu0 0.0
        %2062 = vmatpush1.msra.mxu0 0.0
        %2063 = vmatprep.subr.mxu0 0.0
        %2064 = vmatpush1.msra.mxu0 0.0
        %2065 = vmatprep.subr.mxu0 0.0
        %2066 = vmatpush1.msra.mxu0 0.0
        %2067 = vmatprep.mubr.f32.mxu0 0.0
        %2068 = vmatmul.mubr.f32.gmra.mrb[0].mxu0 %v2001
        %v2069 = vpop.f32.mrb[0].mxu0
        %v2070 = vadd.f32 %v1998, %v2069
        %v2071 = vpop.f32.mrb[0].mxu0
        %2072 = vdwg.mxu0
        %v2073 = vadd.f32 %v2070, %v539
        %v2074 = vld [vmem:[#allocation16] sm:$0x1]
        %v2075 = vld [vmem:[#allocation17] sm:$0x1]
        %v2076 = vsel %vm557, %v2073, 0.0
        %2077 = vadd.xlane.f32.xlu0 %v2076
        %v2078 = vpop.xlane.xlu0 %2077
        %v2079 = vrcp.pop 64.0
        %v2080 = vmul.f32 %v2078, %v2079
        %v2081 = vsub.f32 %v2073, %v2080
        %v2082 = vmul.f32 %v2081, %v2081
        %v2083 = vsel %vm557, %v2082, 0.0
        %2084 = vadd.xlane.f32.xlu0 %v2083
        %v2085 = vpop.xlane.xlu0 %2084
        %v2086 = vmul.f32 %v2085, %v2079
        %v2087 = vadd.f32 %v2086, 1e-05
        %v2088 = vrsqrt.pop %v2087
        %v2089 = vmul.f32 %v2081, %v2088
        %v2091 = vlaneseq
        %v2092 = vshrl.u32 %v2091, 7
        %v2093 = vsub.s32 0, %v2092
        %v2094 = vrot.slane %v2074, %v2093
        %v2096 = vmul.f32 %v2089, %v2094
        %v2098 = vlaneseq
        %v2099 = vshrl.u32 %v2098, 7
        %v2100 = vsub.s32 0, %v2099
        %v2101 = vrot.slane %v2075, %v2100
        %v2103 = vadd.f32 %v2096, %v2101
        %2104 = vst.msk [vmem:[%s538] sm:$0xff] %vm557, %v2103
        %s2105 = sand.u32 %s278, 1
        %s2106 = scalar_lea.sflag [#allocation4], %s2105
        %s2107 = sand.u32 %s278, 1
        %s2108 = smul.addr %s2107, 8
        %s2109 = scalar_lea.vmem [#allocation19], %s2108
        // Predicated region
        $region101: #{decoder_layer.4} parent=59 // pred_check
          %p2110 = pneg %p288
        $region102: #{decoder_layer.4} parent=59 // pred_check_branch
          %2112 = sbr.rel (%p2110) target = $region104
        $region103: #{decoder_layer.4} parent=59 // pred_region
          %s2114 = ssub.s32 128, 128
          %2115 = vsyncadd %s2106, %s2114
          %s2116 = smul.addr %s38, 2
          %s2117 = sadd.s32 %s39, %s2116
          %s2118 = smul.addr %s2117, 128
          %s2119 = scalar_lea.hbm %s10, %s2118
          %s2121 = sshll.u32 %s2109, 4
          %s2122 = int_to_ptr.vmem [resolvable:$true] %s2121
          %2124 = dma.vmem_to_hbm [thread:$0]  %s2122, 128, %s2119, %s2106
        $region104: #{decoder_layer.4} parent=59 // pred_fallthru
          _
      $region60: #{decoder_layer.4} parent=5 // pred_fallthru
        _
      %p2125 = scmp.le.s32.totalorder 2, %s29
      // Predicated region
      $region105: #{decoder_layer.4} parent=5 // pred_check
        %p2126 = pneg %p2125
      $region106: #{decoder_layer.4} parent=5 // pred_check_branch
        %2128 = sbr.rel (%p2126) target = $region108
      $region107: #{decoder_layer.4} parent=5 // pred_region
        %s2129 = ssub.s32 %s29, 2
        // Predicated region
        $region109: #{decoder_layer.4} parent=107 // pred_check
          %p2130 = pneg %p294
        $region110: #{decoder_layer.4} parent=107 // pred_check_branch
          %2132 = sbr.rel (%p2130) target = $region112
        $region111: #{decoder_layer.4} parent=107 // pred_region
          %s2133 = sand.u32 %s279, 1
          %s2134 = scalar_lea.sflag [#allocation4], %s2133
          %s2135 = sand.u32 %s279, 1
          %s2136 = smul.addr %s2135, 8
          %s2137 = scalar_lea.vmem [#allocation19], %s2136
          %2138 = dma.done %s2134, 128
        $region112: #{decoder_layer.4} parent=107 // pred_fallthru
          _
      $region108: #{decoder_layer.4} parent=5 // pred_fallthru
        _
    $region6: #{decoder_layer.4} parent=1 // loop_footer
      %s33 = sadd.s32 1, %s29
    $region7: #{decoder_layer.4} parent=1 // loop_footer_branch
      %28 = sbr.rel target = $region3
    $region8: #{decoder_layer.4} parent=1 // loop_exit
      _
    %2139 = vsyncpa [#allocation3], 1
    %s2140 = scalar_lea.sflag [#allocation3], 1
    %2141 = vsyncpa %s2140, 1
    %2142 = vsyncpa [#allocation6], 1
    %s2143 = scalar_lea.sflag [#allocation6], 1
    %2144 = vsyncpa %s2143, 1
    %2145 = vsyncpa [#allocation9], 1
    %2146 = vsyncpa [#allocation12], 1
    %2147 = vsyncpa [#allocation15], 1
    %2148 = vsyncpa [#allocation18], 1
    %2149 = vsyncpa [#allocation4], 1
    %s2150 = scalar_lea.sflag [#allocation4], 1
    %2151 = vsyncpa %s2150, 1

</llo_original>
